<compile_context>
chip_gen: v6e
topology: v6e:2x2x1
jax: 0.10.0
libtpu: 0.0.40
codegen_flags: <defaults>
</compile_context>

<pallas_src>
import jax
import jax.numpy as jnp
from jax import lax
from jax.experimental import pallas as pl
from jax.experimental.pallas import tpu as pltpu

NEG_SLOPE = 0.2   # LeakyReLU negative_slope
EPS = 1e-5        # InstanceNorm2d default eps


def _leaky(y):
    return jnp.where(y >= 0, y, NEG_SLOPE * y)


def _conv_taps(y, w_ref):
    """Strided (taps,1)/(taps,1) conv as a sum of contiguous row-block matmuls.

    y     : [taps * Bc * s_out, C_in] -- rows ordered so tap kh occupies the
            contiguous block [kh*Bc*s_out, (kh+1)*Bc*s_out) (whole batch chunk).
    w_ref : Ref[taps, C_in, C_out]    (bf16 weights, upcast once, f32 acc)
    """
    taps = w_ref.shape[0]
    s = y.shape[0] // taps
    w = w_ref[...].astype(jnp.float32)
    acc = None
    for kh in range(taps):
        term = jnp.dot(y[kh * s:(kh + 1) * s, :], w[kh],
                       preferred_element_type=jnp.float32)
        acc = term if acc is None else acc + term   # single f32 accumulator
    return acc


def _instance_norm(y, m_ref, e_ref):
    """Per-batch-element, per-channel instance norm on batch-interleaved rows.

    y     : [R, C]
    m_ref : [Bc, R]  with 1/S at the rows of batch b (0 elsewhere)  -> means
    e_ref : [R, Bc]  0/1 broadcast-back matrix.
    Reductions & broadcast are tiny exact MXU matmuls; one-pass f32 variance.
    """
    m = m_ref[...]
    e = e_ref[...]
    mean = jnp.dot(m, y, preferred_element_type=jnp.float32)          # [Bc, C]
    mean_sq = jnp.dot(m, y * y, preferred_element_type=jnp.float32)   # [Bc, C]
    inv = lax.rsqrt(mean_sq - mean * mean + EPS)                      # [Bc, C]
    mean_full = jnp.dot(e, mean, preferred_element_type=jnp.float32)  # [R, C]
    inv_full = jnp.dot(e, inv, preferred_element_type=jnp.float32)    # [R, C]
    return (y - mean_full) * inv_full


def fused_classifier_kernel(p1_ref, w1_ref, w2_ref, w3_ref, w4_ref, w5_ref,
                            m2_ref, e2_ref, m3_ref, e3_ref, m4_ref, e4_ref,
                            s5_ref, o_ref):
    f32 = jnp.float32

    # conv1 (1,12)/(1,12) + LeakyReLU : [448*Bc, 12] @ [12, dim]
    y = jnp.dot(p1_ref[...], w1_ref[...].astype(f32), preferred_element_type=f32)
    y = _leaky(y)

    # conv2/conv3/conv4 + InstanceNorm + LeakyReLU, all resident in VMEM.
    y = _leaky(_instance_norm(_conv_taps(y, w2_ref), m2_ref, e2_ref))
    y = _leaky(_instance_norm(_conv_taps(y, w3_ref), m3_ref, e3_ref))
    y = _leaky(_instance_norm(_conv_taps(y, w4_ref), m4_ref, e4_ref))

    # conv5 (1,7)/(1,7) with only 2 output channels: VPU multiply, per-batch
    # row-sum via a 0/1 selector matmul, lane reduce, fused 2-way softmax.
    # Output is a lane-dense [Bc, 128] block (wrapper slices [:, :2]).
    w5 = w5_ref[...].astype(f32)                  # [2, Bc*7, 8*dim]
    s5 = s5_ref[...]                              # [Bc, Bc*7]
    l0 = jnp.sum(jnp.dot(s5, y * w5[0], preferred_element_type=f32),
                 axis=1, keepdims=True)           # [Bc, 1]
    l1 = jnp.sum(jnp.dot(s5, y * w5[1], preferred_element_type=f32),
                 axis=1, keepdims=True)           # [Bc, 1]
    bc, lanes = o_ref.shape
    col = lax.broadcasted_iota(jnp.int32, (bc, lanes), 1)
    logits = jnp.where(col == 0, l0, jnp.where(col == 1, l1, -1e30))
    mx = jnp.max(logits, axis=1, keepdims=True)
    ex = jnp.exp(logits - mx)
    o_ref[...] = ex / jnp.sum(ex, axis=1, keepdims=True)


def classifier_forward(x, weights, *, chunks=None, weight_dtype=jnp.bfloat16):
    """x: [B, 1, 64, 84] float32 NCHW -- the geometry the strided convs imply
    (they reduce 64x84 down to exactly 1x1)."""
    w1, w2, w3, w4, w5 = weights
    B, c_in, H, W = x.shape
    assert c_in == 1 and H == 64 and W == 84, (c_in, H, W)
    if chunks is None:
        chunks = 2 if B % 2 == 0 else 1      # 2 grid steps feed v7x's two TCs
    assert B % chunks == 0, (B, chunks)
    Bc = B // chunks
    W1 = W // 12                             # 7 = conv5 kernel width
    R1 = 4 * 2 * 8 * Bc * W1                 # 448*Bc conv1 patches per chunk

    # Input patches, pre-permuted so every conv2/3/4 tap is a contiguous row
    # block spanning the whole batch chunk.  Original row h = 8*h3+4*kh3+kh2;
    # order rows by (kh2, kh3, h3, batch, w).  One tiny XLA transpose, one
    # input DMA per grid step.
    p1 = (x.reshape(chunks, Bc, 8, 2, 4, W1, 12)   # (c, b, h3, kh3, kh2, w, k)
            .transpose(0, 4, 3, 2, 1, 5, 6)        # (c, kh2, kh3, h3, b, w, k)
            .reshape(chunks, R1, 12))

    # Weight re-layouts (channels-last, tap-major), cast to bf16 to halve the
    # one-time weight DMA; f32 math/accumulation in-kernel.
    w1m = jnp.transpose(w1[:, 0, 0, :], (1, 0)).astype(weight_dtype)   # [12, dim]
    w2m = jnp.transpose(w2[:, :, :, 0], (2, 1, 0)).astype(weight_dtype)  # [4, dim, 2dim]
    w3m = jnp.transpose(w3[:, :, :, 0], (2, 1, 0)).astype(weight_dtype)  # [2, 2dim, 4dim]
    w4m = jnp.transpose(w4[:, :, :, 0], (2, 1, 0)).astype(weight_dtype)  # [8, 4dim, 8dim]
    w5m = jnp.transpose(w5[:, :, 0, :], (0, 2, 1))                       # [2, 7, 8dim]
    w5b = jnp.tile(w5m, (1, Bc, 1)).astype(weight_dtype)                 # [2, Bc*7, 8dim]

    # Per-batch instance-norm reduction/broadcast selectors (rows of batch b
    # are interleaved with period 7).  Exact 0/1 and 1/S values, kept in f32.
    def selectors(spatial):
        rows = Bc * spatial
        b_of_row = (jnp.arange(rows) // W1) % Bc
        onehot = (b_of_row[:, None] == jnp.arange(Bc)[None, :]).astype(jnp.float32)
        return onehot.T / spatial, onehot          # ([Bc, rows], [rows, Bc])

    m2, e2 = selectors(16 * W1)   # conv2 output: 16 x 7 spatial positions
    m3, e3 = selectors(8 * W1)    # conv3 output:  8 x 7
    m4, e4 = selectors(1 * W1)    # conv4 output:  1 x 7
    s5 = e4.T                     # [Bc, Bc*7] 0/1 per-batch row selector

    def const_spec(a):
        if a.ndim == 2:
            return pl.BlockSpec(a.shape, lambda c: (0, 0))
        return pl.BlockSpec(a.shape, lambda c: (0, 0, 0))

    out = pl.pallas_call(
        fused_classifier_kernel,
        out_shape=jax.ShapeDtypeStruct((chunks, Bc, 128), jnp.float32),
        grid=(chunks,),
        in_specs=[
            pl.BlockSpec((None, R1, 12), lambda c: (c, 0, 0)),
            const_spec(w1m), const_spec(w2m), const_spec(w3m),
            const_spec(w4m), const_spec(w5b),
            const_spec(m2), const_spec(e2),
            const_spec(m3), const_spec(e3),
            const_spec(m4), const_spec(e4),
            const_spec(s5),
        ],
        out_specs=pl.BlockSpec((None, Bc, 128), lambda c: (c, 0, 0)),
        compiler_params=pltpu.CompilerParams(
            dimension_semantics=("parallel",),
            vmem_limit_bytes=48 * 1024 * 1024),
    )(p1, w1m, w2m, w3m, w4m, w5b, m2, e2, m3, e3, m4, e4, s5)

    return out.reshape(B, 128)[:, :2]


# ----------------------- pure-JAX reference -----------------------

def reference_forward(x, weights):
    w1, w2, w3, w4, w5 = weights
    dn = ('NCHW', 'OIHW', 'NCHW')

    def conv(y, w, stride):
        return lax.conv_general_dilated(y, w, stride, 'VALID',
                                        dimension_numbers=dn)

    def inorm(y):
        mean = jnp.mean(y, axis=(2, 3), keepdims=True)
        var = jnp.mean((y - mean) ** 2, axis=(2, 3), keepdims=True)
        return (y - mean) * lax.rsqrt(var + EPS)

    y = _leaky(conv(x, w1, (1, 12)))
    y = _leaky(inorm(conv(y, w2, (4, 1))))
    y = _leaky(inorm(conv(y, w3, (2, 1))))
    y = _leaky(inorm(conv(y, w4, (8, 1))))
    y = conv(y, w5, (1, 7))
    y = jax.nn.softmax(y, axis=1)
    return y[:, :, 0, 0]


if __name__ == "__main__":
    dim = 16                # small "dim" (PyTorch default is 64); same structure
    B, H, W = 4, 64, 84     # spatial geometry implied by the strided convs

    key = jax.random.PRNGKey(0)
    kx, k1, k2, k3, k4, k5 = jax.random.split(key, 6)
    x = jax.random.normal(kx, (B, 1, H, W), dtype=jnp.float32)

    std = 0.02  # kernel_initializer: normal(0, 0.02)
    w1 = std * jax.random.normal(k1, (dim, 1, 1, 12), dtype=jnp.float32)
    w2 = std * jax.random.normal(k2, (2 * dim, dim, 4, 1), dtype=jnp.float32)
    w3 = std * jax.random.normal(k3, (4 * dim, 2 * dim, 2, 1), dtype=jnp.float32)
    w4 = std * jax.random.normal(k4, (8 * dim, 4 * dim, 8, 1), dtype=jnp.float32)
    w5 = std * jax.random.normal(k5, (2, 8 * dim, 1, 7), dtype=jnp.float32)
    weights = (w1, w2, w3, w4, w5)

    fwd = jax.jit(classifier_forward)
    out = jax.block_until_ready(fwd(x, weights))
    assert out.shape == (B, 2), out.shape

    # (a) Kernel-math check: reference evaluated with the SAME bf16-rounded
    # weights the kernel uses -> only summation-order/rsqrt differences remain.
    weights_q = tuple(w.astype(jnp.bfloat16).astype(jnp.float32) for w in weights)
    ref_q = jax.block_until_ready(reference_forward(x, weights_q))
    assert jnp.allclose(out, ref_q, rtol=1e-3, atol=1e-3), (out, ref_q)

    # (b) End-to-end check against the full-f32 reference: the only extra gap
    # is bf16 weight rounding (perf feedback: halve the weight DMA).
    ref = jax.block_until_ready(reference_forward(x, weights))
    assert jnp.allclose(out, ref, rtol=5e-3, atol=5e-3), (out, ref)

    print("KERNEL_OK")
</pallas_src>

<mosaic_0001>
module attributes {stable_mosaic.version = 11 : i64} {
  func.func @fused_classifier_kernel(%arg0: i32, %arg1: memref<1x896x12xf32, #tpu.memory_space<vmem>>, %arg2: memref<12x16xbf16, #tpu.memory_space<vmem>>, %arg3: memref<4x16x32xbf16, #tpu.memory_space<vmem>>, %arg4: memref<2x32x64xbf16, #tpu.memory_space<vmem>>, %arg5: memref<8x64x128xbf16, #tpu.memory_space<vmem>>, %arg6: memref<2x14x128xbf16, #tpu.memory_space<vmem>>, %arg7: memref<2x224xf32, #tpu.memory_space<vmem>>, %arg8: memref<224x2xf32, #tpu.memory_space<vmem>>, %arg9: memref<2x112xf32, #tpu.memory_space<vmem>>, %arg10: memref<112x2xf32, #tpu.memory_space<vmem>>, %arg11: memref<2x14xf32, #tpu.memory_space<vmem>>, %arg12: memref<14x2xf32, #tpu.memory_space<vmem>>, %arg13: memref<2x14xf32, #tpu.memory_space<vmem>>, %arg14: memref<1x2x128xf32, #tpu.memory_space<vmem>>) attributes {dimension_semantics = [#tpu.dimension_semantics<parallel>], iteration_bounds = array<i64: 2>, scalar_prefetch = 0 : i64, scratch_operands = 0 : i64, tpu.core_type = #tpu.core_type<tc>, window_params = [{transform_indices = @transform_0, window_bounds = array<i64: 1, 896, 12>}, {pipeline_mode = #tpu.pipeline_mode<synchronous>, transform_indices = @transform_1, window_bounds = array<i64: 12, 16>}, {pipeline_mode = #tpu.pipeline_mode<synchronous>, transform_indices = @transform_2, window_bounds = array<i64: 4, 16, 32>}, {pipeline_mode = #tpu.pipeline_mode<synchronous>, transform_indices = @transform_3, window_bounds = array<i64: 2, 32, 64>}, {pipeline_mode = #tpu.pipeline_mode<synchronous>, transform_indices = @transform_4, window_bounds = array<i64: 8, 64, 128>}, {pipeline_mode = #tpu.pipeline_mode<synchronous>, transform_indices = @transform_5, window_bounds = array<i64: 2, 14, 128>}, {pipeline_mode = #tpu.pipeline_mode<synchronous>, transform_indices = @transform_6, window_bounds = array<i64: 2, 224>}, {pipeline_mode = #tpu.pipeline_mode<synchronous>, transform_indices = @transform_7, window_bounds = array<i64: 224, 2>}, {pipeline_mode = #tpu.pipeline_mode<synchronous>, transform_indices = @transform_8, window_bounds = array<i64: 2, 112>}, {pipeline_mode = #tpu.pipeline_mode<synchronous>, transform_indices = @transform_9, window_bounds = array<i64: 112, 2>}, {pipeline_mode = #tpu.pipeline_mode<synchronous>, transform_indices = @transform_10, window_bounds = array<i64: 2, 14>}, {pipeline_mode = #tpu.pipeline_mode<synchronous>, transform_indices = @transform_11, window_bounds = array<i64: 14, 2>}, {pipeline_mode = #tpu.pipeline_mode<synchronous>, transform_indices = @transform_12, window_bounds = array<i64: 2, 14>}, {transform_indices = @transform_13, window_bounds = array<i64: 1, 2, 128>}]} {
    %c0 = arith.constant 0 : index
    %c0_0 = arith.constant 0 : index
    %c0_1 = arith.constant 0 : index
    %0 = vector.load %arg1[%c0, %c0_0, %c0_1] : memref<1x896x12xf32, #tpu.memory_space<vmem>>, vector<1x896x12xf32>
    %1 = vector.shape_cast %0 : vector<1x896x12xf32> to vector<896x12xf32>
    %c0_2 = arith.constant 0 : index
    %c0_3 = arith.constant 0 : index
    %2 = vector.load %arg2[%c0_2, %c0_3] : memref<12x16xbf16, #tpu.memory_space<vmem>>, vector<12x16xbf16>
    %3 = arith.extf %2 : vector<12x16xbf16> to vector<12x16xf32>
    %cst = arith.constant dense<0.000000e+00> : vector<896x16xf32>
    %4 = tpu.matmul %1, %3, %cst {dimension_numbers = #tpu.dot_dimension_numbers<[1], [0], [0], [1], [0, 0, 1, 1], [], []>} : vector<896x12xf32>, vector<12x16xf32>, vector<896x16xf32> -> vector<896x16xf32>
    %cst_4 = arith.constant 0.000000e+00 : f32
    %5 = vector.broadcast %cst_4 : f32 to vector<896x16xf32>
    %6 = arith.cmpf oge, %4, %5 : vector<896x16xf32>
    %cst_5 = arith.constant 2.000000e-01 : f32
    %7 = vector.broadcast %cst_5 : f32 to vector<896x16xf32>
    %8 = arith.mulf %7, %4 : vector<896x16xf32>
    %9 = arith.select %6, %4, %8 : vector<896x16xi1>, vector<896x16xf32>
    %c0_6 = arith.constant 0 : index
    %c0_7 = arith.constant 0 : index
    %c0_8 = arith.constant 0 : index
    %10 = vector.load %arg3[%c0_6, %c0_7, %c0_8] : memref<4x16x32xbf16, #tpu.memory_space<vmem>>, vector<4x16x32xbf16>
    %11 = arith.extf %10 : vector<4x16x32xbf16> to vector<4x16x32xf32>
    %12 = vector.extract_strided_slice %9 {offsets = [0, 0], sizes = [224, 16], strides = [1, 1]} : vector<896x16xf32> to vector<224x16xf32>
    %13 = vector.extract_strided_slice %11 {offsets = [0, 0, 0], sizes = [1, 16, 32], strides = [1, 1, 1]} : vector<4x16x32xf32> to vector<1x16x32xf32>
    %14 = vector.shape_cast %13 : vector<1x16x32xf32> to vector<16x32xf32>
    %cst_9 = arith.constant dense<0.000000e+00> : vector<224x32xf32>
    %15 = tpu.matmul %12, %14, %cst_9 {dimension_numbers = #tpu.dot_dimension_numbers<[1], [0], [0], [1], [0, 0, 1, 1], [], []>} : vector<224x16xf32>, vector<16x32xf32>, vector<224x32xf32> -> vector<224x32xf32>
    %16 = vector.extract_strided_slice %9 {offsets = [224, 0], sizes = [224, 16], strides = [1, 1]} : vector<896x16xf32> to vector<224x16xf32>
    %17 = vector.extract_strided_slice %11 {offsets = [1, 0, 0], sizes = [1, 16, 32], strides = [1, 1, 1]} : vector<4x16x32xf32> to vector<1x16x32xf32>
    %18 = vector.shape_cast %17 : vector<1x16x32xf32> to vector<16x32xf32>
    %cst_10 = arith.constant dense<0.000000e+00> : vector<224x32xf32>
    %19 = tpu.matmul %16, %18, %cst_10 {dimension_numbers = #tpu.dot_dimension_numbers<[1], [0], [0], [1], [0, 0, 1, 1], [], []>} : vector<224x16xf32>, vector<16x32xf32>, vector<224x32xf32> -> vector<224x32xf32>
    %20 = arith.addf %15, %19 : vector<224x32xf32>
    %21 = vector.extract_strided_slice %9 {offsets = [448, 0], sizes = [224, 16], strides = [1, 1]} : vector<896x16xf32> to vector<224x16xf32>
    %22 = vector.extract_strided_slice %11 {offsets = [2, 0, 0], sizes = [1, 16, 32], strides = [1, 1, 1]} : vector<4x16x32xf32> to vector<1x16x32xf32>
    %23 = vector.shape_cast %22 : vector<1x16x32xf32> to vector<16x32xf32>
    %cst_11 = arith.constant dense<0.000000e+00> : vector<224x32xf32>
    %24 = tpu.matmul %21, %23, %cst_11 {dimension_numbers = #tpu.dot_dimension_numbers<[1], [0], [0], [1], [0, 0, 1, 1], [], []>} : vector<224x16xf32>, vector<16x32xf32>, vector<224x32xf32> -> vector<224x32xf32>
    %25 = arith.addf %20, %24 : vector<224x32xf32>
    %26 = vector.extract_strided_slice %9 {offsets = [672, 0], sizes = [224, 16], strides = [1, 1]} : vector<896x16xf32> to vector<224x16xf32>
    %27 = vector.extract_strided_slice %11 {offsets = [3, 0, 0], sizes = [1, 16, 32], strides = [1, 1, 1]} : vector<4x16x32xf32> to vector<1x16x32xf32>
    %28 = vector.shape_cast %27 : vector<1x16x32xf32> to vector<16x32xf32>
    %cst_12 = arith.constant dense<0.000000e+00> : vector<224x32xf32>
    %29 = tpu.matmul %26, %28, %cst_12 {dimension_numbers = #tpu.dot_dimension_numbers<[1], [0], [0], [1], [0, 0, 1, 1], [], []>} : vector<224x16xf32>, vector<16x32xf32>, vector<224x32xf32> -> vector<224x32xf32>
    %30 = arith.addf %25, %29 : vector<224x32xf32>
    %c0_13 = arith.constant 0 : index
    %c0_14 = arith.constant 0 : index
    %31 = vector.load %arg7[%c0_13, %c0_14] : memref<2x224xf32, #tpu.memory_space<vmem>>, vector<2x224xf32>
    %c0_15 = arith.constant 0 : index
    %c0_16 = arith.constant 0 : index
    %32 = vector.load %arg8[%c0_15, %c0_16] : memref<224x2xf32, #tpu.memory_space<vmem>>, vector<224x2xf32>
    %cst_17 = arith.constant dense<0.000000e+00> : vector<2x32xf32>
    %33 = tpu.matmul %31, %30, %cst_17 {dimension_numbers = #tpu.dot_dimension_numbers<[1], [0], [0], [1], [0, 0, 1, 1], [], []>} : vector<2x224xf32>, vector<224x32xf32>, vector<2x32xf32> -> vector<2x32xf32>
    %34 = arith.mulf %30, %30 : vector<224x32xf32>
    %cst_18 = arith.constant dense<0.000000e+00> : vector<2x32xf32>
    %35 = tpu.matmul %31, %34, %cst_18 {dimension_numbers = #tpu.dot_dimension_numbers<[1], [0], [0], [1], [0, 0, 1, 1], [], []>} : vector<2x224xf32>, vector<224x32xf32>, vector<2x32xf32> -> vector<2x32xf32>
    %36 = arith.mulf %33, %33 : vector<2x32xf32>
    %37 = arith.subf %35, %36 : vector<2x32xf32>
    %cst_19 = arith.constant 9.99999974E-6 : f32
    %38 = vector.broadcast %cst_19 : f32 to vector<2x32xf32>
    %39 = arith.addf %37, %38 : vector<2x32xf32>
    %40 = math.rsqrt %39 : vector<2x32xf32>
    %cst_20 = arith.constant dense<0.000000e+00> : vector<224x32xf32>
    %41 = tpu.matmul %32, %33, %cst_20 {dimension_numbers = #tpu.dot_dimension_numbers<[1], [0], [0], [1], [0, 0, 1, 1], [], []>} : vector<224x2xf32>, vector<2x32xf32>, vector<224x32xf32> -> vector<224x32xf32>
    %cst_21 = arith.constant dense<0.000000e+00> : vector<224x32xf32>
    %42 = tpu.matmul %32, %40, %cst_21 {dimension_numbers = #tpu.dot_dimension_numbers<[1], [0], [0], [1], [0, 0, 1, 1], [], []>} : vector<224x2xf32>, vector<2x32xf32>, vector<224x32xf32> -> vector<224x32xf32>
    %43 = arith.subf %30, %41 : vector<224x32xf32>
    %44 = arith.mulf %43, %42 : vector<224x32xf32>
    %cst_22 = arith.constant 0.000000e+00 : f32
    %45 = vector.broadcast %cst_22 : f32 to vector<224x32xf32>
    %46 = arith.cmpf oge, %44, %45 : vector<224x32xf32>
    %cst_23 = arith.constant 2.000000e-01 : f32
    %47 = vector.broadcast %cst_23 : f32 to vector<224x32xf32>
    %48 = arith.mulf %47, %44 : vector<224x32xf32>
    %49 = arith.select %46, %44, %48 : vector<224x32xi1>, vector<224x32xf32>
    %c0_24 = arith.constant 0 : index
    %c0_25 = arith.constant 0 : index
    %c0_26 = arith.constant 0 : index
    %50 = vector.load %arg4[%c0_24, %c0_25, %c0_26] : memref<2x32x64xbf16, #tpu.memory_space<vmem>>, vector<2x32x64xbf16>
    %51 = arith.extf %50 : vector<2x32x64xbf16> to vector<2x32x64xf32>
    %52 = vector.extract_strided_slice %49 {offsets = [0, 0], sizes = [112, 32], strides = [1, 1]} : vector<224x32xf32> to vector<112x32xf32>
    %53 = vector.extract_strided_slice %51 {offsets = [0, 0, 0], sizes = [1, 32, 64], strides = [1, 1, 1]} : vector<2x32x64xf32> to vector<1x32x64xf32>
    %54 = vector.shape_cast %53 : vector<1x32x64xf32> to vector<32x64xf32>
    %cst_27 = arith.constant dense<0.000000e+00> : vector<112x64xf32>
    %55 = tpu.matmul %52, %54, %cst_27 {dimension_numbers = #tpu.dot_dimension_numbers<[1], [0], [0], [1], [0, 0, 1, 1], [], []>} : vector<112x32xf32>, vector<32x64xf32>, vector<112x64xf32> -> vector<112x64xf32>
    %56 = vector.extract_strided_slice %49 {offsets = [112, 0], sizes = [112, 32], strides = [1, 1]} : vector<224x32xf32> to vector<112x32xf32>
    %57 = vector.extract_strided_slice %51 {offsets = [1, 0, 0], sizes = [1, 32, 64], strides = [1, 1, 1]} : vector<2x32x64xf32> to vector<1x32x64xf32>
    %58 = vector.shape_cast %57 : vector<1x32x64xf32> to vector<32x64xf32>
    %cst_28 = arith.constant dense<0.000000e+00> : vector<112x64xf32>
    %59 = tpu.matmul %56, %58, %cst_28 {dimension_numbers = #tpu.dot_dimension_numbers<[1], [0], [0], [1], [0, 0, 1, 1], [], []>} : vector<112x32xf32>, vector<32x64xf32>, vector<112x64xf32> -> vector<112x64xf32>
    %60 = arith.addf %55, %59 : vector<112x64xf32>
    %c0_29 = arith.constant 0 : index
    %c0_30 = arith.constant 0 : index
    %61 = vector.load %arg9[%c0_29, %c0_30] : memref<2x112xf32, #tpu.memory_space<vmem>>, vector<2x112xf32>
    %c0_31 = arith.constant 0 : index
    %c0_32 = arith.constant 0 : index
    %62 = vector.load %arg10[%c0_31, %c0_32] : memref<112x2xf32, #tpu.memory_space<vmem>>, vector<112x2xf32>
    %cst_33 = arith.constant dense<0.000000e+00> : vector<2x64xf32>
    %63 = tpu.matmul %61, %60, %cst_33 {dimension_numbers = #tpu.dot_dimension_numbers<[1], [0], [0], [1], [0, 0, 1, 1], [], []>} : vector<2x112xf32>, vector<112x64xf32>, vector<2x64xf32> -> vector<2x64xf32>
    %64 = arith.mulf %60, %60 : vector<112x64xf32>
    %cst_34 = arith.constant dense<0.000000e+00> : vector<2x64xf32>
    %65 = tpu.matmul %61, %64, %cst_34 {dimension_numbers = #tpu.dot_dimension_numbers<[1], [0], [0], [1], [0, 0, 1, 1], [], []>} : vector<2x112xf32>, vector<112x64xf32>, vector<2x64xf32> -> vector<2x64xf32>
    %66 = arith.mulf %63, %63 : vector<2x64xf32>
    %67 = arith.subf %65, %66 : vector<2x64xf32>
    %cst_35 = arith.constant 9.99999974E-6 : f32
    %68 = vector.broadcast %cst_35 : f32 to vector<2x64xf32>
    %69 = arith.addf %67, %68 : vector<2x64xf32>
    %70 = math.rsqrt %69 : vector<2x64xf32>
    %cst_36 = arith.constant dense<0.000000e+00> : vector<112x64xf32>
    %71 = tpu.matmul %62, %63, %cst_36 {dimension_numbers = #tpu.dot_dimension_numbers<[1], [0], [0], [1], [0, 0, 1, 1], [], []>} : vector<112x2xf32>, vector<2x64xf32>, vector<112x64xf32> -> vector<112x64xf32>
    %cst_37 = arith.constant dense<0.000000e+00> : vector<112x64xf32>
    %72 = tpu.matmul %62, %70, %cst_37 {dimension_numbers = #tpu.dot_dimension_numbers<[1], [0], [0], [1], [0, 0, 1, 1], [], []>} : vector<112x2xf32>, vector<2x64xf32>, vector<112x64xf32> -> vector<112x64xf32>
    %73 = arith.subf %60, %71 : vector<112x64xf32>
    %74 = arith.mulf %73, %72 : vector<112x64xf32>
    %cst_38 = arith.constant 0.000000e+00 : f32
    %75 = vector.broadcast %cst_38 : f32 to vector<112x64xf32>
    %76 = arith.cmpf oge, %74, %75 : vector<112x64xf32>
    %cst_39 = arith.constant 2.000000e-01 : f32
    %77 = vector.broadcast %cst_39 : f32 to vector<112x64xf32>
    %78 = arith.mulf %77, %74 : vector<112x64xf32>
    %79 = arith.select %76, %74, %78 : vector<112x64xi1>, vector<112x64xf32>
    %c0_40 = arith.constant 0 : index
    %c0_41 = arith.constant 0 : index
    %c0_42 = arith.constant 0 : index
    %80 = vector.load %arg5[%c0_40, %c0_41, %c0_42] : memref<8x64x128xbf16, #tpu.memory_space<vmem>>, vector<8x64x128xbf16>
    %81 = arith.extf %80 : vector<8x64x128xbf16> to vector<8x64x128xf32>
    %82 = vector.extract_strided_slice %79 {offsets = [0, 0], sizes = [14, 64], strides = [1, 1]} : vector<112x64xf32> to vector<14x64xf32>
    %83 = vector.extract_strided_slice %81 {offsets = [0, 0, 0], sizes = [1, 64, 128], strides = [1, 1, 1]} : vector<8x64x128xf32> to vector<1x64x128xf32>
    %84 = vector.shape_cast %83 : vector<1x64x128xf32> to vector<64x128xf32>
    %cst_43 = arith.constant dense<0.000000e+00> : vector<14x128xf32>
    %85 = tpu.matmul %82, %84, %cst_43 {dimension_numbers = #tpu.dot_dimension_numbers<[1], [0], [0], [1], [0, 0, 1, 1], [], []>} : vector<14x64xf32>, vector<64x128xf32>, vector<14x128xf32> -> vector<14x128xf32>
    %86 = vector.extract_strided_slice %79 {offsets = [14, 0], sizes = [14, 64], strides = [1, 1]} : vector<112x64xf32> to vector<14x64xf32>
    %87 = vector.extract_strided_slice %81 {offsets = [1, 0, 0], sizes = [1, 64, 128], strides = [1, 1, 1]} : vector<8x64x128xf32> to vector<1x64x128xf32>
    %88 = vector.shape_cast %87 : vector<1x64x128xf32> to vector<64x128xf32>
    %cst_44 = arith.constant dense<0.000000e+00> : vector<14x128xf32>
    %89 = tpu.matmul %86, %88, %cst_44 {dimension_numbers = #tpu.dot_dimension_numbers<[1], [0], [0], [1], [0, 0, 1, 1], [], []>} : vector<14x64xf32>, vector<64x128xf32>, vector<14x128xf32> -> vector<14x128xf32>
    %90 = arith.addf %85, %89 : vector<14x128xf32>
    %91 = vector.extract_strided_slice %79 {offsets = [28, 0], sizes = [14, 64], strides = [1, 1]} : vector<112x64xf32> to vector<14x64xf32>
    %92 = vector.extract_strided_slice %81 {offsets = [2, 0, 0], sizes = [1, 64, 128], strides = [1, 1, 1]} : vector<8x64x128xf32> to vector<1x64x128xf32>
    %93 = vector.shape_cast %92 : vector<1x64x128xf32> to vector<64x128xf32>
    %cst_45 = arith.constant dense<0.000000e+00> : vector<14x128xf32>
    %94 = tpu.matmul %91, %93, %cst_45 {dimension_numbers = #tpu.dot_dimension_numbers<[1], [0], [0], [1], [0, 0, 1, 1], [], []>} : vector<14x64xf32>, vector<64x128xf32>, vector<14x128xf32> -> vector<14x128xf32>
    %95 = arith.addf %90, %94 : vector<14x128xf32>
    %96 = vector.extract_strided_slice %79 {offsets = [42, 0], sizes = [14, 64], strides = [1, 1]} : vector<112x64xf32> to vector<14x64xf32>
    %97 = vector.extract_strided_slice %81 {offsets = [3, 0, 0], sizes = [1, 64, 128], strides = [1, 1, 1]} : vector<8x64x128xf32> to vector<1x64x128xf32>
    %98 = vector.shape_cast %97 : vector<1x64x128xf32> to vector<64x128xf32>
    %cst_46 = arith.constant dense<0.000000e+00> : vector<14x128xf32>
    %99 = tpu.matmul %96, %98, %cst_46 {dimension_numbers = #tpu.dot_dimension_numbers<[1], [0], [0], [1], [0, 0, 1, 1], [], []>} : vector<14x64xf32>, vector<64x128xf32>, vector<14x128xf32> -> vector<14x128xf32>
    %100 = arith.addf %95, %99 : vector<14x128xf32>
    %101 = vector.extract_strided_slice %79 {offsets = [56, 0], sizes = [14, 64], strides = [1, 1]} : vector<112x64xf32> to vector<14x64xf32>
    %102 = vector.extract_strided_slice %81 {offsets = [4, 0, 0], sizes = [1, 64, 128], strides = [1, 1, 1]} : vector<8x64x128xf32> to vector<1x64x128xf32>
    %103 = vector.shape_cast %102 : vector<1x64x128xf32> to vector<64x128xf32>
    %cst_47 = arith.constant dense<0.000000e+00> : vector<14x128xf32>
    %104 = tpu.matmul %101, %103, %cst_47 {dimension_numbers = #tpu.dot_dimension_numbers<[1], [0], [0], [1], [0, 0, 1, 1], [], []>} : vector<14x64xf32>, vector<64x128xf32>, vector<14x128xf32> -> vector<14x128xf32>
    %105 = arith.addf %100, %104 : vector<14x128xf32>
    %106 = vector.extract_strided_slice %79 {offsets = [70, 0], sizes = [14, 64], strides = [1, 1]} : vector<112x64xf32> to vector<14x64xf32>
    %107 = vector.extract_strided_slice %81 {offsets = [5, 0, 0], sizes = [1, 64, 128], strides = [1, 1, 1]} : vector<8x64x128xf32> to vector<1x64x128xf32>
    %108 = vector.shape_cast %107 : vector<1x64x128xf32> to vector<64x128xf32>
    %cst_48 = arith.constant dense<0.000000e+00> : vector<14x128xf32>
    %109 = tpu.matmul %106, %108, %cst_48 {dimension_numbers = #tpu.dot_dimension_numbers<[1], [0], [0], [1], [0, 0, 1, 1], [], []>} : vector<14x64xf32>, vector<64x128xf32>, vector<14x128xf32> -> vector<14x128xf32>
    %110 = arith.addf %105, %109 : vector<14x128xf32>
    %111 = vector.extract_strided_slice %79 {offsets = [84, 0], sizes = [14, 64], strides = [1, 1]} : vector<112x64xf32> to vector<14x64xf32>
    %112 = vector.extract_strided_slice %81 {offsets = [6, 0, 0], sizes = [1, 64, 128], strides = [1, 1, 1]} : vector<8x64x128xf32> to vector<1x64x128xf32>
    %113 = vector.shape_cast %112 : vector<1x64x128xf32> to vector<64x128xf32>
    %cst_49 = arith.constant dense<0.000000e+00> : vector<14x128xf32>
    %114 = tpu.matmul %111, %113, %cst_49 {dimension_numbers = #tpu.dot_dimension_numbers<[1], [0], [0], [1], [0, 0, 1, 1], [], []>} : vector<14x64xf32>, vector<64x128xf32>, vector<14x128xf32> -> vector<14x128xf32>
    %115 = arith.addf %110, %114 : vector<14x128xf32>
    %116 = vector.extract_strided_slice %79 {offsets = [98, 0], sizes = [14, 64], strides = [1, 1]} : vector<112x64xf32> to vector<14x64xf32>
    %117 = vector.extract_strided_slice %81 {offsets = [7, 0, 0], sizes = [1, 64, 128], strides = [1, 1, 1]} : vector<8x64x128xf32> to vector<1x64x128xf32>
    %118 = vector.shape_cast %117 : vector<1x64x128xf32> to vector<64x128xf32>
    %cst_50 = arith.constant dense<0.000000e+00> : vector<14x128xf32>
    %119 = tpu.matmul %116, %118, %cst_50 {dimension_numbers = #tpu.dot_dimension_numbers<[1], [0], [0], [1], [0, 0, 1, 1], [], []>} : vector<14x64xf32>, vector<64x128xf32>, vector<14x128xf32> -> vector<14x128xf32>
    %120 = arith.addf %115, %119 : vector<14x128xf32>
    %c0_51 = arith.constant 0 : index
    %c0_52 = arith.constant 0 : index
    %121 = vector.load %arg11[%c0_51, %c0_52] : memref<2x14xf32, #tpu.memory_space<vmem>>, vector<2x14xf32>
    %c0_53 = arith.constant 0 : index
    %c0_54 = arith.constant 0 : index
    %122 = vector.load %arg12[%c0_53, %c0_54] : memref<14x2xf32, #tpu.memory_space<vmem>>, vector<14x2xf32>
    %cst_55 = arith.constant dense<0.000000e+00> : vector<2x128xf32>
    %123 = tpu.matmul %121, %120, %cst_55 {dimension_numbers = #tpu.dot_dimension_numbers<[1], [0], [0], [1], [0, 0, 1, 1], [], []>} : vector<2x14xf32>, vector<14x128xf32>, vector<2x128xf32> -> vector<2x128xf32>
    %124 = arith.mulf %120, %120 : vector<14x128xf32>
    %cst_56 = arith.constant dense<0.000000e+00> : vector<2x128xf32>
    %125 = tpu.matmul %121, %124, %cst_56 {dimension_numbers = #tpu.dot_dimension_numbers<[1], [0], [0], [1], [0, 0, 1, 1], [], []>} : vector<2x14xf32>, vector<14x128xf32>, vector<2x128xf32> -> vector<2x128xf32>
    %126 = arith.mulf %123, %123 : vector<2x128xf32>
    %127 = arith.subf %125, %126 : vector<2x128xf32>
    %cst_57 = arith.constant 9.99999974E-6 : f32
    %128 = vector.broadcast %cst_57 : f32 to vector<2x128xf32>
    %129 = arith.addf %127, %128 : vector<2x128xf32>
    %130 = math.rsqrt %129 : vector<2x128xf32>
    %cst_58 = arith.constant dense<0.000000e+00> : vector<14x128xf32>
    %131 = tpu.matmul %122, %123, %cst_58 {dimension_numbers = #tpu.dot_dimension_numbers<[1], [0], [0], [1], [0, 0, 1, 1], [], []>} : vector<14x2xf32>, vector<2x128xf32>, vector<14x128xf32> -> vector<14x128xf32>
    %cst_59 = arith.constant dense<0.000000e+00> : vector<14x128xf32>
    %132 = tpu.matmul %122, %130, %cst_59 {dimension_numbers = #tpu.dot_dimension_numbers<[1], [0], [0], [1], [0, 0, 1, 1], [], []>} : vector<14x2xf32>, vector<2x128xf32>, vector<14x128xf32> -> vector<14x128xf32>
    %133 = arith.subf %120, %131 : vector<14x128xf32>
    %134 = arith.mulf %133, %132 : vector<14x128xf32>
    %cst_60 = arith.constant 0.000000e+00 : f32
    %135 = vector.broadcast %cst_60 : f32 to vector<14x128xf32>
    %136 = arith.cmpf oge, %134, %135 : vector<14x128xf32>
    %cst_61 = arith.constant 2.000000e-01 : f32
    %137 = vector.broadcast %cst_61 : f32 to vector<14x128xf32>
    %138 = arith.mulf %137, %134 : vector<14x128xf32>
    %139 = arith.select %136, %134, %138 : vector<14x128xi1>, vector<14x128xf32>
    %c0_62 = arith.constant 0 : index
    %c0_63 = arith.constant 0 : index
    %c0_64 = arith.constant 0 : index
    %140 = vector.load %arg6[%c0_62, %c0_63, %c0_64] : memref<2x14x128xbf16, #tpu.memory_space<vmem>>, vector<2x14x128xbf16>
    %141 = arith.extf %140 : vector<2x14x128xbf16> to vector<2x14x128xf32>
    %c0_65 = arith.constant 0 : index
    %c0_66 = arith.constant 0 : index
    %142 = vector.load %arg13[%c0_65, %c0_66] : memref<2x14xf32, #tpu.memory_space<vmem>>, vector<2x14xf32>
    %143 = vector.extract_strided_slice %141 {offsets = [0, 0, 0], sizes = [1, 14, 128], strides = [1, 1, 1]} : vector<2x14x128xf32> to vector<1x14x128xf32>
    %144 = vector.shape_cast %143 : vector<1x14x128xf32> to vector<14x128xf32>
    %145 = arith.mulf %139, %144 : vector<14x128xf32>
    %cst_67 = arith.constant dense<0.000000e+00> : vector<2x128xf32>
    %146 = tpu.matmul %142, %145, %cst_67 {dimension_numbers = #tpu.dot_dimension_numbers<[1], [0], [0], [1], [0, 0, 1, 1], [], []>} : vector<2x14xf32>, vector<14x128xf32>, vector<2x128xf32> -> vector<2x128xf32>
    %cst_68 = arith.constant dense<0.000000e+00> : vector<2xf32>
    %147 = vector.multi_reduction <add>, %146, %cst_68 [1] : vector<2x128xf32> to vector<2xf32>
    %148 = vector.shape_cast %147 : vector<2xf32> to vector<2x1xf32>
    %149 = vector.extract_strided_slice %141 {offsets = [1, 0, 0], sizes = [1, 14, 128], strides = [1, 1, 1]} : vector<2x14x128xf32> to vector<1x14x128xf32>
    %150 = vector.shape_cast %149 : vector<1x14x128xf32> to vector<14x128xf32>
    %151 = arith.mulf %139, %150 : vector<14x128xf32>
    %cst_69 = arith.constant dense<0.000000e+00> : vector<2x128xf32>
    %152 = tpu.matmul %142, %151, %cst_69 {dimension_numbers = #tpu.dot_dimension_numbers<[1], [0], [0], [1], [0, 0, 1, 1], [], []>} : vector<2x14xf32>, vector<14x128xf32>, vector<2x128xf32> -> vector<2x128xf32>
    %cst_70 = arith.constant dense<0.000000e+00> : vector<2xf32>
    %153 = vector.multi_reduction <add>, %152, %cst_70 [1] : vector<2x128xf32> to vector<2xf32>
    %154 = vector.shape_cast %153 : vector<2xf32> to vector<2x1xf32>
    %155 = tpu.iota {dimensions = array<i32: 1>} : vector<2x128xi32>
    %c0_i32 = arith.constant 0 : i32
    %156 = vector.broadcast %c0_i32 : i32 to vector<2x128xi32>
    %157 = arith.cmpi eq, %155, %156 : vector<2x128xi32>
    %c1_i32 = arith.constant 1 : i32
    %158 = vector.broadcast %c1_i32 : i32 to vector<2x128xi32>
    %159 = arith.cmpi eq, %155, %158 : vector<2x128xi32>
    %cst_71 = arith.constant -1.000000e+30 : f32
    %160 = vector.shape_cast %154 : vector<2x1xf32> to vector<2x1xf32>
    %161 = vector.broadcast %160 : vector<2x1xf32> to vector<2x128xf32>
    %162 = vector.broadcast %cst_71 : f32 to vector<2x128xf32>
    %163 = arith.select %159, %161, %162 : vector<2x128xi1>, vector<2x128xf32>
    %164 = vector.shape_cast %148 : vector<2x1xf32> to vector<2x1xf32>
    %165 = vector.broadcast %164 : vector<2x1xf32> to vector<2x128xf32>
    %166 = arith.select %157, %165, %163 : vector<2x128xi1>, vector<2x128xf32>
    %cst_72 = arith.constant dense<0xFF800000> : vector<2xf32>
    %167 = vector.multi_reduction <maximumf>, %166, %cst_72 [1] : vector<2x128xf32> to vector<2xf32>
    %168 = vector.shape_cast %167 : vector<2xf32> to vector<2x1xf32>
    %169 = vector.broadcast %168 : vector<2x1xf32> to vector<2x128xf32>
    %170 = arith.subf %166, %169 : vector<2x128xf32>
    %171 = math.exp %170 : vector<2x128xf32>
    %cst_73 = arith.constant dense<0.000000e+00> : vector<2xf32>
    %172 = vector.multi_reduction <add>, %171, %cst_73 [1] : vector<2x128xf32> to vector<2xf32>
    %173 = vector.shape_cast %172 : vector<2xf32> to vector<2x1xf32>
    %174 = vector.broadcast %173 : vector<2x1xf32> to vector<2x128xf32>
    %175 = arith.divf %171, %174 : vector<2x128xf32>
    %c0_74 = arith.constant 0 : index
    %c0_75 = arith.constant 0 : index
    %c0_76 = arith.constant 0 : index
    %176 = vector.load %arg14[%c0_74, %c0_75, %c0_76] : memref<1x2x128xf32, #tpu.memory_space<vmem>>, vector<1x2x128xf32>
    %177 = vector.shape_cast %176 : vector<1x2x128xf32> to vector<2x128xf32>
    %178 = vector.shape_cast %175 : vector<2x128xf32> to vector<1x2x128xf32>
    tpu.vector_store %arg14[%c0_74, %c0_75, %c0_76], %178 {strides = array<i32>} : memref<1x2x128xf32, #tpu.memory_space<vmem>>, vector<1x2x128xf32>,
    return
  }
  func.func @transform_0(%arg0: i32) -> (i32, i32, i32) {
    %c0_i32 = arith.constant 0 : i32
    %c0_i32_0 = arith.constant 0 : i32
    %c0_i32_1 = arith.constant 0 : i32
    return %arg0, %c0_i32, %c0_i32_0 : i32, i32, i32
  }
  func.func @transform_1(%arg0: i32) -> (i32, i32) {
    %c0_i32 = arith.constant 0 : i32
    %c0_i32_0 = arith.constant 0 : i32
    %c0_i32_1 = arith.constant 0 : i32
    return %c0_i32, %c0_i32_0 : i32, i32
  }
  func.func @transform_2(%arg0: i32) -> (i32, i32, i32) {
    %c0_i32 = arith.constant 0 : i32
    %c0_i32_0 = arith.constant 0 : i32
    %c0_i32_1 = arith.constant 0 : i32
    %c0_i32_2 = arith.constant 0 : i32
    return %c0_i32, %c0_i32_0, %c0_i32_1 : i32, i32, i32
  }
  func.func @transform_3(%arg0: i32) -> (i32, i32, i32) {
    %c0_i32 = arith.constant 0 : i32
    %c0_i32_0 = arith.constant 0 : i32
    %c0_i32_1 = arith.constant 0 : i32
    %c0_i32_2 = arith.constant 0 : i32
    return %c0_i32, %c0_i32_0, %c0_i32_1 : i32, i32, i32
  }
  func.func @transform_4(%arg0: i32) -> (i32, i32, i32) {
    %c0_i32 = arith.constant 0 : i32
    %c0_i32_0 = arith.constant 0 : i32
    %c0_i32_1 = arith.constant 0 : i32
    %c0_i32_2 = arith.constant 0 : i32
    return %c0_i32, %c0_i32_0, %c0_i32_1 : i32, i32, i32
  }
  func.func @transform_5(%arg0: i32) -> (i32, i32, i32) {
    %c0_i32 = arith.constant 0 : i32
    %c0_i32_0 = arith.constant 0 : i32
    %c0_i32_1 = arith.constant 0 : i32
    %c0_i32_2 = arith.constant 0 : i32
    return %c0_i32, %c0_i32_0, %c0_i32_1 : i32, i32, i32
  }
  func.func @transform_6(%arg0: i32) -> (i32, i32) {
    %c0_i32 = arith.constant 0 : i32
    %c0_i32_0 = arith.constant 0 : i32
    %c0_i32_1 = arith.constant 0 : i32
    return %c0_i32, %c0_i32_0 : i32, i32
  }
  func.func @transform_7(%arg0: i32) -> (i32, i32) {
    %c0_i32 = arith.constant 0 : i32
    %c0_i32_0 = arith.constant 0 : i32
    %c0_i32_1 = arith.constant 0 : i32
    return %c0_i32, %c0_i32_0 : i32, i32
  }
  func.func @transform_8(%arg0: i32) -> (i32, i32) {
    %c0_i32 = arith.constant 0 : i32
    %c0_i32_0 = arith.constant 0 : i32
    %c0_i32_1 = arith.constant 0 : i32
    return %c0_i32, %c0_i32_0 : i32, i32
  }
  func.func @transform_9(%arg0: i32) -> (i32, i32) {
    %c0_i32 = arith.constant 0 : i32
    %c0_i32_0 = arith.constant 0 : i32
    %c0_i32_1 = arith.constant 0 : i32
    return %c0_i32, %c0_i32_0 : i32, i32
  }
  func.func @transform_10(%arg0: i32) -> (i32, i32) {
    %c0_i32 = arith.constant 0 : i32
    %c0_i32_0 = arith.constant 0 : i32
    %c0_i32_1 = arith.constant 0 : i32
    return %c0_i32, %c0_i32_0 : i32, i32
  }
  func.func @transform_11(%arg0: i32) -> (i32, i32) {
    %c0_i32 = arith.constant 0 : i32
    %c0_i32_0 = arith.constant 0 : i32
    %c0_i32_1 = arith.constant 0 : i32
    return %c0_i32, %c0_i32_0 : i32, i32
  }
  func.func @transform_12(%arg0: i32) -> (i32, i32) {
    %c0_i32 = arith.constant 0 : i32
    %c0_i32_0 = arith.constant 0 : i32
    %c0_i32_1 = arith.constant 0 : i32
    return %c0_i32, %c0_i32_0 : i32, i32
  }
  func.func @transform_13(%arg0: i32) -> (i32, i32, i32) {
    %c0_i32 = arith.constant 0 : i32
    %c0_i32_0 = arith.constant 0 : i32
    %c0_i32_1 = arith.constant 0 : i32
    return %arg0, %c0_i32, %c0_i32_0 : i32, i32, i32
  }
}

</mosaic_0001>

<llo_original>
// kernel: classifier_forward.1
$region0: #{classifier_forward.1}
  #allocation0 [shape = 'u32[]', space=smem, size = 0x4, offset = 0x4, fixed_abs, tag = 'smem constant byte address 0x4 - core index']
  #allocation1 [shape = 'u32[144,128]{1,0:T(1,128)}', space=vmem, size = 0x12000, scoped, tag = 'internal scratch']
  %s0 = inlined_call_operand.vmem [shape: f32[2,896,12], index: 0, kind: input, shape index: {}]
  %s1 = inlined_call_operand.vmem [shape: bf16[12,16], index: 1, kind: input, shape index: {}]
  %s2 = inlined_call_operand.vmem [shape: bf16[4,16,32], index: 2, kind: input, shape index: {}]
  %s3 = inlined_call_operand.vmem [shape: bf16[2,32,64], index: 3, kind: input, shape index: {}]
  %s4 = inlined_call_operand.vmem [shape: bf16[8,64,128], index: 4, kind: input, shape index: {}]
  %s5 = inlined_call_operand.vmem [shape: bf16[2,14,128], index: 5, kind: input, shape index: {}]
  %s6 = inlined_call_operand.vmem [shape: f32[2,224], index: 6, kind: input, shape index: {}]
  %s7 = inlined_call_operand.vmem [shape: f32[224,2], index: 7, kind: input, shape index: {}]
  %s8 = inlined_call_operand.vmem [shape: f32[2,112], index: 8, kind: input, shape index: {}]
  %s9 = inlined_call_operand.vmem [shape: f32[112,2], index: 9, kind: input, shape index: {}]
  %s10 = inlined_call_operand.vmem [shape: f32[2,14], index: 10, kind: input, shape index: {}]
  %s11 = inlined_call_operand.vmem [shape: f32[14,2], index: 11, kind: input, shape index: {}]
  %s12 = inlined_call_operand.vmem [shape: f32[2,14], index: 12, kind: input, shape index: {}]
  %s13 = inlined_call_operand.vmem [shape: f32[2,2,128], index: 13, kind: output, shape index: {}]
  %s14 = sld [smem:[#allocation0]]
  $region85: #{classifier_forward.1} parent=0
    _
  %s16 = ssub.s32 1, %s14
  %s17 = scalar_select 0, %s16, %s14
  loop: start=0, step=1, limit=4
  $region2: #{classifier_forward.1} parent=0 // loop_pre_header
    _
  $region3: #{classifier_forward.1} parent=0 // loop_header
    %s19 = sphi 0, %s23
    %p20 = scmp.ge.s32.totalorder %s19, 4
    %s29 = sphi 0, %s31
    %s32 = sphi 0, %s29
    %s33 = sphi 0, %s32
    %s49 = sphi 0, %s33
    %s53 = sphi 0, %s53
    %s55 = sphi 0, %s53
    %s56 = sphi 0, %s55
    %s70 = sphi 0, %s56
    %s74 = sphi 0, %s74
    %s76 = sphi 0, %s74
    %s77 = sphi 0, %s76
    %s91 = sphi 0, %s77
    %s95 = sphi 0, %s95
    %s97 = sphi 0, %s95
    %s98 = sphi 0, %s97
    %s112 = sphi 0, %s98
    %s116 = sphi 0, %s116
    %s118 = sphi 0, %s116
    %s119 = sphi 0, %s118
    %s133 = sphi 0, %s119
    %s137 = sphi 0, %s137
    %s139 = sphi 0, %s137
    %s140 = sphi 0, %s139
    %s154 = sphi 0, %s140
    %s158 = sphi 0, %s158
    %s160 = sphi 0, %s158
    %s161 = sphi 0, %s160
    %s175 = sphi 0, %s161
    %s179 = sphi 0, %s179
    %s181 = sphi 0, %s179
    %s182 = sphi 0, %s181
    %s196 = sphi 0, %s182
    %s200 = sphi 0, %s200
    %s202 = sphi 0, %s200
    %s203 = sphi 0, %s202
    %s217 = sphi 0, %s203
    %s221 = sphi 0, %s221
    %s223 = sphi 0, %s221
    %s224 = sphi 0, %s223
    %s238 = sphi 0, %s224
    %s242 = sphi 0, %s242
    %s244 = sphi 0, %s242
    %s245 = sphi 0, %s244
    %s259 = sphi 0, %s245
    %s263 = sphi 0, %s263
    %s265 = sphi 0, %s263
    %s266 = sphi 0, %s265
    %s280 = sphi 0, %s266
    %s284 = sphi 0, %s284
    %s286 = sphi 0, %s284
    %s287 = sphi 0, %s286
    %s301 = sphi 0, %s287
    %s307 = sphi 0, %s309
    %s310 = sphi 0, %s307
    %s311 = sphi 0, %s310
    %s327 = sphi 0, %s311
  $region4: #{classifier_forward.1} parent=0 // loop_header_branch
    %22 = sbr.rel (%p20) target = $region8
  $region5: #{classifier_forward.1} parent=0 // loop_body
    %s24 = ssub.s32 %s19, 1
    %s25 = ssub.s32 %s19, 2
    %s26 = sadd.s32 %s19, 1
    %s27 = ssub.s32 %s19, %s26
    %p28 = scmp.eq.s32.totalorder %s27, 0
    %s30 = sadd.s32 %s29, 1
    %s31 = scalar_select %p28, %s29, %s30
    %p34 = pneg %p28
    %p35 = scmp.eq.s32.totalorder %s19, 1
    %p36 = por %p34, %p35
    %p37 = scmp.ne.s32.totalorder %s29, %s32
    %p38 = scmp.eq.s32.totalorder %s19, 0
    %p39 = por %p37, %p38
    %p40 = scmp.ne.s32.totalorder %s29, %s32
    %p41 = scmp.eq.s32.totalorder %s24, 1
    %p42 = por %p40, %p41
    %p43 = scmp.ne.s32.totalorder %s32, %s33
    %p44 = scmp.eq.s32.totalorder %s24, 0
    %p45 = por %p43, %p44
    %p46 = scmp.ne.s32.totalorder %s32, %s33
    %p47 = scmp.eq.s32.totalorder %s25, 1
    %p48 = por %p46, %p47
    %p50 = scmp.ne.s32.totalorder %s33, %s49
    %p51 = scmp.eq.s32.totalorder %s25, 0
    %p52 = por %p50, %p51
    %s54 = sadd.s32 %s53, 1
    %p57 = scmp.eq.s32.totalorder %s19, 1
    %p58 = scmp.ne.s32.totalorder %s53, %s55
    %p59 = scmp.eq.s32.totalorder %s19, 0
    %p60 = por %p58, %p59
    %p61 = scmp.ne.s32.totalorder %s53, %s55
    %p62 = scmp.eq.s32.totalorder %s24, 1
    %p63 = por %p61, %p62
    %p64 = scmp.ne.s32.totalorder %s55, %s56
    %p65 = scmp.eq.s32.totalorder %s24, 0
    %p66 = por %p64, %p65
    %p67 = scmp.ne.s32.totalorder %s55, %s56
    %p68 = scmp.eq.s32.totalorder %s25, 1
    %p69 = por %p67, %p68
    %p71 = scmp.ne.s32.totalorder %s56, %s70
    %p72 = scmp.eq.s32.totalorder %s25, 0
    %p73 = por %p71, %p72
    %s75 = sadd.s32 %s74, 1
    %p78 = scmp.eq.s32.totalorder %s19, 1
    %p79 = scmp.ne.s32.totalorder %s74, %s76
    %p80 = scmp.eq.s32.totalorder %s19, 0
    %p81 = por %p79, %p80
    %p82 = scmp.ne.s32.totalorder %s74, %s76
    %p83 = scmp.eq.s32.totalorder %s24, 1
    %p84 = por %p82, %p83
    %p85 = scmp.ne.s32.totalorder %s76, %s77
    %p86 = scmp.eq.s32.totalorder %s24, 0
    %p87 = por %p85, %p86
    %p88 = scmp.ne.s32.totalorder %s76, %s77
    %p89 = scmp.eq.s32.totalorder %s25, 1
    %p90 = por %p88, %p89
    %p92 = scmp.ne.s32.totalorder %s77, %s91
    %p93 = scmp.eq.s32.totalorder %s25, 0
    %p94 = por %p92, %p93
    %s96 = sadd.s32 %s95, 1
    %p99 = scmp.eq.s32.totalorder %s19, 1
    %p100 = scmp.ne.s32.totalorder %s95, %s97
    %p101 = scmp.eq.s32.totalorder %s19, 0
    %p102 = por %p100, %p101
    %p103 = scmp.ne.s32.totalorder %s95, %s97
    %p104 = scmp.eq.s32.totalorder %s24, 1
    %p105 = por %p103, %p104
    %p106 = scmp.ne.s32.totalorder %s97, %s98
    %p107 = scmp.eq.s32.totalorder %s24, 0
    %p108 = por %p106, %p107
    %p109 = scmp.ne.s32.totalorder %s97, %s98
    %p110 = scmp.eq.s32.totalorder %s25, 1
    %p111 = por %p109, %p110
    %p113 = scmp.ne.s32.totalorder %s98, %s112
    %p114 = scmp.eq.s32.totalorder %s25, 0
    %p115 = por %p113, %p114
    %s117 = sadd.s32 %s116, 1
    %p120 = scmp.eq.s32.totalorder %s19, 1
    %p121 = scmp.ne.s32.totalorder %s116, %s118
    %p122 = scmp.eq.s32.totalorder %s19, 0
    %p123 = por %p121, %p122
    %p124 = scmp.ne.s32.totalorder %s116, %s118
    %p125 = scmp.eq.s32.totalorder %s24, 1
    %p126 = por %p124, %p125
    %p127 = scmp.ne.s32.totalorder %s118, %s119
    %p128 = scmp.eq.s32.totalorder %s24, 0
    %p129 = por %p127, %p128
    %p130 = scmp.ne.s32.totalorder %s118, %s119
    %p131 = scmp.eq.s32.totalorder %s25, 1
    %p132 = por %p130, %p131
    %p134 = scmp.ne.s32.totalorder %s119, %s133
    %p135 = scmp.eq.s32.totalorder %s25, 0
    %p136 = por %p134, %p135
    %s138 = sadd.s32 %s137, 1
    %p141 = scmp.eq.s32.totalorder %s19, 1
    %p142 = scmp.ne.s32.totalorder %s137, %s139
    %p143 = scmp.eq.s32.totalorder %s19, 0
    %p144 = por %p142, %p143
    %p145 = scmp.ne.s32.totalorder %s137, %s139
    %p146 = scmp.eq.s32.totalorder %s24, 1
    %p147 = por %p145, %p146
    %p148 = scmp.ne.s32.totalorder %s139, %s140
    %p149 = scmp.eq.s32.totalorder %s24, 0
    %p150 = por %p148, %p149
    %p151 = scmp.ne.s32.totalorder %s139, %s140
    %p152 = scmp.eq.s32.totalorder %s25, 1
    %p153 = por %p151, %p152
    %p155 = scmp.ne.s32.totalorder %s140, %s154
    %p156 = scmp.eq.s32.totalorder %s25, 0
    %p157 = por %p155, %p156
    %s159 = sadd.s32 %s158, 1
    %p162 = scmp.eq.s32.totalorder %s19, 1
    %p163 = scmp.ne.s32.totalorder %s158, %s160
    %p164 = scmp.eq.s32.totalorder %s19, 0
    %p165 = por %p163, %p164
    %p166 = scmp.ne.s32.totalorder %s158, %s160
    %p167 = scmp.eq.s32.totalorder %s24, 1
    %p168 = por %p166, %p167
    %p169 = scmp.ne.s32.totalorder %s160, %s161
    %p170 = scmp.eq.s32.totalorder %s24, 0
    %p171 = por %p169, %p170
    %p172 = scmp.ne.s32.totalorder %s160, %s161
    %p173 = scmp.eq.s32.totalorder %s25, 1
    %p174 = por %p172, %p173
    %p176 = scmp.ne.s32.totalorder %s161, %s175
    %p177 = scmp.eq.s32.totalorder %s25, 0
    %p178 = por %p176, %p177
    %s180 = sadd.s32 %s179, 1
    %p183 = scmp.eq.s32.totalorder %s19, 1
    %p184 = scmp.ne.s32.totalorder %s179, %s181
    %p185 = scmp.eq.s32.totalorder %s19, 0
    %p186 = por %p184, %p185
    %p187 = scmp.ne.s32.totalorder %s179, %s181
    %p188 = scmp.eq.s32.totalorder %s24, 1
    %p189 = por %p187, %p188
    %p190 = scmp.ne.s32.totalorder %s181, %s182
    %p191 = scmp.eq.s32.totalorder %s24, 0
    %p192 = por %p190, %p191
    %p193 = scmp.ne.s32.totalorder %s181, %s182
    %p194 = scmp.eq.s32.totalorder %s25, 1
    %p195 = por %p193, %p194
    %p197 = scmp.ne.s32.totalorder %s182, %s196
    %p198 = scmp.eq.s32.totalorder %s25, 0
    %p199 = por %p197, %p198
    %s201 = sadd.s32 %s200, 1
    %p204 = scmp.eq.s32.totalorder %s19, 1
    %p205 = scmp.ne.s32.totalorder %s200, %s202
    %p206 = scmp.eq.s32.totalorder %s19, 0
    %p207 = por %p205, %p206
    %p208 = scmp.ne.s32.totalorder %s200, %s202
    %p209 = scmp.eq.s32.totalorder %s24, 1
    %p210 = por %p208, %p209
    %p211 = scmp.ne.s32.totalorder %s202, %s203
    %p212 = scmp.eq.s32.totalorder %s24, 0
    %p213 = por %p211, %p212
    %p214 = scmp.ne.s32.totalorder %s202, %s203
    %p215 = scmp.eq.s32.totalorder %s25, 1
    %p216 = por %p214, %p215
    %p218 = scmp.ne.s32.totalorder %s203, %s217
    %p219 = scmp.eq.s32.totalorder %s25, 0
    %p220 = por %p218, %p219
    %s222 = sadd.s32 %s221, 1
    %p225 = scmp.eq.s32.totalorder %s19, 1
    %p226 = scmp.ne.s32.totalorder %s221, %s223
    %p227 = scmp.eq.s32.totalorder %s19, 0
    %p228 = por %p226, %p227
    %p229 = scmp.ne.s32.totalorder %s221, %s223
    %p230 = scmp.eq.s32.totalorder %s24, 1
    %p231 = por %p229, %p230
    %p232 = scmp.ne.s32.totalorder %s223, %s224
    %p233 = scmp.eq.s32.totalorder %s24, 0
    %p234 = por %p232, %p233
    %p235 = scmp.ne.s32.totalorder %s223, %s224
    %p236 = scmp.eq.s32.totalorder %s25, 1
    %p237 = por %p235, %p236
    %p239 = scmp.ne.s32.totalorder %s224, %s238
    %p240 = scmp.eq.s32.totalorder %s25, 0
    %p241 = por %p239, %p240
    %s243 = sadd.s32 %s242, 1
    %p246 = scmp.eq.s32.totalorder %s19, 1
    %p247 = scmp.ne.s32.totalorder %s242, %s244
    %p248 = scmp.eq.s32.totalorder %s19, 0
    %p249 = por %p247, %p248
    %p250 = scmp.ne.s32.totalorder %s242, %s244
    %p251 = scmp.eq.s32.totalorder %s24, 1
    %p252 = por %p250, %p251
    %p253 = scmp.ne.s32.totalorder %s244, %s245
    %p254 = scmp.eq.s32.totalorder %s24, 0
    %p255 = por %p253, %p254
    %p256 = scmp.ne.s32.totalorder %s244, %s245
    %p257 = scmp.eq.s32.totalorder %s25, 1
    %p258 = por %p256, %p257
    %p260 = scmp.ne.s32.totalorder %s245, %s259
    %p261 = scmp.eq.s32.totalorder %s25, 0
    %p262 = por %p260, %p261
    %s264 = sadd.s32 %s263, 1
    %p267 = scmp.eq.s32.totalorder %s19, 1
    %p268 = scmp.ne.s32.totalorder %s263, %s265
    %p269 = scmp.eq.s32.totalorder %s19, 0
    %p270 = por %p268, %p269
    %p271 = scmp.ne.s32.totalorder %s263, %s265
    %p272 = scmp.eq.s32.totalorder %s24, 1
    %p273 = por %p271, %p272
    %p274 = scmp.ne.s32.totalorder %s265, %s266
    %p275 = scmp.eq.s32.totalorder %s24, 0
    %p276 = por %p274, %p275
    %p277 = scmp.ne.s32.totalorder %s265, %s266
    %p278 = scmp.eq.s32.totalorder %s25, 1
    %p279 = por %p277, %p278
    %p281 = scmp.ne.s32.totalorder %s266, %s280
    %p282 = scmp.eq.s32.totalorder %s25, 0
    %p283 = por %p281, %p282
    %s285 = sadd.s32 %s284, 1
    %p288 = scmp.eq.s32.totalorder %s19, 1
    %p289 = scmp.ne.s32.totalorder %s284, %s286
    %p290 = scmp.eq.s32.totalorder %s19, 0
    %p291 = por %p289, %p290
    %p292 = scmp.ne.s32.totalorder %s284, %s286
    %p293 = scmp.eq.s32.totalorder %s24, 1
    %p294 = por %p292, %p293
    %p295 = scmp.ne.s32.totalorder %s286, %s287
    %p296 = scmp.eq.s32.totalorder %s24, 0
    %p297 = por %p295, %p296
    %p298 = scmp.ne.s32.totalorder %s286, %s287
    %p299 = scmp.eq.s32.totalorder %s25, 1
    %p300 = por %p298, %p299
    %p302 = scmp.ne.s32.totalorder %s287, %s301
    %p303 = scmp.eq.s32.totalorder %s25, 0
    %p304 = por %p302, %p303
    %s305 = ssub.s32 %s19, %s26
    %p306 = scmp.eq.s32.totalorder %s305, 0
    %s308 = sadd.s32 %s307, 1
    %s309 = scalar_select %p306, %s307, %s308
    %p312 = pneg %p306
    %p313 = scmp.eq.s32.totalorder %s19, 1
    %p314 = por %p312, %p313
    %p315 = scmp.ne.s32.totalorder %s307, %s310
    %p316 = scmp.eq.s32.totalorder %s19, 0
    %p317 = por %p315, %p316
    %p318 = scmp.ne.s32.totalorder %s307, %s310
    %p319 = scmp.eq.s32.totalorder %s24, 1
    %p320 = por %p318, %p319
    %p321 = scmp.ne.s32.totalorder %s310, %s311
    %p322 = scmp.eq.s32.totalorder %s24, 0
    %p323 = por %p321, %p322
    %p324 = scmp.ne.s32.totalorder %s310, %s311
    %p325 = scmp.eq.s32.totalorder %s25, 1
    %p326 = por %p324, %p325
    %p328 = scmp.ne.s32.totalorder %s311, %s327
    %p329 = scmp.eq.s32.totalorder %s25, 0
    %p330 = por %p328, %p329
    %p331 = scmp.le.s32.totalorder 1, %s19
    %p332 = scmp.lt.s32.totalorder %s19, 3
    %p333 = pnand %p331, %p332
    %p334 = pneg %p333
    // Predicated region
    $region9: #{classifier_forward.1} parent=5 // pred_check
      _
    $region10: #{classifier_forward.1} parent=5 // pred_check_branch
      %336 = sbr.rel (%p333) target = $region12
    $region11: #{classifier_forward.1} parent=5 // pred_region
      %s337 = ssub.s32 %s19, 1
      // Predicated region
      $region13: #{classifier_forward.1} parent=11 // pred_check
        %p338 = pneg %p66
      $region14: #{classifier_forward.1} parent=11 // pred_check_branch
        %340 = sbr.rel (%p338) target = $region16
      $region15: #{classifier_forward.1} parent=11 // pred_region
        _
      $region16: #{classifier_forward.1} parent=11 // pred_fallthru
        _
      // Predicated region
      $region17: #{classifier_forward.1} parent=11 // pred_check
        %p341 = pneg %p87
      $region18: #{classifier_forward.1} parent=11 // pred_check_branch
        %343 = sbr.rel (%p341) target = $region20
      $region19: #{classifier_forward.1} parent=11 // pred_region
        _
      $region20: #{classifier_forward.1} parent=11 // pred_fallthru
        _
      // Predicated region
      $region21: #{classifier_forward.1} parent=11 // pred_check
        %p344 = pneg %p108
      $region22: #{classifier_forward.1} parent=11 // pred_check_branch
        %346 = sbr.rel (%p344) target = $region24
      $region23: #{classifier_forward.1} parent=11 // pred_region
        _
      $region24: #{classifier_forward.1} parent=11 // pred_fallthru
        _
      // Predicated region
      $region25: #{classifier_forward.1} parent=11 // pred_check
        %p347 = pneg %p129
      $region26: #{classifier_forward.1} parent=11 // pred_check_branch
        %349 = sbr.rel (%p347) target = $region28
      $region27: #{classifier_forward.1} parent=11 // pred_region
        _
      $region28: #{classifier_forward.1} parent=11 // pred_fallthru
        _
      // Predicated region
      $region29: #{classifier_forward.1} parent=11 // pred_check
        %p350 = pneg %p150
      $region30: #{classifier_forward.1} parent=11 // pred_check_branch
        %352 = sbr.rel (%p350) target = $region32
      $region31: #{classifier_forward.1} parent=11 // pred_region
        _
      $region32: #{classifier_forward.1} parent=11 // pred_fallthru
        _
      // Predicated region
      $region33: #{classifier_forward.1} parent=11 // pred_check
        %p353 = pneg %p171
      $region34: #{classifier_forward.1} parent=11 // pred_check_branch
        %355 = sbr.rel (%p353) target = $region36
      $region35: #{classifier_forward.1} parent=11 // pred_region
        _
      $region36: #{classifier_forward.1} parent=11 // pred_fallthru
        _
      // Predicated region
      $region37: #{classifier_forward.1} parent=11 // pred_check
        %p356 = pneg %p192
      $region38: #{classifier_forward.1} parent=11 // pred_check_branch
        %358 = sbr.rel (%p356) target = $region40
      $region39: #{classifier_forward.1} parent=11 // pred_region
        _
      $region40: #{classifier_forward.1} parent=11 // pred_fallthru
        _
      // Predicated region
      $region41: #{classifier_forward.1} parent=11 // pred_check
        %p359 = pneg %p213
      $region42: #{classifier_forward.1} parent=11 // pred_check_branch
        %361 = sbr.rel (%p359) target = $region44
      $region43: #{classifier_forward.1} parent=11 // pred_region
        _
      $region44: #{classifier_forward.1} parent=11 // pred_fallthru
        _
      // Predicated region
      $region45: #{classifier_forward.1} parent=11 // pred_check
        %p362 = pneg %p234
      $region46: #{classifier_forward.1} parent=11 // pred_check_branch
        %364 = sbr.rel (%p362) target = $region48
      $region47: #{classifier_forward.1} parent=11 // pred_region
        _
      $region48: #{classifier_forward.1} parent=11 // pred_fallthru
        _
      // Predicated region
      $region49: #{classifier_forward.1} parent=11 // pred_check
        %p365 = pneg %p255
      $region50: #{classifier_forward.1} parent=11 // pred_check_branch
        %367 = sbr.rel (%p365) target = $region52
      $region51: #{classifier_forward.1} parent=11 // pred_region
        _
      $region52: #{classifier_forward.1} parent=11 // pred_fallthru
        _
      // Predicated region
      $region53: #{classifier_forward.1} parent=11 // pred_check
        %p368 = pneg %p276
      $region54: #{classifier_forward.1} parent=11 // pred_check_branch
        %370 = sbr.rel (%p368) target = $region56
      $region55: #{classifier_forward.1} parent=11 // pred_region
        _
      $region56: #{classifier_forward.1} parent=11 // pred_fallthru
        _
      // Predicated region
      $region57: #{classifier_forward.1} parent=11 // pred_check
        %p371 = pneg %p297
      $region58: #{classifier_forward.1} parent=11 // pred_check_branch
        %373 = sbr.rel (%p371) target = $region60
      $region59: #{classifier_forward.1} parent=11 // pred_region
        _
      $region60: #{classifier_forward.1} parent=11 // pred_fallthru
        _
    $region12: #{classifier_forward.1} parent=5 // pred_fallthru
      _
    %p374 = scmp.lt.s32.totalorder %s19, 2
    // Predicated region
    $region61: #{classifier_forward.1} parent=5 // pred_check
      %p375 = pneg %p374
    $region62: #{classifier_forward.1} parent=5 // pred_check_branch
      %377 = sbr.rel (%p375) target = $region64
    $region63: #{classifier_forward.1} parent=5 // pred_region
      // Predicated region
      $region65: #{classifier_forward.1} parent=63 // pred_check
        %p378 = pneg %p39
      $region66: #{classifier_forward.1} parent=63 // pred_check_branch
        %380 = sbr.rel (%p378) target = $region68
      $region67: #{classifier_forward.1} parent=63 // pred_region
        %p381 = scmp.lt.s32.totalorder %s19, 1
        %s382 = scalar_select %p381, %s19, 1
        %s383 = smul.addr %s382, 112
        %s384 = smul.addr %s383, 8
        %s385 = scalar_lea.vmem %s0, %s384
      $region68: #{classifier_forward.1} parent=63 // pred_fallthru
        _
    $region64: #{classifier_forward.1} parent=5 // pred_fallthru
      _
    %p386 = scmp.le.s32.totalorder 1, %s19
    %p387 = scmp.lt.s32.totalorder %s19, 3
    %p388 = pnand %p386, %p387
    %p389 = pneg %p388
    // Predicated region
    $region69: #{classifier_forward.1} parent=5 // pred_check
      _
    $region70: #{classifier_forward.1} parent=5 // pred_check_branch
      %391 = sbr.rel (%p388) target = $region72
    $region71: #{classifier_forward.1} parent=5 // pred_region
      %s392 = ssub.s32 %s19, 1
      %p393 = scmp.lt.s32.totalorder %s24, 1
      %s394 = scalar_select %p393, %s24, 1
      %s395 = smul.addr %s394, 112
      %s396 = smul.addr %s395, 8
      %s397 = scalar_lea.vmem %s0, %s396
      %p398 = pneg %p45
      %p399 = pneg %p42
      %p400 = pneg %p66
      %p401 = pneg %p63
      %p402 = pneg %p87
      %p403 = pneg %p84
      %p404 = pneg %p108
      %p405 = pneg %p105
      %p406 = pneg %p129
      %p407 = pneg %p126
      %p408 = pneg %p150
      %p409 = pneg %p147
      %p410 = pneg %p171
      %p411 = pneg %p168
      %p412 = pneg %p192
      %p413 = pneg %p189
      %p414 = pneg %p213
      %p415 = pneg %p210
      %p416 = pneg %p234
      %p417 = pneg %p231
      %p418 = pneg %p255
      %p419 = pneg %p252
      %p420 = pneg %p276
      %p421 = pneg %p273
      %p422 = pneg %p297
      %p423 = pneg %p294
      %p424 = pneg %p323
      %p425 = pneg %p320
      %p426 = scmp.lt.s32.totalorder %s24, 1
      %s427 = scalar_select %p426, %s24, 1
      %s428 = smul.addr %s427, 2
      %s429 = scalar_lea.vmem %s13, %s428
      %p430 = scmp.lt.s32.totalorder %s24, 1
      %s431 = scalar_select %p430, %s24, 1
      %s432 = smul.addr %s431, 112
      %s433 = smul.addr %s432, 8
      %s434 = scalar_lea.vmem %s0, %s433
      %p435 = scmp.lt.s32.totalorder %s24, 1
      %s436 = scalar_select %p435, %s24, 1
      %s437 = smul.addr %s436, 2
      %s438 = scalar_lea.vmem %s13, %s437
      %v439 = vld [vmem:[%s434] sm:$0xff]
      %v440 = vld [vmem:[%s434 + $0x8] sm:$0xff]
      %v441 = vld [vmem:[%s434 + $0x10] sm:$0xff]
      %v442 = vld [vmem:[%s434 + $0x18] sm:$0xff]
      %v443 = vld [vmem:[%s434 + $0x20] sm:$0xff]
      %v444 = vld [vmem:[%s434 + $0x28] sm:$0xff]
      %v445 = vld [vmem:[%s434 + $0x30] sm:$0xff]
      %v446 = vld [vmem:[%s434 + $0x38] sm:$0xff]
      %v447 = vld [vmem:[%s434 + $0x40] sm:$0xff]
      %v448 = vld [vmem:[%s434 + $0x48] sm:$0xff]
      %v449 = vld [vmem:[%s434 + $0x50] sm:$0xff]
      %v450 = vld [vmem:[%s434 + $0x58] sm:$0xff]
      %v451 = vld [vmem:[%s434 + $0x60] sm:$0xff]
      %v452 = vld [vmem:[%s434 + $0x68] sm:$0xff]
      %v453 = vld [vmem:[%s434 + $0x70] sm:$0xff]
      %v454 = vld [vmem:[%s434 + $0x78] sm:$0xff]
      %v455 = vld [vmem:[%s434 + $0x80] sm:$0xff]
      %v456 = vld [vmem:[%s434 + $0x88] sm:$0xff]
      %v457 = vld [vmem:[%s434 + $0x90] sm:$0xff]
      %v458 = vld [vmem:[%s434 + $0x98] sm:$0xff]
      %v459 = vld [vmem:[%s434 + $0xa0] sm:$0xff]
      %v460 = vld [vmem:[%s434 + $0xa8] sm:$0xff]
      %v461 = vld [vmem:[%s434 + $0xb0] sm:$0xff]
      %v462 = vld [vmem:[%s434 + $0xb8] sm:$0xff]
      %v463 = vld [vmem:[%s434 + $0xc0] sm:$0xff]
      %v464 = vld [vmem:[%s434 + $0xc8] sm:$0xff]
      %v465 = vld [vmem:[%s434 + $0xd0] sm:$0xff]
      %v466 = vld [vmem:[%s434 + $0xd8] sm:$0xff]
      %v467 = vld [vmem:[%s434 + $0xe0] sm:$0xff]
      %v468 = vld [vmem:[%s434 + $0xe8] sm:$0xff]
      %v469 = vld [vmem:[%s434 + $0xf0] sm:$0xff]
      %v470 = vld [vmem:[%s434 + $0xf8] sm:$0xff]
      %v471 = vld [vmem:[%s434 + $0x100] sm:$0xff]
      %v472 = vld [vmem:[%s434 + $0x108] sm:$0xff]
      %v473 = vld [vmem:[%s434 + $0x110] sm:$0xff]
      %v474 = vld [vmem:[%s434 + $0x118] sm:$0xff]
      %v475 = vld [vmem:[%s434 + $0x120] sm:$0xff]
      %v476 = vld [vmem:[%s434 + $0x128] sm:$0xff]
      %v477 = vld [vmem:[%s434 + $0x130] sm:$0xff]
      %v478 = vld [vmem:[%s434 + $0x138] sm:$0xff]
      %v479 = vld [vmem:[%s434 + $0x140] sm:$0xff]
      %v480 = vld [vmem:[%s434 + $0x148] sm:$0xff]
      %v481 = vld [vmem:[%s434 + $0x150] sm:$0xff]
      %v482 = vld [vmem:[%s434 + $0x158] sm:$0xff]
      %v483 = vld [vmem:[%s434 + $0x160] sm:$0xff]
      %v484 = vld [vmem:[%s434 + $0x168] sm:$0xff]
      %v485 = vld [vmem:[%s434 + $0x170] sm:$0xff]
      %v486 = vld [vmem:[%s434 + $0x178] sm:$0xff]
      %v487 = vld [vmem:[%s434 + $0x180] sm:$0xff]
      %v488 = vld [vmem:[%s434 + $0x188] sm:$0xff]
      %v489 = vld [vmem:[%s434 + $0x190] sm:$0xff]
      %v490 = vld [vmem:[%s434 + $0x198] sm:$0xff]
      %v491 = vld [vmem:[%s434 + $0x1a0] sm:$0xff]
      %v492 = vld [vmem:[%s434 + $0x1a8] sm:$0xff]
      %v493 = vld [vmem:[%s434 + $0x1b0] sm:$0xff]
      %v494 = vld [vmem:[%s434 + $0x1b8] sm:$0xff]
      %v495 = vld [vmem:[%s434 + $0x1c0] sm:$0xff]
      %v496 = vld [vmem:[%s434 + $0x1c8] sm:$0xff]
      %v497 = vld [vmem:[%s434 + $0x1d0] sm:$0xff]
      %v498 = vld [vmem:[%s434 + $0x1d8] sm:$0xff]
      %v499 = vld [vmem:[%s434 + $0x1e0] sm:$0xff]
      %v500 = vld [vmem:[%s434 + $0x1e8] sm:$0xff]
      %v501 = vld [vmem:[%s434 + $0x1f0] sm:$0xff]
      %v502 = vld [vmem:[%s434 + $0x1f8] sm:$0xff]
      %v503 = vld [vmem:[%s434 + $0x200] sm:$0xff]
      %v504 = vld [vmem:[%s434 + $0x208] sm:$0xff]
      %v505 = vld [vmem:[%s434 + $0x210] sm:$0xff]
      %v506 = vld [vmem:[%s434 + $0x218] sm:$0xff]
      %v507 = vld [vmem:[%s434 + $0x220] sm:$0xff]
      %v508 = vld [vmem:[%s434 + $0x228] sm:$0xff]
      %v509 = vld [vmem:[%s434 + $0x230] sm:$0xff]
      %v510 = vld [vmem:[%s434 + $0x238] sm:$0xff]
      %v511 = vld [vmem:[%s434 + $0x240] sm:$0xff]
      %v512 = vld [vmem:[%s434 + $0x248] sm:$0xff]
      %v513 = vld [vmem:[%s434 + $0x250] sm:$0xff]
      %v514 = vld [vmem:[%s434 + $0x258] sm:$0xff]
      %v515 = vld [vmem:[%s434 + $0x260] sm:$0xff]
      %v516 = vld [vmem:[%s434 + $0x268] sm:$0xff]
      %v517 = vld [vmem:[%s434 + $0x270] sm:$0xff]
      %v518 = vld [vmem:[%s434 + $0x278] sm:$0xff]
      %v519 = vld [vmem:[%s434 + $0x280] sm:$0xff]
      %v520 = vld [vmem:[%s434 + $0x288] sm:$0xff]
      %v521 = vld [vmem:[%s434 + $0x290] sm:$0xff]
      %v522 = vld [vmem:[%s434 + $0x298] sm:$0xff]
      %v523 = vld [vmem:[%s434 + $0x2a0] sm:$0xff]
      %v524 = vld [vmem:[%s434 + $0x2a8] sm:$0xff]
      %v525 = vld [vmem:[%s434 + $0x2b0] sm:$0xff]
      %v526 = vld [vmem:[%s434 + $0x2b8] sm:$0xff]
      %v527 = vld [vmem:[%s434 + $0x2c0] sm:$0xff]
      %v528 = vld [vmem:[%s434 + $0x2c8] sm:$0xff]
      %v529 = vld [vmem:[%s434 + $0x2d0] sm:$0xff]
      %v530 = vld [vmem:[%s434 + $0x2d8] sm:$0xff]
      %v531 = vld [vmem:[%s434 + $0x2e0] sm:$0xff]
      %v532 = vld [vmem:[%s434 + $0x2e8] sm:$0xff]
      %v533 = vld [vmem:[%s434 + $0x2f0] sm:$0xff]
      %v534 = vld [vmem:[%s434 + $0x2f8] sm:$0xff]
      %v535 = vld [vmem:[%s434 + $0x300] sm:$0xff]
      %v536 = vld [vmem:[%s434 + $0x308] sm:$0xff]
      %v537 = vld [vmem:[%s434 + $0x310] sm:$0xff]
      %v538 = vld [vmem:[%s434 + $0x318] sm:$0xff]
      %v539 = vld [vmem:[%s434 + $0x320] sm:$0xff]
      %v540 = vld [vmem:[%s434 + $0x328] sm:$0xff]
      %v541 = vld [vmem:[%s434 + $0x330] sm:$0xff]
      %v542 = vld [vmem:[%s434 + $0x338] sm:$0xff]
      %v543 = vld [vmem:[%s434 + $0x340] sm:$0xff]
      %v544 = vld [vmem:[%s434 + $0x348] sm:$0xff]
      %v545 = vld [vmem:[%s434 + $0x350] sm:$0xff]
      %v546 = vld [vmem:[%s434 + $0x358] sm:$0xff]
      %v547 = vld [vmem:[%s434 + $0x360] sm:$0xff]
      %v548 = vld [vmem:[%s434 + $0x368] sm:$0xff]
      %v549 = vld [vmem:[%s434 + $0x370] sm:$0xff]
      %v550 = vld [vmem:[%s434 + $0x378] sm:$0xff]
      %v551 = vld [vmem:[%s1] sm:$0xf]
      %v552 = vld [vmem:[%s1 + $0x4] sm:$0x3]
      %v553 = vunpack.c.l.bf16 %v551
      %v554 = vunpack.c.l.bf16 %v552
      %vm555 = vcmask 97280
      %v557 = vsel %vm555, %v439, 0
      %v560 = vsel %vm555, %v440, 0
      %v563 = vsel %vm555, %v441, 0
      %v566 = vsel %vm555, %v442, 0
      %v569 = vsel %vm555, %v443, 0
      %v572 = vsel %vm555, %v444, 0
      %v575 = vsel %vm555, %v445, 0
      %v578 = vsel %vm555, %v446, 0
      %v581 = vsel %vm555, %v447, 0
      %v584 = vsel %vm555, %v448, 0
      %v587 = vsel %vm555, %v449, 0
      %v590 = vsel %vm555, %v450, 0
      %v593 = vsel %vm555, %v451, 0
      %v596 = vsel %vm555, %v452, 0
      %v599 = vsel %vm555, %v453, 0
      %v602 = vsel %vm555, %v454, 0
      %v605 = vsel %vm555, %v455, 0
      %v608 = vsel %vm555, %v456, 0
      %v611 = vsel %vm555, %v457, 0
      %v614 = vsel %vm555, %v458, 0
      %v617 = vsel %vm555, %v459, 0
      %v620 = vsel %vm555, %v460, 0
      %v623 = vsel %vm555, %v461, 0
      %v626 = vsel %vm555, %v462, 0
      %v629 = vsel %vm555, %v463, 0
      %v632 = vsel %vm555, %v464, 0
      %v635 = vsel %vm555, %v465, 0
      %v638 = vsel %vm555, %v466, 0
      %v641 = vsel %vm555, %v467, 0
      %v644 = vsel %vm555, %v468, 0
      %v647 = vsel %vm555, %v469, 0
      %v650 = vsel %vm555, %v470, 0
      %v653 = vsel %vm555, %v471, 0
      %v656 = vsel %vm555, %v472, 0
      %v659 = vsel %vm555, %v473, 0
      %v662 = vsel %vm555, %v474, 0
      %v665 = vsel %vm555, %v475, 0
      %v668 = vsel %vm555, %v476, 0
      %v671 = vsel %vm555, %v477, 0
      %v674 = vsel %vm555, %v478, 0
      %v677 = vsel %vm555, %v479, 0
      %v680 = vsel %vm555, %v480, 0
      %v683 = vsel %vm555, %v481, 0
      %v686 = vsel %vm555, %v482, 0
      %v689 = vsel %vm555, %v483, 0
      %v692 = vsel %vm555, %v484, 0
      %v695 = vsel %vm555, %v485, 0
      %v698 = vsel %vm555, %v486, 0
      %v701 = vsel %vm555, %v487, 0
      %v704 = vsel %vm555, %v488, 0
      %v707 = vsel %vm555, %v489, 0
      %v710 = vsel %vm555, %v490, 0
      %v713 = vsel %vm555, %v491, 0
      %v716 = vsel %vm555, %v492, 0
      %v719 = vsel %vm555, %v493, 0
      %v722 = vsel %vm555, %v494, 0
      %v725 = vsel %vm555, %v495, 0
      %v728 = vsel %vm555, %v496, 0
      %v731 = vsel %vm555, %v497, 0
      %v734 = vsel %vm555, %v498, 0
      %v737 = vsel %vm555, %v499, 0
      %v740 = vsel %vm555, %v500, 0
      %v743 = vsel %vm555, %v501, 0
      %v746 = vsel %vm555, %v502, 0
      %v749 = vsel %vm555, %v503, 0
      %v752 = vsel %vm555, %v504, 0
      %v755 = vsel %vm555, %v505, 0
      %v758 = vsel %vm555, %v506, 0
      %v761 = vsel %vm555, %v507, 0
      %v764 = vsel %vm555, %v508, 0
      %v767 = vsel %vm555, %v509, 0
      %v770 = vsel %vm555, %v510, 0
      %v773 = vsel %vm555, %v511, 0
      %v776 = vsel %vm555, %v512, 0
      %v779 = vsel %vm555, %v513, 0
      %v782 = vsel %vm555, %v514, 0
      %v785 = vsel %vm555, %v515, 0
      %v788 = vsel %vm555, %v516, 0
      %v791 = vsel %vm555, %v517, 0
      %v794 = vsel %vm555, %v518, 0
      %v797 = vsel %vm555, %v519, 0
      %v800 = vsel %vm555, %v520, 0
      %v803 = vsel %vm555, %v521, 0
      %v806 = vsel %vm555, %v522, 0
      %v809 = vsel %vm555, %v523, 0
      %v812 = vsel %vm555, %v524, 0
      %v815 = vsel %vm555, %v525, 0
      %v818 = vsel %vm555, %v526, 0
      %v821 = vsel %vm555, %v527, 0
      %v824 = vsel %vm555, %v528, 0
      %v827 = vsel %vm555, %v529, 0
      %v830 = vsel %vm555, %v530, 0
      %v833 = vsel %vm555, %v531, 0
      %v836 = vsel %vm555, %v532, 0
      %v839 = vsel %vm555, %v533, 0
      %v842 = vsel %vm555, %v534, 0
      %v845 = vsel %vm555, %v535, 0
      %v848 = vsel %vm555, %v536, 0
      %v851 = vsel %vm555, %v537, 0
      %v854 = vsel %vm555, %v538, 0
      %v857 = vsel %vm555, %v539, 0
      %v860 = vsel %vm555, %v540, 0
      %v863 = vsel %vm555, %v541, 0
      %v866 = vsel %vm555, %v542, 0
      %v869 = vsel %vm555, %v543, 0
      %v872 = vsel %vm555, %v544, 0
      %v875 = vsel %vm555, %v545, 0
      %v878 = vsel %vm555, %v546, 0
      %v881 = vsel %vm555, %v547, 0
      %v884 = vsel %vm555, %v548, 0
      %v887 = vsel %vm555, %v549, 0
      %v890 = vsel %vm555, %v550, 0
      %vm892 = vcmask 1043456
      %v894 = vsel %vm892, %v554, 0
      %896 = vmatprep.subr.mxu0 0.0
      %897 = vmatpush1.msra.mxu0 0.0
      %898 = vmatprep.subr.mxu0 0.0
      %899 = vmatpush1.msra.mxu0 0.0
      %900 = vmatprep.subr.mxu0 0.0
      %901 = vmatpush1.msra.mxu0 0.0
      %902 = vmatprep.subr.mxu0 0.0
      %903 = vmatpush1.msra.mxu0 0.0
      %904 = vmatprep.subr.mxu0 0.0
      %905 = vmatpush1.msra.mxu0 0.0
      %906 = vmatprep.subr.mxu0 0.0
      %907 = vmatpush1.msra.mxu0 0.0
      %908 = vmatprep.subr.mxu0 0.0
      %909 = vmatpush1.msra.mxu0 0.0
      %910 = vmatprep.subr.mxu0 0.0
      %911 = vmatpush1.msra.mxu0 0.0
      %912 = vmatprep.subr.mxu0 0.0
      %913 = vmatpush1.msra.mxu0 0.0
      %914 = vmatprep.subr.mxu0 0.0
      %915 = vmatpush1.msra.mxu0 0.0
      %916 = vmatprep.subr.mxu0 0.0
      %917 = vmatpush1.msra.mxu0 0.0
      %918 = vmatprep.subr.mxu0 0.0
      %919 = vmatpush1.msra.mxu0 0.0
      %920 = vmatprep.subr.mxu0 0.0
      %921 = vmatpush1.msra.mxu0 0.0
      %922 = vmatprep.subr.mxu0 0.0
      %923 = vmatpush1.msra.mxu0 0.0
      %924 = vmatprep.subr.mxu0 0.0
      %925 = vmatpush1.msra.mxu0 %v894
      %926 = vmatprep.subr.mxu0 0.0
      %927 = vmatpush1.msra.mxu0 %v553
      %928 = vmatprep.subr.mxu0 0.0
      %929 = vmatpush2.msra.mxu0 0.0
      %930 = vmatprep.subr.mxu0 0.0
      %931 = vmatpush2.msra.mxu0 0.0
      %932 = vmatprep.subr.mxu0 0.0
      %933 = vmatpush2.msra.mxu0 0.0
      %934 = vmatprep.subr.mxu0 0.0
      %935 = vmatpush2.msra.mxu0 0.0
      %936 = vmatprep.subr.mxu0 0.0
      %937 = vmatpush2.msra.mxu0 0.0
      %938 = vmatprep.subr.mxu0 0.0
      %939 = vmatpush2.msra.mxu0 0.0
      %940 = vmatprep.subr.mxu0 0.0
      %941 = vmatpush2.msra.mxu0 0.0
      %942 = vmatprep.subr.mxu0 0.0
      %943 = vmatpush2.msra.mxu0 0.0
      %944 = vmatprep.subr.mxu0 0.0
      %945 = vmatpush2.msra.mxu0 0.0
      %946 = vmatprep.subr.mxu0 0.0
      %947 = vmatpush2.msra.mxu0 0.0
      %948 = vmatprep.subr.mxu0 0.0
      %949 = vmatpush2.msra.mxu0 0.0
      %950 = vmatprep.subr.mxu0 0.0
      %951 = vmatpush2.msra.mxu0 0.0
      %952 = vmatprep.subr.mxu0 0.0
      %953 = vmatpush2.msra.mxu0 0.0
      %954 = vmatprep.subr.mxu0 0.0
      %955 = vmatpush2.msra.mxu0 0.0
      %956 = vmatprep.subr.mxu0 0.0
      %957 = vmatpush2.msra.mxu0 0.0
      %958 = vmatprep.subr.mxu0 0.0
      %959 = vmatpush2.msra.mxu0 0.0
      %960 = vmatprep.mubr.f32.mxu0 0.0
      %961 = vmatmul.mubr.f32.gmra.mxu0 %v557
      %v962 = vpop.f32.mrf.mxu0
      %v963 = vadd.f32 0.0, %v962
      %v964 = vpop.f32.mrf.mxu0
      %965 = vmatprep.mubr.f32.mxu0 0.0
      %966 = vmatmul.mubr.f32.gmra.mxu0 %v560
      %v967 = vpop.f32.mrf.mxu0
      %v968 = vadd.f32 0.0, %v967
      %v969 = vpop.f32.mrf.mxu0
      %970 = vmatprep.mubr.f32.mxu0 0.0
      %971 = vmatmul.mubr.f32.gmra.mxu0 %v563
      %v972 = vpop.f32.mrf.mxu0
      %v973 = vadd.f32 0.0, %v972
      %v974 = vpop.f32.mrf.mxu0
      %975 = vmatprep.mubr.f32.mxu0 0.0
      %976 = vmatmul.mubr.f32.gmra.mxu0 %v566
      %v977 = vpop.f32.mrf.mxu0
      %v978 = vadd.f32 0.0, %v977
      %v979 = vpop.f32.mrf.mxu0
      %980 = vmatprep.mubr.f32.mxu0 0.0
      %981 = vmatmul.mubr.f32.gmra.mxu0 %v569
      %v982 = vpop.f32.mrf.mxu0
      %v983 = vadd.f32 0.0, %v982
      %v984 = vpop.f32.mrf.mxu0
      %985 = vmatprep.mubr.f32.mxu0 0.0
      %986 = vmatmul.mubr.f32.gmra.mxu0 %v572
      %v987 = vpop.f32.mrf.mxu0
      %v988 = vadd.f32 0.0, %v987
      %v989 = vpop.f32.mrf.mxu0
      %990 = vmatprep.mubr.f32.mxu0 0.0
      %991 = vmatmul.mubr.f32.gmra.mxu0 %v575
      %v992 = vpop.f32.mrf.mxu0
      %v993 = vadd.f32 0.0, %v992
      %v994 = vpop.f32.mrf.mxu0
      %995 = vmatprep.mubr.f32.mxu0 0.0
      %996 = vmatmul.mubr.f32.gmra.mxu0 %v578
      %v997 = vpop.f32.mrf.mxu0
      %v998 = vadd.f32 0.0, %v997
      %v999 = vpop.f32.mrf.mxu0
      %1000 = vmatprep.mubr.f32.mxu0 0.0
      %1001 = vmatmul.mubr.f32.gmra.mxu0 %v581
      %v1002 = vpop.f32.mrf.mxu0
      %v1003 = vadd.f32 0.0, %v1002
      %v1004 = vpop.f32.mrf.mxu0
      %1005 = vmatprep.mubr.f32.mxu0 0.0
      %1006 = vmatmul.mubr.f32.gmra.mxu0 %v584
      %v1007 = vpop.f32.mrf.mxu0
      %v1008 = vadd.f32 0.0, %v1007
      %v1009 = vpop.f32.mrf.mxu0
      %1010 = vmatprep.mubr.f32.mxu0 0.0
      %1011 = vmatmul.mubr.f32.gmra.mxu0 %v587
      %v1012 = vpop.f32.mrf.mxu0
      %v1013 = vadd.f32 0.0, %v1012
      %v1014 = vpop.f32.mrf.mxu0
      %1015 = vmatprep.mubr.f32.mxu0 0.0
      %1016 = vmatmul.mubr.f32.gmra.mxu0 %v590
      %v1017 = vpop.f32.mrf.mxu0
      %v1018 = vadd.f32 0.0, %v1017
      %v1019 = vpop.f32.mrf.mxu0
      %1020 = vmatprep.mubr.f32.mxu0 0.0
      %1021 = vmatmul.mubr.f32.gmra.mxu0 %v593
      %v1022 = vpop.f32.mrf.mxu0
      %v1023 = vadd.f32 0.0, %v1022
      %v1024 = vpop.f32.mrf.mxu0
      %1025 = vmatprep.mubr.f32.mxu0 0.0
      %1026 = vmatmul.mubr.f32.gmra.mxu0 %v596
      %v1027 = vpop.f32.mrf.mxu0
      %v1028 = vadd.f32 0.0, %v1027
      %v1029 = vpop.f32.mrf.mxu0
      %1030 = vmatprep.mubr.f32.mxu0 0.0
      %1031 = vmatmul.mubr.f32.gmra.mxu0 %v599
      %v1032 = vpop.f32.mrf.mxu0
      %v1033 = vadd.f32 0.0, %v1032
      %v1034 = vpop.f32.mrf.mxu0
      %1035 = vmatprep.mubr.f32.mxu0 0.0
      %1036 = vmatmul.mubr.f32.gmra.mxu0 %v602
      %v1037 = vpop.f32.mrf.mxu0
      %v1038 = vadd.f32 0.0, %v1037
      %v1039 = vpop.f32.mrf.mxu0
      %1040 = vmatprep.mubr.f32.mxu0 0.0
      %1041 = vmatmul.mubr.f32.gmra.mxu0 %v605
      %v1042 = vpop.f32.mrf.mxu0
      %v1043 = vadd.f32 0.0, %v1042
      %v1044 = vpop.f32.mrf.mxu0
      %1045 = vmatprep.mubr.f32.mxu0 0.0
      %1046 = vmatmul.mubr.f32.gmra.mxu0 %v608
      %v1047 = vpop.f32.mrf.mxu0
      %v1048 = vadd.f32 0.0, %v1047
      %v1049 = vpop.f32.mrf.mxu0
      %1050 = vmatprep.mubr.f32.mxu0 0.0
      %1051 = vmatmul.mubr.f32.gmra.mxu0 %v611
      %v1052 = vpop.f32.mrf.mxu0
      %v1053 = vadd.f32 0.0, %v1052
      %v1054 = vpop.f32.mrf.mxu0
      %1055 = vmatprep.mubr.f32.mxu0 0.0
      %1056 = vmatmul.mubr.f32.gmra.mxu0 %v614
      %v1057 = vpop.f32.mrf.mxu0
      %v1058 = vadd.f32 0.0, %v1057
      %v1059 = vpop.f32.mrf.mxu0
      %1060 = vmatprep.mubr.f32.mxu0 0.0
      %1061 = vmatmul.mubr.f32.gmra.mxu0 %v617
      %v1062 = vpop.f32.mrf.mxu0
      %v1063 = vadd.f32 0.0, %v1062
      %v1064 = vpop.f32.mrf.mxu0
      %1065 = vmatprep.mubr.f32.mxu0 0.0
      %1066 = vmatmul.mubr.f32.gmra.mxu0 %v620
      %v1067 = vpop.f32.mrf.mxu0
      %v1068 = vadd.f32 0.0, %v1067
      %v1069 = vpop.f32.mrf.mxu0
      %1070 = vmatprep.mubr.f32.mxu0 0.0
      %1071 = vmatmul.mubr.f32.gmra.mxu0 %v623
      %v1072 = vpop.f32.mrf.mxu0
      %v1073 = vadd.f32 0.0, %v1072
      %v1074 = vpop.f32.mrf.mxu0
      %1075 = vmatprep.mubr.f32.mxu0 0.0
      %1076 = vmatmul.mubr.f32.gmra.mxu0 %v626
      %v1077 = vpop.f32.mrf.mxu0
      %v1078 = vadd.f32 0.0, %v1077
      %v1079 = vpop.f32.mrf.mxu0
      %1080 = vmatprep.mubr.f32.mxu0 0.0
      %1081 = vmatmul.mubr.f32.gmra.mxu0 %v629
      %v1082 = vpop.f32.mrf.mxu0
      %v1083 = vadd.f32 0.0, %v1082
      %v1084 = vpop.f32.mrf.mxu0
      %1085 = vmatprep.mubr.f32.mxu0 0.0
      %1086 = vmatmul.mubr.f32.gmra.mxu0 %v632
      %v1087 = vpop.f32.mrf.mxu0
      %v1088 = vadd.f32 0.0, %v1087
      %v1089 = vpop.f32.mrf.mxu0
      %1090 = vmatprep.mubr.f32.mxu0 0.0
      %1091 = vmatmul.mubr.f32.gmra.mxu0 %v635
      %v1092 = vpop.f32.mrf.mxu0
      %v1093 = vadd.f32 0.0, %v1092
      %v1094 = vpop.f32.mrf.mxu0
      %1095 = vmatprep.mubr.f32.mxu0 0.0
      %1096 = vmatmul.mubr.f32.gmra.mxu0 %v638
      %v1097 = vpop.f32.mrf.mxu0
      %v1098 = vadd.f32 0.0, %v1097
      %v1099 = vpop.f32.mrf.mxu0
      %1100 = vmatprep.mubr.f32.mxu0 0.0
      %1101 = vmatmul.mubr.f32.gmra.mxu0 %v641
      %v1102 = vpop.f32.mrf.mxu0
      %v1103 = vadd.f32 0.0, %v1102
      %v1104 = vpop.f32.mrf.mxu0
      %1105 = vmatprep.mubr.f32.mxu0 0.0
      %1106 = vmatmul.mubr.f32.gmra.mxu0 %v644
      %v1107 = vpop.f32.mrf.mxu0
      %v1108 = vadd.f32 0.0, %v1107
      %v1109 = vpop.f32.mrf.mxu0
      %1110 = vmatprep.mubr.f32.mxu0 0.0
      %1111 = vmatmul.mubr.f32.gmra.mxu0 %v647
      %v1112 = vpop.f32.mrf.mxu0
      %v1113 = vadd.f32 0.0, %v1112
      %v1114 = vpop.f32.mrf.mxu0
      %1115 = vmatprep.mubr.f32.mxu0 0.0
      %1116 = vmatmul.mubr.f32.gmra.mxu0 %v650
      %v1117 = vpop.f32.mrf.mxu0
      %v1118 = vadd.f32 0.0, %v1117
      %v1119 = vpop.f32.mrf.mxu0
      %1120 = vmatprep.mubr.f32.mxu0 0.0
      %1121 = vmatmul.mubr.f32.gmra.mxu0 %v653
      %v1122 = vpop.f32.mrf.mxu0
      %v1123 = vadd.f32 0.0, %v1122
      %v1124 = vpop.f32.mrf.mxu0
      %1125 = vmatprep.mubr.f32.mxu0 0.0
      %1126 = vmatmul.mubr.f32.gmra.mxu0 %v656
      %v1127 = vpop.f32.mrf.mxu0
      %v1128 = vadd.f32 0.0, %v1127
      %v1129 = vpop.f32.mrf.mxu0
      %1130 = vmatprep.mubr.f32.mxu0 0.0
      %1131 = vmatmul.mubr.f32.gmra.mxu0 %v659
      %v1132 = vpop.f32.mrf.mxu0
      %v1133 = vadd.f32 0.0, %v1132
      %v1134 = vpop.f32.mrf.mxu0
      %1135 = vmatprep.mubr.f32.mxu0 0.0
      %1136 = vmatmul.mubr.f32.gmra.mxu0 %v662
      %v1137 = vpop.f32.mrf.mxu0
      %v1138 = vadd.f32 0.0, %v1137
      %v1139 = vpop.f32.mrf.mxu0
      %1140 = vmatprep.mubr.f32.mxu0 0.0
      %1141 = vmatmul.mubr.f32.gmra.mxu0 %v665
      %v1142 = vpop.f32.mrf.mxu0
      %v1143 = vadd.f32 0.0, %v1142
      %v1144 = vpop.f32.mrf.mxu0
      %1145 = vmatprep.mubr.f32.mxu0 0.0
      %1146 = vmatmul.mubr.f32.gmra.mxu0 %v668
      %v1147 = vpop.f32.mrf.mxu0
      %v1148 = vadd.f32 0.0, %v1147
      %v1149 = vpop.f32.mrf.mxu0
      %1150 = vmatprep.mubr.f32.mxu0 0.0
      %1151 = vmatmul.mubr.f32.gmra.mxu0 %v671
      %v1152 = vpop.f32.mrf.mxu0
      %v1153 = vadd.f32 0.0, %v1152
      %v1154 = vpop.f32.mrf.mxu0
      %1155 = vmatprep.mubr.f32.mxu0 0.0
      %1156 = vmatmul.mubr.f32.gmra.mxu0 %v674
      %v1157 = vpop.f32.mrf.mxu0
      %v1158 = vadd.f32 0.0, %v1157
      %v1159 = vpop.f32.mrf.mxu0
      %1160 = vmatprep.mubr.f32.mxu0 0.0
      %1161 = vmatmul.mubr.f32.gmra.mxu0 %v677
      %v1162 = vpop.f32.mrf.mxu0
      %v1163 = vadd.f32 0.0, %v1162
      %v1164 = vpop.f32.mrf.mxu0
      %1165 = vmatprep.mubr.f32.mxu0 0.0
      %1166 = vmatmul.mubr.f32.gmra.mxu0 %v680
      %v1167 = vpop.f32.mrf.mxu0
      %v1168 = vadd.f32 0.0, %v1167
      %v1169 = vpop.f32.mrf.mxu0
      %1170 = vmatprep.mubr.f32.mxu0 0.0
      %1171 = vmatmul.mubr.f32.gmra.mxu0 %v683
      %v1172 = vpop.f32.mrf.mxu0
      %v1173 = vadd.f32 0.0, %v1172
      %v1174 = vpop.f32.mrf.mxu0
      %1175 = vmatprep.mubr.f32.mxu0 0.0
      %1176 = vmatmul.mubr.f32.gmra.mxu0 %v686
      %v1177 = vpop.f32.mrf.mxu0
      %v1178 = vadd.f32 0.0, %v1177
      %v1179 = vpop.f32.mrf.mxu0
      %1180 = vmatprep.mubr.f32.mxu0 0.0
      %1181 = vmatmul.mubr.f32.gmra.mxu0 %v689
      %v1182 = vpop.f32.mrf.mxu0
      %v1183 = vadd.f32 0.0, %v1182
      %v1184 = vpop.f32.mrf.mxu0
      %1185 = vmatprep.mubr.f32.mxu0 0.0
      %1186 = vmatmul.mubr.f32.gmra.mxu0 %v692
      %v1187 = vpop.f32.mrf.mxu0
      %v1188 = vadd.f32 0.0, %v1187
      %v1189 = vpop.f32.mrf.mxu0
      %1190 = vmatprep.mubr.f32.mxu0 0.0
      %1191 = vmatmul.mubr.f32.gmra.mxu0 %v695
      %v1192 = vpop.f32.mrf.mxu0
      %v1193 = vadd.f32 0.0, %v1192
      %v1194 = vpop.f32.mrf.mxu0
      %1195 = vmatprep.mubr.f32.mxu0 0.0
      %1196 = vmatmul.mubr.f32.gmra.mxu0 %v698
      %v1197 = vpop.f32.mrf.mxu0
      %v1198 = vadd.f32 0.0, %v1197
      %v1199 = vpop.f32.mrf.mxu0
      %1200 = vmatprep.mubr.f32.mxu0 0.0
      %1201 = vmatmul.mubr.f32.gmra.mxu0 %v701
      %v1202 = vpop.f32.mrf.mxu0
      %v1203 = vadd.f32 0.0, %v1202
      %v1204 = vpop.f32.mrf.mxu0
      %1205 = vmatprep.mubr.f32.mxu0 0.0
      %1206 = vmatmul.mubr.f32.gmra.mxu0 %v704
      %v1207 = vpop.f32.mrf.mxu0
      %v1208 = vadd.f32 0.0, %v1207
      %v1209 = vpop.f32.mrf.mxu0
      %1210 = vmatprep.mubr.f32.mxu0 0.0
      %1211 = vmatmul.mubr.f32.gmra.mxu0 %v707
      %v1212 = vpop.f32.mrf.mxu0
      %v1213 = vadd.f32 0.0, %v1212
      %v1214 = vpop.f32.mrf.mxu0
      %1215 = vmatprep.mubr.f32.mxu0 0.0
      %1216 = vmatmul.mubr.f32.gmra.mxu0 %v710
      %v1217 = vpop.f32.mrf.mxu0
      %v1218 = vadd.f32 0.0, %v1217
      %v1219 = vpop.f32.mrf.mxu0
      %1220 = vmatprep.mubr.f32.mxu0 0.0
      %1221 = vmatmul.mubr.f32.gmra.mxu0 %v713
      %v1222 = vpop.f32.mrf.mxu0
      %v1223 = vadd.f32 0.0, %v1222
      %v1224 = vpop.f32.mrf.mxu0
      %1225 = vmatprep.mubr.f32.mxu0 0.0
      %1226 = vmatmul.mubr.f32.gmra.mxu0 %v716
      %v1227 = vpop.f32.mrf.mxu0
      %v1228 = vadd.f32 0.0, %v1227
      %v1229 = vpop.f32.mrf.mxu0
      %1230 = vmatprep.mubr.f32.mxu0 0.0
      %1231 = vmatmul.mubr.f32.gmra.mxu0 %v719
      %v1232 = vpop.f32.mrf.mxu0
      %v1233 = vadd.f32 0.0, %v1232
      %v1234 = vpop.f32.mrf.mxu0
      %1235 = vmatprep.mubr.f32.mxu0 0.0
      %1236 = vmatmul.mubr.f32.gmra.mxu0 %v722
      %v1237 = vpop.f32.mrf.mxu0
      %v1238 = vadd.f32 0.0, %v1237
      %v1239 = vpop.f32.mrf.mxu0
      %1240 = vmatprep.mubr.f32.mxu0 0.0
      %1241 = vmatmul.mubr.f32.gmra.mxu0 %v725
      %v1242 = vpop.f32.mrf.mxu0
      %v1243 = vadd.f32 0.0, %v1242
      %v1244 = vpop.f32.mrf.mxu0
      %1245 = vmatprep.mubr.f32.mxu0 0.0
      %1246 = vmatmul.mubr.f32.gmra.mxu0 %v728
      %v1247 = vpop.f32.mrf.mxu0
      %v1248 = vadd.f32 0.0, %v1247
      %v1249 = vpop.f32.mrf.mxu0
      %1250 = vmatprep.mubr.f32.mxu0 0.0
      %1251 = vmatmul.mubr.f32.gmra.mxu0 %v731
      %v1252 = vpop.f32.mrf.mxu0
      %v1253 = vadd.f32 0.0, %v1252
      %v1254 = vpop.f32.mrf.mxu0
      %1255 = vmatprep.mubr.f32.mxu0 0.0
      %1256 = vmatmul.mubr.f32.gmra.mxu0 %v734
      %v1257 = vpop.f32.mrf.mxu0
      %v1258 = vadd.f32 0.0, %v1257
      %v1259 = vpop.f32.mrf.mxu0
      %1260 = vmatprep.mubr.f32.mxu0 0.0
      %1261 = vmatmul.mubr.f32.gmra.mxu0 %v737
      %v1262 = vpop.f32.mrf.mxu0
      %v1263 = vadd.f32 0.0, %v1262
      %v1264 = vpop.f32.mrf.mxu0
      %1265 = vmatprep.mubr.f32.mxu0 0.0
      %1266 = vmatmul.mubr.f32.gmra.mxu0 %v740
      %v1267 = vpop.f32.mrf.mxu0
      %v1268 = vadd.f32 0.0, %v1267
      %v1269 = vpop.f32.mrf.mxu0
      %1270 = vmatprep.mubr.f32.mxu0 0.0
      %1271 = vmatmul.mubr.f32.gmra.mxu0 %v743
      %v1272 = vpop.f32.mrf.mxu0
      %v1273 = vadd.f32 0.0, %v1272
      %v1274 = vpop.f32.mrf.mxu0
      %1275 = vmatprep.mubr.f32.mxu0 0.0
      %1276 = vmatmul.mubr.f32.gmra.mxu0 %v746
      %v1277 = vpop.f32.mrf.mxu0
      %v1278 = vadd.f32 0.0, %v1277
      %v1279 = vpop.f32.mrf.mxu0
      %1280 = vmatprep.mubr.f32.mxu0 0.0
      %1281 = vmatmul.mubr.f32.gmra.mxu0 %v749
      %v1282 = vpop.f32.mrf.mxu0
      %v1283 = vadd.f32 0.0, %v1282
      %v1284 = vpop.f32.mrf.mxu0
      %1285 = vmatprep.mubr.f32.mxu0 0.0
      %1286 = vmatmul.mubr.f32.gmra.mxu0 %v752
      %v1287 = vpop.f32.mrf.mxu0
      %v1288 = vadd.f32 0.0, %v1287
      %v1289 = vpop.f32.mrf.mxu0
      %1290 = vmatprep.mubr.f32.mxu0 0.0
      %1291 = vmatmul.mubr.f32.gmra.mxu0 %v755
      %v1292 = vpop.f32.mrf.mxu0
      %v1293 = vadd.f32 0.0, %v1292
      %v1294 = vpop.f32.mrf.mxu0
      %1295 = vmatprep.mubr.f32.mxu0 0.0
      %1296 = vmatmul.mubr.f32.gmra.mxu0 %v758
      %v1297 = vpop.f32.mrf.mxu0
      %v1298 = vadd.f32 0.0, %v1297
      %v1299 = vpop.f32.mrf.mxu0
      %1300 = vmatprep.mubr.f32.mxu0 0.0
      %1301 = vmatmul.mubr.f32.gmra.mxu0 %v761
      %v1302 = vpop.f32.mrf.mxu0
      %v1303 = vadd.f32 0.0, %v1302
      %v1304 = vpop.f32.mrf.mxu0
      %1305 = vmatprep.mubr.f32.mxu0 0.0
      %1306 = vmatmul.mubr.f32.gmra.mxu0 %v764
      %v1307 = vpop.f32.mrf.mxu0
      %v1308 = vadd.f32 0.0, %v1307
      %v1309 = vpop.f32.mrf.mxu0
      %1310 = vmatprep.mubr.f32.mxu0 0.0
      %1311 = vmatmul.mubr.f32.gmra.mxu0 %v767
      %v1312 = vpop.f32.mrf.mxu0
      %v1313 = vadd.f32 0.0, %v1312
      %v1314 = vpop.f32.mrf.mxu0
      %1315 = vmatprep.mubr.f32.mxu0 0.0
      %1316 = vmatmul.mubr.f32.gmra.mxu0 %v770
      %v1317 = vpop.f32.mrf.mxu0
      %v1318 = vadd.f32 0.0, %v1317
      %v1319 = vpop.f32.mrf.mxu0
      %1320 = vmatprep.mubr.f32.mxu0 0.0
      %1321 = vmatmul.mubr.f32.gmra.mxu0 %v773
      %v1322 = vpop.f32.mrf.mxu0
      %v1323 = vadd.f32 0.0, %v1322
      %v1324 = vpop.f32.mrf.mxu0
      %1325 = vmatprep.mubr.f32.mxu0 0.0
      %1326 = vmatmul.mubr.f32.gmra.mxu0 %v776
      %v1327 = vpop.f32.mrf.mxu0
      %v1328 = vadd.f32 0.0, %v1327
      %v1329 = vpop.f32.mrf.mxu0
      %1330 = vmatprep.mubr.f32.mxu0 0.0
      %1331 = vmatmul.mubr.f32.gmra.mxu0 %v779
      %v1332 = vpop.f32.mrf.mxu0
      %v1333 = vadd.f32 0.0, %v1332
      %v1334 = vpop.f32.mrf.mxu0
      %1335 = vmatprep.mubr.f32.mxu0 0.0
      %1336 = vmatmul.mubr.f32.gmra.mxu0 %v782
      %v1337 = vpop.f32.mrf.mxu0
      %v1338 = vadd.f32 0.0, %v1337
      %v1339 = vpop.f32.mrf.mxu0
      %1340 = vmatprep.mubr.f32.mxu0 0.0
      %1341 = vmatmul.mubr.f32.gmra.mxu0 %v785
      %v1342 = vpop.f32.mrf.mxu0
      %v1343 = vadd.f32 0.0, %v1342
      %v1344 = vpop.f32.mrf.mxu0
      %1345 = vmatprep.mubr.f32.mxu0 0.0
      %1346 = vmatmul.mubr.f32.gmra.mxu0 %v788
      %v1347 = vpop.f32.mrf.mxu0
      %v1348 = vadd.f32 0.0, %v1347
      %v1349 = vpop.f32.mrf.mxu0
      %1350 = vmatprep.mubr.f32.mxu0 0.0
      %1351 = vmatmul.mubr.f32.gmra.mxu0 %v791
      %v1352 = vpop.f32.mrf.mxu0
      %v1353 = vadd.f32 0.0, %v1352
      %v1354 = vpop.f32.mrf.mxu0
      %1355 = vmatprep.mubr.f32.mxu0 0.0
      %1356 = vmatmul.mubr.f32.gmra.mxu0 %v794
      %v1357 = vpop.f32.mrf.mxu0
      %v1358 = vadd.f32 0.0, %v1357
      %v1359 = vpop.f32.mrf.mxu0
      %1360 = vmatprep.mubr.f32.mxu0 0.0
      %1361 = vmatmul.mubr.f32.gmra.mxu0 %v797
      %v1362 = vpop.f32.mrf.mxu0
      %v1363 = vadd.f32 0.0, %v1362
      %v1364 = vpop.f32.mrf.mxu0
      %1365 = vmatprep.mubr.f32.mxu0 0.0
      %1366 = vmatmul.mubr.f32.gmra.mxu0 %v800
      %v1367 = vpop.f32.mrf.mxu0
      %v1368 = vadd.f32 0.0, %v1367
      %v1369 = vpop.f32.mrf.mxu0
      %1370 = vmatprep.mubr.f32.mxu0 0.0
      %1371 = vmatmul.mubr.f32.gmra.mxu0 %v803
      %v1372 = vpop.f32.mrf.mxu0
      %v1373 = vadd.f32 0.0, %v1372
      %v1374 = vpop.f32.mrf.mxu0
      %1375 = vmatprep.mubr.f32.mxu0 0.0
      %1376 = vmatmul.mubr.f32.gmra.mxu0 %v806
      %v1377 = vpop.f32.mrf.mxu0
      %v1378 = vadd.f32 0.0, %v1377
      %v1379 = vpop.f32.mrf.mxu0
      %1380 = vmatprep.mubr.f32.mxu0 0.0
      %1381 = vmatmul.mubr.f32.gmra.mxu0 %v809
      %v1382 = vpop.f32.mrf.mxu0
      %v1383 = vadd.f32 0.0, %v1382
      %v1384 = vpop.f32.mrf.mxu0
      %1385 = vmatprep.mubr.f32.mxu0 0.0
      %1386 = vmatmul.mubr.f32.gmra.mxu0 %v812
      %v1387 = vpop.f32.mrf.mxu0
      %v1388 = vadd.f32 0.0, %v1387
      %v1389 = vpop.f32.mrf.mxu0
      %1390 = vmatprep.mubr.f32.mxu0 0.0
      %1391 = vmatmul.mubr.f32.gmra.mxu0 %v815
      %v1392 = vpop.f32.mrf.mxu0
      %v1393 = vadd.f32 0.0, %v1392
      %v1394 = vpop.f32.mrf.mxu0
      %1395 = vmatprep.mubr.f32.mxu0 0.0
      %1396 = vmatmul.mubr.f32.gmra.mxu0 %v818
      %v1397 = vpop.f32.mrf.mxu0
      %v1398 = vadd.f32 0.0, %v1397
      %v1399 = vpop.f32.mrf.mxu0
      %1400 = vmatprep.mubr.f32.mxu0 0.0
      %1401 = vmatmul.mubr.f32.gmra.mxu0 %v821
      %v1402 = vpop.f32.mrf.mxu0
      %v1403 = vadd.f32 0.0, %v1402
      %v1404 = vpop.f32.mrf.mxu0
      %1405 = vmatprep.mubr.f32.mxu0 0.0
      %1406 = vmatmul.mubr.f32.gmra.mxu0 %v824
      %v1407 = vpop.f32.mrf.mxu0
      %v1408 = vadd.f32 0.0, %v1407
      %v1409 = vpop.f32.mrf.mxu0
      %1410 = vmatprep.mubr.f32.mxu0 0.0
      %1411 = vmatmul.mubr.f32.gmra.mxu0 %v827
      %v1412 = vpop.f32.mrf.mxu0
      %v1413 = vadd.f32 0.0, %v1412
      %v1414 = vpop.f32.mrf.mxu0
      %1415 = vmatprep.mubr.f32.mxu0 0.0
      %1416 = vmatmul.mubr.f32.gmra.mxu0 %v830
      %v1417 = vpop.f32.mrf.mxu0
      %v1418 = vadd.f32 0.0, %v1417
      %v1419 = vpop.f32.mrf.mxu0
      %1420 = vmatprep.mubr.f32.mxu0 0.0
      %1421 = vmatmul.mubr.f32.gmra.mxu0 %v833
      %v1422 = vpop.f32.mrf.mxu0
      %v1423 = vadd.f32 0.0, %v1422
      %v1424 = vpop.f32.mrf.mxu0
      %1425 = vmatprep.mubr.f32.mxu0 0.0
      %1426 = vmatmul.mubr.f32.gmra.mxu0 %v836
      %v1427 = vpop.f32.mrf.mxu0
      %v1428 = vadd.f32 0.0, %v1427
      %v1429 = vpop.f32.mrf.mxu0
      %1430 = vmatprep.mubr.f32.mxu0 0.0
      %1431 = vmatmul.mubr.f32.gmra.mxu0 %v839
      %v1432 = vpop.f32.mrf.mxu0
      %v1433 = vadd.f32 0.0, %v1432
      %v1434 = vpop.f32.mrf.mxu0
      %1435 = vmatprep.mubr.f32.mxu0 0.0
      %1436 = vmatmul.mubr.f32.gmra.mxu0 %v842
      %v1437 = vpop.f32.mrf.mxu0
      %v1438 = vadd.f32 0.0, %v1437
      %v1439 = vpop.f32.mrf.mxu0
      %1440 = vmatprep.mubr.f32.mxu0 0.0
      %1441 = vmatmul.mubr.f32.gmra.mxu0 %v845
      %v1442 = vpop.f32.mrf.mxu0
      %v1443 = vadd.f32 0.0, %v1442
      %v1444 = vpop.f32.mrf.mxu0
      %1445 = vmatprep.mubr.f32.mxu0 0.0
      %1446 = vmatmul.mubr.f32.gmra.mxu0 %v848
      %v1447 = vpop.f32.mrf.mxu0
      %v1448 = vadd.f32 0.0, %v1447
      %v1449 = vpop.f32.mrf.mxu0
      %1450 = vmatprep.mubr.f32.mxu0 0.0
      %1451 = vmatmul.mubr.f32.gmra.mxu0 %v851
      %v1452 = vpop.f32.mrf.mxu0
      %v1453 = vadd.f32 0.0, %v1452
      %v1454 = vpop.f32.mrf.mxu0
      %1455 = vmatprep.mubr.f32.mxu0 0.0
      %1456 = vmatmul.mubr.f32.gmra.mxu0 %v854
      %v1457 = vpop.f32.mrf.mxu0
      %v1458 = vadd.f32 0.0, %v1457
      %v1459 = vpop.f32.mrf.mxu0
      %1460 = vmatprep.mubr.f32.mxu0 0.0
      %1461 = vmatmul.mubr.f32.gmra.mxu0 %v857
      %v1462 = vpop.f32.mrf.mxu0
      %v1463 = vadd.f32 0.0, %v1462
      %v1464 = vpop.f32.mrf.mxu0
      %1465 = vmatprep.mubr.f32.mxu0 0.0
      %1466 = vmatmul.mubr.f32.gmra.mxu0 %v860
      %v1467 = vpop.f32.mrf.mxu0
      %v1468 = vadd.f32 0.0, %v1467
      %v1469 = vpop.f32.mrf.mxu0
      %1470 = vmatprep.mubr.f32.mxu0 0.0
      %1471 = vmatmul.mubr.f32.gmra.mxu0 %v863
      %v1472 = vpop.f32.mrf.mxu0
      %v1473 = vadd.f32 0.0, %v1472
      %v1474 = vpop.f32.mrf.mxu0
      %1475 = vmatprep.mubr.f32.mxu0 0.0
      %1476 = vmatmul.mubr.f32.gmra.mxu0 %v866
      %v1477 = vpop.f32.mrf.mxu0
      %v1478 = vadd.f32 0.0, %v1477
      %v1479 = vpop.f32.mrf.mxu0
      %1480 = vmatprep.mubr.f32.mxu0 0.0
      %1481 = vmatmul.mubr.f32.gmra.mxu0 %v869
      %v1482 = vpop.f32.mrf.mxu0
      %v1483 = vadd.f32 0.0, %v1482
      %v1484 = vpop.f32.mrf.mxu0
      %1485 = vmatprep.mubr.f32.mxu0 0.0
      %1486 = vmatmul.mubr.f32.gmra.mxu0 %v872
      %v1487 = vpop.f32.mrf.mxu0
      %v1488 = vadd.f32 0.0, %v1487
      %v1489 = vpop.f32.mrf.mxu0
      %1490 = vmatprep.mubr.f32.mxu0 0.0
      %1491 = vmatmul.mubr.f32.gmra.mxu0 %v875
      %v1492 = vpop.f32.mrf.mxu0
      %v1493 = vadd.f32 0.0, %v1492
      %v1494 = vpop.f32.mrf.mxu0
      %1495 = vmatprep.mubr.f32.mxu0 0.0
      %1496 = vmatmul.mubr.f32.gmra.mxu0 %v878
      %v1497 = vpop.f32.mrf.mxu0
      %v1498 = vadd.f32 0.0, %v1497
      %v1499 = vpop.f32.mrf.mxu0
      %1500 = vmatprep.mubr.f32.mxu0 0.0
      %1501 = vmatmul.mubr.f32.gmra.mxu0 %v881
      %v1502 = vpop.f32.mrf.mxu0
      %v1503 = vadd.f32 0.0, %v1502
      %v1504 = vpop.f32.mrf.mxu0
      %1505 = vmatprep.mubr.f32.mxu0 0.0
      %1506 = vmatmul.mubr.f32.gmra.mxu0 %v884
      %v1507 = vpop.f32.mrf.mxu0
      %v1508 = vadd.f32 0.0, %v1507
      %v1509 = vpop.f32.mrf.mxu0
      %1510 = vmatprep.mubr.f32.mxu0 0.0
      %1511 = vmatmul.mubr.f32.gmra.mxu0 %v887
      %v1512 = vpop.f32.mrf.mxu0
      %v1513 = vadd.f32 0.0, %v1512
      %v1514 = vpop.f32.mrf.mxu0
      %1515 = vmatprep.mubr.f32.mxu0 0.0
      %1516 = vmatmul.mubr.f32.gmra.mxu0 %v890
      %v1517 = vpop.f32.mrf.mxu0
      %v1518 = vadd.f32 0.0, %v1517
      %v1519 = vpop.f32.mrf.mxu0
      %1520 = vdwg.mxu0
      %vm1521 = vcmp.ge.f32.partialorder %v963, 0.0
      %vm1522 = vcmp.ge.f32.partialorder %v968, 0.0
      %vm1523 = vcmp.ge.f32.partialorder %v973, 0.0
      %vm1524 = vcmp.ge.f32.partialorder %v978, 0.0
      %vm1525 = vcmp.ge.f32.partialorder %v983, 0.0
      %vm1526 = vcmp.ge.f32.partialorder %v988, 0.0
      %vm1527 = vcmp.ge.f32.partialorder %v993, 0.0
      %vm1528 = vcmp.ge.f32.partialorder %v998, 0.0
      %vm1529 = vcmp.ge.f32.partialorder %v1003, 0.0
      %vm1530 = vcmp.ge.f32.partialorder %v1008, 0.0
      %vm1531 = vcmp.ge.f32.partialorder %v1013, 0.0
      %vm1532 = vcmp.ge.f32.partialorder %v1018, 0.0
      %vm1533 = vcmp.ge.f32.partialorder %v1023, 0.0
      %vm1534 = vcmp.ge.f32.partialorder %v1028, 0.0
      %vm1535 = vcmp.ge.f32.partialorder %v1033, 0.0
      %vm1536 = vcmp.ge.f32.partialorder %v1038, 0.0
      %vm1537 = vcmp.ge.f32.partialorder %v1043, 0.0
      %vm1538 = vcmp.ge.f32.partialorder %v1048, 0.0
      %vm1539 = vcmp.ge.f32.partialorder %v1053, 0.0
      %vm1540 = vcmp.ge.f32.partialorder %v1058, 0.0
      %vm1541 = vcmp.ge.f32.partialorder %v1063, 0.0
      %vm1542 = vcmp.ge.f32.partialorder %v1068, 0.0
      %vm1543 = vcmp.ge.f32.partialorder %v1073, 0.0
      %vm1544 = vcmp.ge.f32.partialorder %v1078, 0.0
      %vm1545 = vcmp.ge.f32.partialorder %v1083, 0.0
      %vm1546 = vcmp.ge.f32.partialorder %v1088, 0.0
      %vm1547 = vcmp.ge.f32.partialorder %v1093, 0.0
      %vm1548 = vcmp.ge.f32.partialorder %v1098, 0.0
      %vm1549 = vcmp.ge.f32.partialorder %v1103, 0.0
      %vm1550 = vcmp.ge.f32.partialorder %v1108, 0.0
      %vm1551 = vcmp.ge.f32.partialorder %v1113, 0.0
      %vm1552 = vcmp.ge.f32.partialorder %v1118, 0.0
      %vm1553 = vcmp.ge.f32.partialorder %v1123, 0.0
      %vm1554 = vcmp.ge.f32.partialorder %v1128, 0.0
      %vm1555 = vcmp.ge.f32.partialorder %v1133, 0.0
      %vm1556 = vcmp.ge.f32.partialorder %v1138, 0.0
      %vm1557 = vcmp.ge.f32.partialorder %v1143, 0.0
      %vm1558 = vcmp.ge.f32.partialorder %v1148, 0.0
      %vm1559 = vcmp.ge.f32.partialorder %v1153, 0.0
      %vm1560 = vcmp.ge.f32.partialorder %v1158, 0.0
      %vm1561 = vcmp.ge.f32.partialorder %v1163, 0.0
      %vm1562 = vcmp.ge.f32.partialorder %v1168, 0.0
      %vm1563 = vcmp.ge.f32.partialorder %v1173, 0.0
      %vm1564 = vcmp.ge.f32.partialorder %v1178, 0.0
      %vm1565 = vcmp.ge.f32.partialorder %v1183, 0.0
      %vm1566 = vcmp.ge.f32.partialorder %v1188, 0.0
      %vm1567 = vcmp.ge.f32.partialorder %v1193, 0.0
      %vm1568 = vcmp.ge.f32.partialorder %v1198, 0.0
      %vm1569 = vcmp.ge.f32.partialorder %v1203, 0.0
      %vm1570 = vcmp.ge.f32.partialorder %v1208, 0.0
      %vm1571 = vcmp.ge.f32.partialorder %v1213, 0.0
      %vm1572 = vcmp.ge.f32.partialorder %v1218, 0.0
      %vm1573 = vcmp.ge.f32.partialorder %v1223, 0.0
      %vm1574 = vcmp.ge.f32.partialorder %v1228, 0.0
      %vm1575 = vcmp.ge.f32.partialorder %v1233, 0.0
      %vm1576 = vcmp.ge.f32.partialorder %v1238, 0.0
      %vm1577 = vcmp.ge.f32.partialorder %v1243, 0.0
      %vm1578 = vcmp.ge.f32.partialorder %v1248, 0.0
      %vm1579 = vcmp.ge.f32.partialorder %v1253, 0.0
      %vm1580 = vcmp.ge.f32.partialorder %v1258, 0.0
      %vm1581 = vcmp.ge.f32.partialorder %v1263, 0.0
      %vm1582 = vcmp.ge.f32.partialorder %v1268, 0.0
      %vm1583 = vcmp.ge.f32.partialorder %v1273, 0.0
      %vm1584 = vcmp.ge.f32.partialorder %v1278, 0.0
      %vm1585 = vcmp.ge.f32.partialorder %v1283, 0.0
      %vm1586 = vcmp.ge.f32.partialorder %v1288, 0.0
      %vm1587 = vcmp.ge.f32.partialorder %v1293, 0.0
      %vm1588 = vcmp.ge.f32.partialorder %v1298, 0.0
      %vm1589 = vcmp.ge.f32.partialorder %v1303, 0.0
      %vm1590 = vcmp.ge.f32.partialorder %v1308, 0.0
      %vm1591 = vcmp.ge.f32.partialorder %v1313, 0.0
      %vm1592 = vcmp.ge.f32.partialorder %v1318, 0.0
      %vm1593 = vcmp.ge.f32.partialorder %v1323, 0.0
      %vm1594 = vcmp.ge.f32.partialorder %v1328, 0.0
      %vm1595 = vcmp.ge.f32.partialorder %v1333, 0.0
      %vm1596 = vcmp.ge.f32.partialorder %v1338, 0.0
      %vm1597 = vcmp.ge.f32.partialorder %v1343, 0.0
      %vm1598 = vcmp.ge.f32.partialorder %v1348, 0.0
      %vm1599 = vcmp.ge.f32.partialorder %v1353, 0.0
      %vm1600 = vcmp.ge.f32.partialorder %v1358, 0.0
      %vm1601 = vcmp.ge.f32.partialorder %v1363, 0.0
      %vm1602 = vcmp.ge.f32.partialorder %v1368, 0.0
      %vm1603 = vcmp.ge.f32.partialorder %v1373, 0.0
      %vm1604 = vcmp.ge.f32.partialorder %v1378, 0.0
      %vm1605 = vcmp.ge.f32.partialorder %v1383, 0.0
      %vm1606 = vcmp.ge.f32.partialorder %v1388, 0.0
      %vm1607 = vcmp.ge.f32.partialorder %v1393, 0.0
      %vm1608 = vcmp.ge.f32.partialorder %v1398, 0.0
      %vm1609 = vcmp.ge.f32.partialorder %v1403, 0.0
      %vm1610 = vcmp.ge.f32.partialorder %v1408, 0.0
      %vm1611 = vcmp.ge.f32.partialorder %v1413, 0.0
      %vm1612 = vcmp.ge.f32.partialorder %v1418, 0.0
      %vm1613 = vcmp.ge.f32.partialorder %v1423, 0.0
      %vm1614 = vcmp.ge.f32.partialorder %v1428, 0.0
      %vm1615 = vcmp.ge.f32.partialorder %v1433, 0.0
      %vm1616 = vcmp.ge.f32.partialorder %v1438, 0.0
      %vm1617 = vcmp.ge.f32.partialorder %v1443, 0.0
      %vm1618 = vcmp.ge.f32.partialorder %v1448, 0.0
      %vm1619 = vcmp.ge.f32.partialorder %v1453, 0.0
      %vm1620 = vcmp.ge.f32.partialorder %v1458, 0.0
      %vm1621 = vcmp.ge.f32.partialorder %v1463, 0.0
      %vm1622 = vcmp.ge.f32.partialorder %v1468, 0.0
      %vm1623 = vcmp.ge.f32.partialorder %v1473, 0.0
      %vm1624 = vcmp.ge.f32.partialorder %v1478, 0.0
      %vm1625 = vcmp.ge.f32.partialorder %v1483, 0.0
      %vm1626 = vcmp.ge.f32.partialorder %v1488, 0.0
      %vm1627 = vcmp.ge.f32.partialorder %v1493, 0.0
      %vm1628 = vcmp.ge.f32.partialorder %v1498, 0.0
      %vm1629 = vcmp.ge.f32.partialorder %v1503, 0.0
      %vm1630 = vcmp.ge.f32.partialorder %v1508, 0.0
      %vm1631 = vcmp.ge.f32.partialorder %v1513, 0.0
      %vm1632 = vcmp.ge.f32.partialorder %v1518, 0.0
      %v1633 = vmul.f32 %v963, 0.2
      %v1634 = vmul.f32 %v968, 0.2
      %v1635 = vmul.f32 %v973, 0.2
      %v1636 = vmul.f32 %v978, 0.2
      %v1637 = vmul.f32 %v983, 0.2
      %v1638 = vmul.f32 %v988, 0.2
      %v1639 = vmul.f32 %v993, 0.2
      %v1640 = vmul.f32 %v998, 0.2
      %v1641 = vmul.f32 %v1003, 0.2
      %v1642 = vmul.f32 %v1008, 0.2
      %v1643 = vmul.f32 %v1013, 0.2
      %v1644 = vmul.f32 %v1018, 0.2
      %v1645 = vmul.f32 %v1023, 0.2
      %v1646 = vmul.f32 %v1028, 0.2
      %v1647 = vmul.f32 %v1033, 0.2
      %v1648 = vmul.f32 %v1038, 0.2
      %v1649 = vmul.f32 %v1043, 0.2
      %v1650 = vmul.f32 %v1048, 0.2
      %v1651 = vmul.f32 %v1053, 0.2
      %v1652 = vmul.f32 %v1058, 0.2
      %v1653 = vmul.f32 %v1063, 0.2
      %v1654 = vmul.f32 %v1068, 0.2
      %v1655 = vmul.f32 %v1073, 0.2
      %v1656 = vmul.f32 %v1078, 0.2
      %v1657 = vmul.f32 %v1083, 0.2
      %v1658 = vmul.f32 %v1088, 0.2
      %v1659 = vmul.f32 %v1093, 0.2
      %v1660 = vmul.f32 %v1098, 0.2
      %v1661 = vmul.f32 %v1103, 0.2
      %v1662 = vmul.f32 %v1108, 0.2
      %v1663 = vmul.f32 %v1113, 0.2
      %v1664 = vmul.f32 %v1118, 0.2
      %v1665 = vmul.f32 %v1123, 0.2
      %v1666 = vmul.f32 %v1128, 0.2
      %v1667 = vmul.f32 %v1133, 0.2
      %v1668 = vmul.f32 %v1138, 0.2
      %v1669 = vmul.f32 %v1143, 0.2
      %v1670 = vmul.f32 %v1148, 0.2
      %v1671 = vmul.f32 %v1153, 0.2
      %v1672 = vmul.f32 %v1158, 0.2
      %v1673 = vmul.f32 %v1163, 0.2
      %v1674 = vmul.f32 %v1168, 0.2
      %v1675 = vmul.f32 %v1173, 0.2
      %v1676 = vmul.f32 %v1178, 0.2
      %v1677 = vmul.f32 %v1183, 0.2
      %v1678 = vmul.f32 %v1188, 0.2
      %v1679 = vmul.f32 %v1193, 0.2
      %v1680 = vmul.f32 %v1198, 0.2
      %v1681 = vmul.f32 %v1203, 0.2
      %v1682 = vmul.f32 %v1208, 0.2
      %v1683 = vmul.f32 %v1213, 0.2
      %v1684 = vmul.f32 %v1218, 0.2
      %v1685 = vmul.f32 %v1223, 0.2
      %v1686 = vmul.f32 %v1228, 0.2
      %v1687 = vmul.f32 %v1233, 0.2
      %v1688 = vmul.f32 %v1238, 0.2
      %v1689 = vmul.f32 %v1243, 0.2
      %v1690 = vmul.f32 %v1248, 0.2
      %v1691 = vmul.f32 %v1253, 0.2
      %v1692 = vmul.f32 %v1258, 0.2
      %v1693 = vmul.f32 %v1263, 0.2
      %v1694 = vmul.f32 %v1268, 0.2
      %v1695 = vmul.f32 %v1273, 0.2
      %v1696 = vmul.f32 %v1278, 0.2
      %v1697 = vmul.f32 %v1283, 0.2
      %v1698 = vmul.f32 %v1288, 0.2
      %v1699 = vmul.f32 %v1293, 0.2
      %v1700 = vmul.f32 %v1298, 0.2
      %v1701 = vmul.f32 %v1303, 0.2
      %v1702 = vmul.f32 %v1308, 0.2
      %v1703 = vmul.f32 %v1313, 0.2
      %v1704 = vmul.f32 %v1318, 0.2
      %v1705 = vmul.f32 %v1323, 0.2
      %v1706 = vmul.f32 %v1328, 0.2
      %v1707 = vmul.f32 %v1333, 0.2
      %v1708 = vmul.f32 %v1338, 0.2
      %v1709 = vmul.f32 %v1343, 0.2
      %v1710 = vmul.f32 %v1348, 0.2
      %v1711 = vmul.f32 %v1353, 0.2
      %v1712 = vmul.f32 %v1358, 0.2
      %v1713 = vmul.f32 %v1363, 0.2
      %v1714 = vmul.f32 %v1368, 0.2
      %v1715 = vmul.f32 %v1373, 0.2
      %v1716 = vmul.f32 %v1378, 0.2
      %v1717 = vmul.f32 %v1383, 0.2
      %v1718 = vmul.f32 %v1388, 0.2
      %v1719 = vmul.f32 %v1393, 0.2
      %v1720 = vmul.f32 %v1398, 0.2
      %v1721 = vmul.f32 %v1403, 0.2
      %v1722 = vmul.f32 %v1408, 0.2
      %v1723 = vmul.f32 %v1413, 0.2
      %v1724 = vmul.f32 %v1418, 0.2
      %v1725 = vmul.f32 %v1423, 0.2
      %v1726 = vmul.f32 %v1428, 0.2
      %v1727 = vmul.f32 %v1433, 0.2
      %v1728 = vmul.f32 %v1438, 0.2
      %v1729 = vmul.f32 %v1443, 0.2
      %v1730 = vmul.f32 %v1448, 0.2
      %v1731 = vmul.f32 %v1453, 0.2
      %v1732 = vmul.f32 %v1458, 0.2
      %v1733 = vmul.f32 %v1463, 0.2
      %v1734 = vmul.f32 %v1468, 0.2
      %v1735 = vmul.f32 %v1473, 0.2
      %v1736 = vmul.f32 %v1478, 0.2
      %v1737 = vmul.f32 %v1483, 0.2
      %v1738 = vmul.f32 %v1488, 0.2
      %v1739 = vmul.f32 %v1493, 0.2
      %v1740 = vmul.f32 %v1498, 0.2
      %v1741 = vmul.f32 %v1503, 0.2
      %v1742 = vmul.f32 %v1508, 0.2
      %v1743 = vmul.f32 %v1513, 0.2
      %v1744 = vmul.f32 %v1518, 0.2
      %v1745 = vsel %vm1521, %v963, %v1633
      %v1746 = vsel %vm1522, %v968, %v1634
      %v1747 = vsel %vm1523, %v973, %v1635
      %v1748 = vsel %vm1524, %v978, %v1636
      %v1749 = vsel %vm1525, %v983, %v1637
      %v1750 = vsel %vm1526, %v988, %v1638
      %v1751 = vsel %vm1527, %v993, %v1639
      %v1752 = vsel %vm1528, %v998, %v1640
      %v1753 = vsel %vm1529, %v1003, %v1641
      %v1754 = vsel %vm1530, %v1008, %v1642
      %v1755 = vsel %vm1531, %v1013, %v1643
      %v1756 = vsel %vm1532, %v1018, %v1644
      %v1757 = vsel %vm1533, %v1023, %v1645
      %v1758 = vsel %vm1534, %v1028, %v1646
      %v1759 = vsel %vm1535, %v1033, %v1647
      %v1760 = vsel %vm1536, %v1038, %v1648
      %v1761 = vsel %vm1537, %v1043, %v1649
      %v1762 = vsel %vm1538, %v1048, %v1650
      %v1763 = vsel %vm1539, %v1053, %v1651
      %v1764 = vsel %vm1540, %v1058, %v1652
      %v1765 = vsel %vm1541, %v1063, %v1653
      %v1766 = vsel %vm1542, %v1068, %v1654
      %v1767 = vsel %vm1543, %v1073, %v1655
      %v1768 = vsel %vm1544, %v1078, %v1656
      %v1769 = vsel %vm1545, %v1083, %v1657
      %v1770 = vsel %vm1546, %v1088, %v1658
      %v1771 = vsel %vm1547, %v1093, %v1659
      %v1772 = vsel %vm1548, %v1098, %v1660
      %v1773 = vsel %vm1549, %v1103, %v1661
      %v1774 = vsel %vm1550, %v1108, %v1662
      %v1775 = vsel %vm1551, %v1113, %v1663
      %v1776 = vsel %vm1552, %v1118, %v1664
      %v1777 = vsel %vm1553, %v1123, %v1665
      %v1778 = vsel %vm1554, %v1128, %v1666
      %v1779 = vsel %vm1555, %v1133, %v1667
      %v1780 = vsel %vm1556, %v1138, %v1668
      %v1781 = vsel %vm1557, %v1143, %v1669
      %v1782 = vsel %vm1558, %v1148, %v1670
      %v1783 = vsel %vm1559, %v1153, %v1671
      %v1784 = vsel %vm1560, %v1158, %v1672
      %v1785 = vsel %vm1561, %v1163, %v1673
      %v1786 = vsel %vm1562, %v1168, %v1674
      %v1787 = vsel %vm1563, %v1173, %v1675
      %v1788 = vsel %vm1564, %v1178, %v1676
      %v1789 = vsel %vm1565, %v1183, %v1677
      %v1790 = vsel %vm1566, %v1188, %v1678
      %v1791 = vsel %vm1567, %v1193, %v1679
      %v1792 = vsel %vm1568, %v1198, %v1680
      %v1793 = vsel %vm1569, %v1203, %v1681
      %v1794 = vsel %vm1570, %v1208, %v1682
      %v1795 = vsel %vm1571, %v1213, %v1683
      %v1796 = vsel %vm1572, %v1218, %v1684
      %v1797 = vsel %vm1573, %v1223, %v1685
      %v1798 = vsel %vm1574, %v1228, %v1686
      %v1799 = vsel %vm1575, %v1233, %v1687
      %v1800 = vsel %vm1576, %v1238, %v1688
      %v1801 = vsel %vm1577, %v1243, %v1689
      %v1802 = vsel %vm1578, %v1248, %v1690
      %v1803 = vsel %vm1579, %v1253, %v1691
      %v1804 = vsel %vm1580, %v1258, %v1692
      %v1805 = vsel %vm1581, %v1263, %v1693
      %v1806 = vsel %vm1582, %v1268, %v1694
      %v1807 = vsel %vm1583, %v1273, %v1695
      %v1808 = vsel %vm1584, %v1278, %v1696
      %v1809 = vsel %vm1585, %v1283, %v1697
      %v1810 = vsel %vm1586, %v1288, %v1698
      %v1811 = vsel %vm1587, %v1293, %v1699
      %v1812 = vsel %vm1588, %v1298, %v1700
      %v1813 = vsel %vm1589, %v1303, %v1701
      %v1814 = vsel %vm1590, %v1308, %v1702
      %v1815 = vsel %vm1591, %v1313, %v1703
      %v1816 = vsel %vm1592, %v1318, %v1704
      %v1817 = vsel %vm1593, %v1323, %v1705
      %v1818 = vsel %vm1594, %v1328, %v1706
      %v1819 = vsel %vm1595, %v1333, %v1707
      %v1820 = vsel %vm1596, %v1338, %v1708
      %v1821 = vsel %vm1597, %v1343, %v1709
      %v1822 = vsel %vm1598, %v1348, %v1710
      %v1823 = vsel %vm1599, %v1353, %v1711
      %v1824 = vsel %vm1600, %v1358, %v1712
      %v1825 = vsel %vm1601, %v1363, %v1713
      %v1826 = vsel %vm1602, %v1368, %v1714
      %v1827 = vsel %vm1603, %v1373, %v1715
      %v1828 = vsel %vm1604, %v1378, %v1716
      %v1829 = vsel %vm1605, %v1383, %v1717
      %v1830 = vsel %vm1606, %v1388, %v1718
      %v1831 = vsel %vm1607, %v1393, %v1719
      %v1832 = vsel %vm1608, %v1398, %v1720
      %v1833 = vsel %vm1609, %v1403, %v1721
      %v1834 = vsel %vm1610, %v1408, %v1722
      %v1835 = vsel %vm1611, %v1413, %v1723
      %v1836 = vsel %vm1612, %v1418, %v1724
      %v1837 = vsel %vm1613, %v1423, %v1725
      %v1838 = vsel %vm1614, %v1428, %v1726
      %v1839 = vsel %vm1615, %v1433, %v1727
      %v1840 = vsel %vm1616, %v1438, %v1728
      %v1841 = vsel %vm1617, %v1443, %v1729
      %v1842 = vsel %vm1618, %v1448, %v1730
      %v1843 = vsel %vm1619, %v1453, %v1731
      %v1844 = vsel %vm1620, %v1458, %v1732
      %v1845 = vsel %vm1621, %v1463, %v1733
      %v1846 = vsel %vm1622, %v1468, %v1734
      %v1847 = vsel %vm1623, %v1473, %v1735
      %v1848 = vsel %vm1624, %v1478, %v1736
      %v1849 = vsel %vm1625, %v1483, %v1737
      %v1850 = vsel %vm1626, %v1488, %v1738
      %v1851 = vsel %vm1627, %v1493, %v1739
      %v1852 = vsel %vm1628, %v1498, %v1740
      %v1853 = vsel %vm1629, %v1503, %v1741
      %v1854 = vsel %vm1630, %v1508, %v1742
      %v1855 = vsel %vm1631, %v1513, %v1743
      %v1856 = vsel %vm1632, %v1518, %v1744
      %v1857 = vld [vmem:[%s2] sm:$0xf]
      %v1858 = vld [vmem:[%s2 + $0x4] sm:$0xf]
      %v1859 = vld [vmem:[%s2 + $0x8] sm:$0xf]
      %v1860 = vld [vmem:[%s2 + $0xc] sm:$0xf]
      %v1861 = vld [vmem:[%s2 + $0x10] sm:$0xf]
      %v1862 = vld [vmem:[%s2 + $0x14] sm:$0xf]
      %v1863 = vld [vmem:[%s2 + $0x18] sm:$0xf]
      %v1864 = vld [vmem:[%s2 + $0x1c] sm:$0xf]
      %v1865 = vunpack.c.l.bf16 %v1857
      %v1866 = vunpack.c.l.bf16 %v1858
      %v1867 = vunpack.c.l.bf16 %v1859
      %v1868 = vunpack.c.l.bf16 %v1860
      %v1869 = vunpack.c.l.bf16 %v1861
      %v1870 = vunpack.c.l.bf16 %v1862
      %v1871 = vunpack.c.l.bf16 %v1863
      %v1872 = vunpack.c.l.bf16 %v1864
      %vm1873 = vcmask 130048
      %v1875 = vsel %vm1873, %v1773, 0
      %v1878 = vsel %vm1873, %v1774, 0
      %v1881 = vsel %vm1873, %v1775, 0
      %v1884 = vsel %vm1873, %v1776, 0
      %v1887 = vsel %vm1873, %v1777, 0
      %v1890 = vsel %vm1873, %v1778, 0
      %v1893 = vsel %vm1873, %v1779, 0
      %v1896 = vsel %vm1873, %v1780, 0
      %v1899 = vsel %vm1873, %v1781, 0
      %v1902 = vsel %vm1873, %v1782, 0
      %v1905 = vsel %vm1873, %v1783, 0
      %v1908 = vsel %vm1873, %v1784, 0
      %v1911 = vsel %vm1873, %v1785, 0
      %v1914 = vsel %vm1873, %v1786, 0
      %v1917 = vsel %vm1873, %v1787, 0
      %v1920 = vsel %vm1873, %v1788, 0
      %v1923 = vsel %vm1873, %v1789, 0
      %v1926 = vsel %vm1873, %v1790, 0
      %v1929 = vsel %vm1873, %v1791, 0
      %v1932 = vsel %vm1873, %v1792, 0
      %v1935 = vsel %vm1873, %v1793, 0
      %v1938 = vsel %vm1873, %v1794, 0
      %v1941 = vsel %vm1873, %v1795, 0
      %v1944 = vsel %vm1873, %v1796, 0
      %v1947 = vsel %vm1873, %v1797, 0
      %v1950 = vsel %vm1873, %v1798, 0
      %v1953 = vsel %vm1873, %v1799, 0
      %v1956 = vsel %vm1873, %v1800, 0
      %1958 = vmatprep.subr.mxu0 0.0
      %1959 = vmatpush1.msra.mxu0 0.0
      %1960 = vmatprep.subr.mxu0 0.0
      %1961 = vmatpush1.msra.mxu0 0.0
      %1962 = vmatprep.subr.mxu0 0.0
      %1963 = vmatpush1.msra.mxu0 0.0
      %1964 = vmatprep.subr.mxu0 0.0
      %1965 = vmatpush1.msra.mxu0 0.0
      %1966 = vmatprep.subr.mxu0 0.0
      %1967 = vmatpush1.msra.mxu0 0.0
      %1968 = vmatprep.subr.mxu0 0.0
      %1969 = vmatpush1.msra.mxu0 0.0
      %1970 = vmatprep.subr.mxu0 0.0
      %1971 = vmatpush1.msra.mxu0 0.0
      %1972 = vmatprep.subr.mxu0 0.0
      %1973 = vmatpush1.msra.mxu0 0.0
      %1974 = vmatprep.subr.mxu0 0.0
      %1975 = vmatpush1.msra.mxu0 0.0
      %1976 = vmatprep.subr.mxu0 0.0
      %1977 = vmatpush1.msra.mxu0 0.0
      %1978 = vmatprep.subr.mxu0 0.0
      %1979 = vmatpush1.msra.mxu0 0.0
      %1980 = vmatprep.subr.mxu0 0.0
      %1981 = vmatpush1.msra.mxu0 0.0
      %1982 = vmatprep.subr.mxu0 0.0
      %1983 = vmatpush1.msra.mxu0 0.0
      %1984 = vmatprep.subr.mxu0 0.0
      %1985 = vmatpush1.msra.mxu0 0.0
      %1986 = vmatprep.subr.mxu0 0.0
      %1987 = vmatpush1.msra.mxu0 %v1868
      %1988 = vmatprep.subr.mxu0 0.0
      %1989 = vmatpush1.msra.mxu0 %v1867
      %1990 = vmatprep.subr.mxu0 0.0
      %1991 = vmatpush2.msra.mxu0 0.0
      %1992 = vmatprep.subr.mxu0 0.0
      %1993 = vmatpush2.msra.mxu0 0.0
      %1994 = vmatprep.subr.mxu0 0.0
      %1995 = vmatpush2.msra.mxu0 0.0
      %1996 = vmatprep.subr.mxu0 0.0
      %1997 = vmatpush2.msra.mxu0 0.0
      %1998 = vmatprep.subr.mxu0 0.0
      %1999 = vmatpush2.msra.mxu0 0.0
      %2000 = vmatprep.subr.mxu0 0.0
      %2001 = vmatpush2.msra.mxu0 0.0
      %2002 = vmatprep.subr.mxu0 0.0
      %2003 = vmatpush2.msra.mxu0 0.0
      %2004 = vmatprep.subr.mxu0 0.0
      %2005 = vmatpush2.msra.mxu0 0.0
      %2006 = vmatprep.subr.mxu0 0.0
      %2007 = vmatpush2.msra.mxu0 0.0
      %2008 = vmatprep.subr.mxu0 0.0
      %2009 = vmatpush2.msra.mxu0 0.0
      %2010 = vmatprep.subr.mxu0 0.0
      %2011 = vmatpush2.msra.mxu0 0.0
      %2012 = vmatprep.subr.mxu0 0.0
      %2013 = vmatpush2.msra.mxu0 0.0
      %2014 = vmatprep.subr.mxu0 0.0
      %2015 = vmatpush2.msra.mxu0 0.0
      %2016 = vmatprep.subr.mxu0 0.0
      %2017 = vmatpush2.msra.mxu0 0.0
      %2018 = vmatprep.subr.mxu0 0.0
      %2019 = vmatpush2.msra.mxu0 0.0
      %2020 = vmatprep.subr.mxu0 0.0
      %2021 = vmatpush2.msra.mxu0 0.0
      %2022 = vmatprep.mubr.f32.mxu0 0.0
      %2023 = vmatmul.mubr.f32.gmra.mxu0 %v1875
      %v2024 = vpop.f32.mrf.mxu0
      %v2025 = vadd.f32 0.0, %v2024
      %v2026 = vpop.f32.mrf.mxu0
      %2027 = vmatprep.mubr.f32.mxu0 0.0
      %2028 = vmatmul.mubr.f32.gmra.mxu0 %v1878
      %v2029 = vpop.f32.mrf.mxu0
      %v2030 = vadd.f32 0.0, %v2029
      %v2031 = vpop.f32.mrf.mxu0
      %2032 = vmatprep.mubr.f32.mxu0 0.0
      %2033 = vmatmul.mubr.f32.gmra.mxu0 %v1881
      %v2034 = vpop.f32.mrf.mxu0
      %v2035 = vadd.f32 0.0, %v2034
      %v2036 = vpop.f32.mrf.mxu0
      %2037 = vmatprep.mubr.f32.mxu0 0.0
      %2038 = vmatmul.mubr.f32.gmra.mxu0 %v1884
      %v2039 = vpop.f32.mrf.mxu0
      %v2040 = vadd.f32 0.0, %v2039
      %v2041 = vpop.f32.mrf.mxu0
      %2042 = vmatprep.mubr.f32.mxu0 0.0
      %2043 = vmatmul.mubr.f32.gmra.mxu0 %v1887
      %v2044 = vpop.f32.mrf.mxu0
      %v2045 = vadd.f32 0.0, %v2044
      %v2046 = vpop.f32.mrf.mxu0
      %2047 = vmatprep.mubr.f32.mxu0 0.0
      %2048 = vmatmul.mubr.f32.gmra.mxu0 %v1890
      %v2049 = vpop.f32.mrf.mxu0
      %v2050 = vadd.f32 0.0, %v2049
      %v2051 = vpop.f32.mrf.mxu0
      %2052 = vmatprep.mubr.f32.mxu0 0.0
      %2053 = vmatmul.mubr.f32.gmra.mxu0 %v1893
      %v2054 = vpop.f32.mrf.mxu0
      %v2055 = vadd.f32 0.0, %v2054
      %v2056 = vpop.f32.mrf.mxu0
      %2057 = vmatprep.mubr.f32.mxu0 0.0
      %2058 = vmatmul.mubr.f32.gmra.mxu0 %v1896
      %v2059 = vpop.f32.mrf.mxu0
      %v2060 = vadd.f32 0.0, %v2059
      %v2061 = vpop.f32.mrf.mxu0
      %2062 = vmatprep.mubr.f32.mxu0 0.0
      %2063 = vmatmul.mubr.f32.gmra.mxu0 %v1899
      %v2064 = vpop.f32.mrf.mxu0
      %v2065 = vadd.f32 0.0, %v2064
      %v2066 = vpop.f32.mrf.mxu0
      %2067 = vmatprep.mubr.f32.mxu0 0.0
      %2068 = vmatmul.mubr.f32.gmra.mxu0 %v1902
      %v2069 = vpop.f32.mrf.mxu0
      %v2070 = vadd.f32 0.0, %v2069
      %v2071 = vpop.f32.mrf.mxu0
      %2072 = vmatprep.mubr.f32.mxu0 0.0
      %2073 = vmatmul.mubr.f32.gmra.mxu0 %v1905
      %v2074 = vpop.f32.mrf.mxu0
      %v2075 = vadd.f32 0.0, %v2074
      %v2076 = vpop.f32.mrf.mxu0
      %2077 = vmatprep.mubr.f32.mxu0 0.0
      %2078 = vmatmul.mubr.f32.gmra.mxu0 %v1908
      %v2079 = vpop.f32.mrf.mxu0
      %v2080 = vadd.f32 0.0, %v2079
      %v2081 = vpop.f32.mrf.mxu0
      %2082 = vmatprep.mubr.f32.mxu0 0.0
      %2083 = vmatmul.mubr.f32.gmra.mxu0 %v1911
      %v2084 = vpop.f32.mrf.mxu0
      %v2085 = vadd.f32 0.0, %v2084
      %v2086 = vpop.f32.mrf.mxu0
      %2087 = vmatprep.mubr.f32.mxu0 0.0
      %2088 = vmatmul.mubr.f32.gmra.mxu0 %v1914
      %v2089 = vpop.f32.mrf.mxu0
      %v2090 = vadd.f32 0.0, %v2089
      %v2091 = vpop.f32.mrf.mxu0
      %2092 = vmatprep.mubr.f32.mxu0 0.0
      %2093 = vmatmul.mubr.f32.gmra.mxu0 %v1917
      %v2094 = vpop.f32.mrf.mxu0
      %v2095 = vadd.f32 0.0, %v2094
      %v2096 = vpop.f32.mrf.mxu0
      %2097 = vmatprep.mubr.f32.mxu0 0.0
      %2098 = vmatmul.mubr.f32.gmra.mxu0 %v1920
      %v2099 = vpop.f32.mrf.mxu0
      %v2100 = vadd.f32 0.0, %v2099
      %v2101 = vpop.f32.mrf.mxu0
      %2102 = vmatprep.mubr.f32.mxu0 0.0
      %2103 = vmatmul.mubr.f32.gmra.mxu0 %v1923
      %v2104 = vpop.f32.mrf.mxu0
      %v2105 = vadd.f32 0.0, %v2104
      %v2106 = vpop.f32.mrf.mxu0
      %2107 = vmatprep.mubr.f32.mxu0 0.0
      %2108 = vmatmul.mubr.f32.gmra.mxu0 %v1926
      %v2109 = vpop.f32.mrf.mxu0
      %v2110 = vadd.f32 0.0, %v2109
      %v2111 = vpop.f32.mrf.mxu0
      %2112 = vmatprep.mubr.f32.mxu0 0.0
      %2113 = vmatmul.mubr.f32.gmra.mxu0 %v1929
      %v2114 = vpop.f32.mrf.mxu0
      %v2115 = vadd.f32 0.0, %v2114
      %v2116 = vpop.f32.mrf.mxu0
      %2117 = vmatprep.mubr.f32.mxu0 0.0
      %2118 = vmatmul.mubr.f32.gmra.mxu0 %v1932
      %v2119 = vpop.f32.mrf.mxu0
      %v2120 = vadd.f32 0.0, %v2119
      %v2121 = vpop.f32.mrf.mxu0
      %2122 = vmatprep.mubr.f32.mxu0 0.0
      %2123 = vmatmul.mubr.f32.gmra.mxu0 %v1935
      %v2124 = vpop.f32.mrf.mxu0
      %v2125 = vadd.f32 0.0, %v2124
      %v2126 = vpop.f32.mrf.mxu0
      %2127 = vmatprep.mubr.f32.mxu0 0.0
      %2128 = vmatmul.mubr.f32.gmra.mxu0 %v1938
      %v2129 = vpop.f32.mrf.mxu0
      %v2130 = vadd.f32 0.0, %v2129
      %v2131 = vpop.f32.mrf.mxu0
      %2132 = vmatprep.mubr.f32.mxu0 0.0
      %2133 = vmatmul.mubr.f32.gmra.mxu0 %v1941
      %v2134 = vpop.f32.mrf.mxu0
      %v2135 = vadd.f32 0.0, %v2134
      %v2136 = vpop.f32.mrf.mxu0
      %2137 = vmatprep.mubr.f32.mxu0 0.0
      %2138 = vmatmul.mubr.f32.gmra.mxu0 %v1944
      %v2139 = vpop.f32.mrf.mxu0
      %v2140 = vadd.f32 0.0, %v2139
      %v2141 = vpop.f32.mrf.mxu0
      %2142 = vmatprep.mubr.f32.mxu0 0.0
      %2143 = vmatmul.mubr.f32.gmra.mxu0 %v1947
      %v2144 = vpop.f32.mrf.mxu0
      %v2145 = vadd.f32 0.0, %v2144
      %v2146 = vpop.f32.mrf.mxu0
      %2147 = vmatprep.mubr.f32.mxu0 0.0
      %2148 = vmatmul.mubr.f32.gmra.mxu0 %v1950
      %v2149 = vpop.f32.mrf.mxu0
      %v2150 = vadd.f32 0.0, %v2149
      %v2151 = vpop.f32.mrf.mxu0
      %2152 = vmatprep.mubr.f32.mxu0 0.0
      %2153 = vmatmul.mubr.f32.gmra.mxu0 %v1953
      %v2154 = vpop.f32.mrf.mxu0
      %v2155 = vadd.f32 0.0, %v2154
      %v2156 = vpop.f32.mrf.mxu0
      %2157 = vmatprep.mubr.f32.mxu0 0.0
      %2158 = vmatmul.mubr.f32.gmra.mxu0 %v1956
      %v2159 = vpop.f32.mrf.mxu0
      %v2160 = vadd.f32 0.0, %v2159
      %v2161 = vpop.f32.mrf.mxu0
      %2162 = vdwg.mxu0
      %v2164 = vsel %vm1873, %v1745, 0
      %v2167 = vsel %vm1873, %v1746, 0
      %v2170 = vsel %vm1873, %v1747, 0
      %v2173 = vsel %vm1873, %v1748, 0
      %v2176 = vsel %vm1873, %v1749, 0
      %v2179 = vsel %vm1873, %v1750, 0
      %v2182 = vsel %vm1873, %v1751, 0
      %v2185 = vsel %vm1873, %v1752, 0
      %v2188 = vsel %vm1873, %v1753, 0
      %v2191 = vsel %vm1873, %v1754, 0
      %v2194 = vsel %vm1873, %v1755, 0
      %v2197 = vsel %vm1873, %v1756, 0
      %v2200 = vsel %vm1873, %v1757, 0
      %v2203 = vsel %vm1873, %v1758, 0
      %v2206 = vsel %vm1873, %v1759, 0
      %v2209 = vsel %vm1873, %v1760, 0
      %v2212 = vsel %vm1873, %v1761, 0
      %v2215 = vsel %vm1873, %v1762, 0
      %v2218 = vsel %vm1873, %v1763, 0
      %v2221 = vsel %vm1873, %v1764, 0
      %v2224 = vsel %vm1873, %v1765, 0
      %v2227 = vsel %vm1873, %v1766, 0
      %v2230 = vsel %vm1873, %v1767, 0
      %v2233 = vsel %vm1873, %v1768, 0
      %v2236 = vsel %vm1873, %v1769, 0
      %v2239 = vsel %vm1873, %v1770, 0
      %v2242 = vsel %vm1873, %v1771, 0
      %v2245 = vsel %vm1873, %v1772, 0
      %2247 = vmatprep.subr.mxu0 0.0
      %2248 = vmatpush1.msra.mxu0 0.0
      %2249 = vmatprep.subr.mxu0 0.0
      %2250 = vmatpush1.msra.mxu0 0.0
      %2251 = vmatprep.subr.mxu0 0.0
      %2252 = vmatpush1.msra.mxu0 0.0
      %2253 = vmatprep.subr.mxu0 0.0
      %2254 = vmatpush1.msra.mxu0 0.0
      %2255 = vmatprep.subr.mxu0 0.0
      %2256 = vmatpush1.msra.mxu0 0.0
      %2257 = vmatprep.subr.mxu0 0.0
      %2258 = vmatpush1.msra.mxu0 0.0
      %2259 = vmatprep.subr.mxu0 0.0
      %2260 = vmatpush1.msra.mxu0 0.0
      %2261 = vmatprep.subr.mxu0 0.0
      %2262 = vmatpush1.msra.mxu0 0.0
      %2263 = vmatprep.subr.mxu0 0.0
      %2264 = vmatpush1.msra.mxu0 0.0
      %2265 = vmatprep.subr.mxu0 0.0
      %2266 = vmatpush1.msra.mxu0 0.0
      %2267 = vmatprep.subr.mxu0 0.0
      %2268 = vmatpush1.msra.mxu0 0.0
      %2269 = vmatprep.subr.mxu0 0.0
      %2270 = vmatpush1.msra.mxu0 0.0
      %2271 = vmatprep.subr.mxu0 0.0
      %2272 = vmatpush1.msra.mxu0 0.0
      %2273 = vmatprep.subr.mxu0 0.0
      %2274 = vmatpush1.msra.mxu0 0.0
      %2275 = vmatprep.subr.mxu0 0.0
      %2276 = vmatpush1.msra.mxu0 %v1866
      %2277 = vmatprep.subr.mxu0 0.0
      %2278 = vmatpush1.msra.mxu0 %v1865
      %2279 = vmatprep.subr.mxu0 0.0
      %2280 = vmatpush2.msra.mxu0 0.0
      %2281 = vmatprep.subr.mxu0 0.0
      %2282 = vmatpush2.msra.mxu0 0.0
      %2283 = vmatprep.subr.mxu0 0.0
      %2284 = vmatpush2.msra.mxu0 0.0
      %2285 = vmatprep.subr.mxu0 0.0
      %2286 = vmatpush2.msra.mxu0 0.0
      %2287 = vmatprep.subr.mxu0 0.0
      %2288 = vmatpush2.msra.mxu0 0.0
      %2289 = vmatprep.subr.mxu0 0.0
      %2290 = vmatpush2.msra.mxu0 0.0
      %2291 = vmatprep.subr.mxu0 0.0
      %2292 = vmatpush2.msra.mxu0 0.0
      %2293 = vmatprep.subr.mxu0 0.0
      %2294 = vmatpush2.msra.mxu0 0.0
      %2295 = vmatprep.subr.mxu0 0.0
      %2296 = vmatpush2.msra.mxu0 0.0
      %2297 = vmatprep.subr.mxu0 0.0
      %2298 = vmatpush2.msra.mxu0 0.0
      %2299 = vmatprep.subr.mxu0 0.0
      %2300 = vmatpush2.msra.mxu0 0.0
      %2301 = vmatprep.subr.mxu0 0.0
      %2302 = vmatpush2.msra.mxu0 0.0
      %2303 = vmatprep.subr.mxu0 0.0
      %2304 = vmatpush2.msra.mxu0 0.0
      %2305 = vmatprep.subr.mxu0 0.0
      %2306 = vmatpush2.msra.mxu0 0.0
      %2307 = vmatprep.subr.mxu0 0.0
      %2308 = vmatpush2.msra.mxu0 0.0
      %2309 = vmatprep.subr.mxu0 0.0
      %2310 = vmatpush2.msra.mxu0 0.0
      %2311 = vmatprep.mubr.f32.mxu0 0.0
      %2312 = vmatmul.mubr.f32.gmra.mxu0 %v2164
      %v2313 = vpop.f32.mrf.mxu0
      %v2314 = vadd.f32 %v2025, %v2313
      %v2315 = vpop.f32.mrf.mxu0
      %2316 = vmatprep.mubr.f32.mxu0 0.0
      %2317 = vmatmul.mubr.f32.gmra.mxu0 %v2167
      %v2318 = vpop.f32.mrf.mxu0
      %v2319 = vadd.f32 %v2030, %v2318
      %v2320 = vpop.f32.mrf.mxu0
      %2321 = vmatprep.mubr.f32.mxu0 0.0
      %2322 = vmatmul.mubr.f32.gmra.mxu0 %v2170
      %v2323 = vpop.f32.mrf.mxu0
      %v2324 = vadd.f32 %v2035, %v2323
      %v2325 = vpop.f32.mrf.mxu0
      %2326 = vmatprep.mubr.f32.mxu0 0.0
      %2327 = vmatmul.mubr.f32.gmra.mxu0 %v2173
      %v2328 = vpop.f32.mrf.mxu0
      %v2329 = vadd.f32 %v2040, %v2328
      %v2330 = vpop.f32.mrf.mxu0
      %2331 = vmatprep.mubr.f32.mxu0 0.0
      %2332 = vmatmul.mubr.f32.gmra.mxu0 %v2176
      %v2333 = vpop.f32.mrf.mxu0
      %v2334 = vadd.f32 %v2045, %v2333
      %v2335 = vpop.f32.mrf.mxu0
      %2336 = vmatprep.mubr.f32.mxu0 0.0
      %2337 = vmatmul.mubr.f32.gmra.mxu0 %v2179
      %v2338 = vpop.f32.mrf.mxu0
      %v2339 = vadd.f32 %v2050, %v2338
      %v2340 = vpop.f32.mrf.mxu0
      %2341 = vmatprep.mubr.f32.mxu0 0.0
      %2342 = vmatmul.mubr.f32.gmra.mxu0 %v2182
      %v2343 = vpop.f32.mrf.mxu0
      %v2344 = vadd.f32 %v2055, %v2343
      %v2345 = vpop.f32.mrf.mxu0
      %2346 = vmatprep.mubr.f32.mxu0 0.0
      %2347 = vmatmul.mubr.f32.gmra.mxu0 %v2185
      %v2348 = vpop.f32.mrf.mxu0
      %v2349 = vadd.f32 %v2060, %v2348
      %v2350 = vpop.f32.mrf.mxu0
      %2351 = vmatprep.mubr.f32.mxu0 0.0
      %2352 = vmatmul.mubr.f32.gmra.mxu0 %v2188
      %v2353 = vpop.f32.mrf.mxu0
      %v2354 = vadd.f32 %v2065, %v2353
      %v2355 = vpop.f32.mrf.mxu0
      %2356 = vmatprep.mubr.f32.mxu0 0.0
      %2357 = vmatmul.mubr.f32.gmra.mxu0 %v2191
      %v2358 = vpop.f32.mrf.mxu0
      %v2359 = vadd.f32 %v2070, %v2358
      %v2360 = vpop.f32.mrf.mxu0
      %2361 = vmatprep.mubr.f32.mxu0 0.0
      %2362 = vmatmul.mubr.f32.gmra.mxu0 %v2194
      %v2363 = vpop.f32.mrf.mxu0
      %v2364 = vadd.f32 %v2075, %v2363
      %v2365 = vpop.f32.mrf.mxu0
      %2366 = vmatprep.mubr.f32.mxu0 0.0
      %2367 = vmatmul.mubr.f32.gmra.mxu0 %v2197
      %v2368 = vpop.f32.mrf.mxu0
      %v2369 = vadd.f32 %v2080, %v2368
      %v2370 = vpop.f32.mrf.mxu0
      %2371 = vmatprep.mubr.f32.mxu0 0.0
      %2372 = vmatmul.mubr.f32.gmra.mxu0 %v2200
      %v2373 = vpop.f32.mrf.mxu0
      %v2374 = vadd.f32 %v2085, %v2373
      %v2375 = vpop.f32.mrf.mxu0
      %2376 = vmatprep.mubr.f32.mxu0 0.0
      %2377 = vmatmul.mubr.f32.gmra.mxu0 %v2203
      %v2378 = vpop.f32.mrf.mxu0
      %v2379 = vadd.f32 %v2090, %v2378
      %v2380 = vpop.f32.mrf.mxu0
      %2381 = vmatprep.mubr.f32.mxu0 0.0
      %2382 = vmatmul.mubr.f32.gmra.mxu0 %v2206
      %v2383 = vpop.f32.mrf.mxu0
      %v2384 = vadd.f32 %v2095, %v2383
      %v2385 = vpop.f32.mrf.mxu0
      %2386 = vmatprep.mubr.f32.mxu0 0.0
      %2387 = vmatmul.mubr.f32.gmra.mxu0 %v2209
      %v2388 = vpop.f32.mrf.mxu0
      %v2389 = vadd.f32 %v2100, %v2388
      %v2390 = vpop.f32.mrf.mxu0
      %2391 = vmatprep.mubr.f32.mxu0 0.0
      %2392 = vmatmul.mubr.f32.gmra.mxu0 %v2212
      %v2393 = vpop.f32.mrf.mxu0
      %v2394 = vadd.f32 %v2105, %v2393
      %v2395 = vpop.f32.mrf.mxu0
      %2396 = vmatprep.mubr.f32.mxu0 0.0
      %2397 = vmatmul.mubr.f32.gmra.mxu0 %v2215
      %v2398 = vpop.f32.mrf.mxu0
      %v2399 = vadd.f32 %v2110, %v2398
      %v2400 = vpop.f32.mrf.mxu0
      %2401 = vmatprep.mubr.f32.mxu0 0.0
      %2402 = vmatmul.mubr.f32.gmra.mxu0 %v2218
      %v2403 = vpop.f32.mrf.mxu0
      %v2404 = vadd.f32 %v2115, %v2403
      %v2405 = vpop.f32.mrf.mxu0
      %2406 = vmatprep.mubr.f32.mxu0 0.0
      %2407 = vmatmul.mubr.f32.gmra.mxu0 %v2221
      %v2408 = vpop.f32.mrf.mxu0
      %v2409 = vadd.f32 %v2120, %v2408
      %v2410 = vpop.f32.mrf.mxu0
      %2411 = vmatprep.mubr.f32.mxu0 0.0
      %2412 = vmatmul.mubr.f32.gmra.mxu0 %v2224
      %v2413 = vpop.f32.mrf.mxu0
      %v2414 = vadd.f32 %v2125, %v2413
      %v2415 = vpop.f32.mrf.mxu0
      %2416 = vmatprep.mubr.f32.mxu0 0.0
      %2417 = vmatmul.mubr.f32.gmra.mxu0 %v2227
      %v2418 = vpop.f32.mrf.mxu0
      %v2419 = vadd.f32 %v2130, %v2418
      %v2420 = vpop.f32.mrf.mxu0
      %2421 = vmatprep.mubr.f32.mxu0 0.0
      %2422 = vmatmul.mubr.f32.gmra.mxu0 %v2230
      %v2423 = vpop.f32.mrf.mxu0
      %v2424 = vadd.f32 %v2135, %v2423
      %v2425 = vpop.f32.mrf.mxu0
      %2426 = vmatprep.mubr.f32.mxu0 0.0
      %2427 = vmatmul.mubr.f32.gmra.mxu0 %v2233
      %v2428 = vpop.f32.mrf.mxu0
      %v2429 = vadd.f32 %v2140, %v2428
      %v2430 = vpop.f32.mrf.mxu0
      %2431 = vmatprep.mubr.f32.mxu0 0.0
      %2432 = vmatmul.mubr.f32.gmra.mxu0 %v2236
      %v2433 = vpop.f32.mrf.mxu0
      %v2434 = vadd.f32 %v2145, %v2433
      %v2435 = vpop.f32.mrf.mxu0
      %2436 = vmatprep.mubr.f32.mxu0 0.0
      %2437 = vmatmul.mubr.f32.gmra.mxu0 %v2239
      %v2438 = vpop.f32.mrf.mxu0
      %v2439 = vadd.f32 %v2150, %v2438
      %v2440 = vpop.f32.mrf.mxu0
      %2441 = vmatprep.mubr.f32.mxu0 0.0
      %2442 = vmatmul.mubr.f32.gmra.mxu0 %v2242
      %v2443 = vpop.f32.mrf.mxu0
      %v2444 = vadd.f32 %v2155, %v2443
      %v2445 = vpop.f32.mrf.mxu0
      %2446 = vmatprep.mubr.f32.mxu0 0.0
      %2447 = vmatmul.mubr.f32.gmra.mxu0 %v2245
      %v2448 = vpop.f32.mrf.mxu0
      %v2449 = vadd.f32 %v2160, %v2448
      %v2450 = vpop.f32.mrf.mxu0
      %2451 = vdwg.mxu0
      %v2453 = vsel %vm1873, %v1801, 0
      %v2456 = vsel %vm1873, %v1802, 0
      %v2459 = vsel %vm1873, %v1803, 0
      %v2462 = vsel %vm1873, %v1804, 0
      %v2465 = vsel %vm1873, %v1805, 0
      %v2468 = vsel %vm1873, %v1806, 0
      %v2471 = vsel %vm1873, %v1807, 0
      %v2474 = vsel %vm1873, %v1808, 0
      %v2477 = vsel %vm1873, %v1809, 0
      %v2480 = vsel %vm1873, %v1810, 0
      %v2483 = vsel %vm1873, %v1811, 0
      %v2486 = vsel %vm1873, %v1812, 0
      %v2489 = vsel %vm1873, %v1813, 0
      %v2492 = vsel %vm1873, %v1814, 0
      %v2495 = vsel %vm1873, %v1815, 0
      %v2498 = vsel %vm1873, %v1816, 0
      %v2501 = vsel %vm1873, %v1817, 0
      %v2504 = vsel %vm1873, %v1818, 0
      %v2507 = vsel %vm1873, %v1819, 0
      %v2510 = vsel %vm1873, %v1820, 0
      %v2513 = vsel %vm1873, %v1821, 0
      %v2516 = vsel %vm1873, %v1822, 0
      %v2519 = vsel %vm1873, %v1823, 0
      %v2522 = vsel %vm1873, %v1824, 0
      %v2525 = vsel %vm1873, %v1825, 0
      %v2528 = vsel %vm1873, %v1826, 0
      %v2531 = vsel %vm1873, %v1827, 0
      %v2534 = vsel %vm1873, %v1828, 0
      %2536 = vmatprep.subr.mxu0 0.0
      %2537 = vmatpush1.msra.mxu0 0.0
      %2538 = vmatprep.subr.mxu0 0.0
      %2539 = vmatpush1.msra.mxu0 0.0
      %2540 = vmatprep.subr.mxu0 0.0
      %2541 = vmatpush1.msra.mxu0 0.0
      %2542 = vmatprep.subr.mxu0 0.0
      %2543 = vmatpush1.msra.mxu0 0.0
      %2544 = vmatprep.subr.mxu0 0.0
      %2545 = vmatpush1.msra.mxu0 0.0
      %2546 = vmatprep.subr.mxu0 0.0
      %2547 = vmatpush1.msra.mxu0 0.0
      %2548 = vmatprep.subr.mxu0 0.0
      %2549 = vmatpush1.msra.mxu0 0.0
      %2550 = vmatprep.subr.mxu0 0.0
      %2551 = vmatpush1.msra.mxu0 0.0
      %2552 = vmatprep.subr.mxu0 0.0
      %2553 = vmatpush1.msra.mxu0 0.0
      %2554 = vmatprep.subr.mxu0 0.0
      %2555 = vmatpush1.msra.mxu0 0.0
      %2556 = vmatprep.subr.mxu0 0.0
      %2557 = vmatpush1.msra.mxu0 0.0
      %2558 = vmatprep.subr.mxu0 0.0
      %2559 = vmatpush1.msra.mxu0 0.0
      %2560 = vmatprep.subr.mxu0 0.0
      %2561 = vmatpush1.msra.mxu0 0.0
      %2562 = vmatprep.subr.mxu0 0.0
      %2563 = vmatpush1.msra.mxu0 0.0
      %2564 = vmatprep.subr.mxu0 0.0
      %2565 = vmatpush1.msra.mxu0 %v1870
      %2566 = vmatprep.subr.mxu0 0.0
      %2567 = vmatpush1.msra.mxu0 %v1869
      %2568 = vmatprep.subr.mxu0 0.0
      %2569 = vmatpush2.msra.mxu0 0.0
      %2570 = vmatprep.subr.mxu0 0.0
      %2571 = vmatpush2.msra.mxu0 0.0
      %2572 = vmatprep.subr.mxu0 0.0
      %2573 = vmatpush2.msra.mxu0 0.0
      %2574 = vmatprep.subr.mxu0 0.0
      %2575 = vmatpush2.msra.mxu0 0.0
      %2576 = vmatprep.subr.mxu0 0.0
      %2577 = vmatpush2.msra.mxu0 0.0
      %2578 = vmatprep.subr.mxu0 0.0
      %2579 = vmatpush2.msra.mxu0 0.0
      %2580 = vmatprep.subr.mxu0 0.0
      %2581 = vmatpush2.msra.mxu0 0.0
      %2582 = vmatprep.subr.mxu0 0.0
      %2583 = vmatpush2.msra.mxu0 0.0
      %2584 = vmatprep.subr.mxu0 0.0
      %2585 = vmatpush2.msra.mxu0 0.0
      %2586 = vmatprep.subr.mxu0 0.0
      %2587 = vmatpush2.msra.mxu0 0.0
      %2588 = vmatprep.subr.mxu0 0.0
      %2589 = vmatpush2.msra.mxu0 0.0
      %2590 = vmatprep.subr.mxu0 0.0
      %2591 = vmatpush2.msra.mxu0 0.0
      %2592 = vmatprep.subr.mxu0 0.0
      %2593 = vmatpush2.msra.mxu0 0.0
      %2594 = vmatprep.subr.mxu0 0.0
      %2595 = vmatpush2.msra.mxu0 0.0
      %2596 = vmatprep.subr.mxu0 0.0
      %2597 = vmatpush2.msra.mxu0 0.0
      %2598 = vmatprep.subr.mxu0 0.0
      %2599 = vmatpush2.msra.mxu0 0.0
      %2600 = vmatprep.mubr.f32.mxu0 0.0
      %2601 = vmatmul.mubr.f32.gmra.mxu0 %v2453
      %v2602 = vpop.f32.mrf.mxu0
      %v2603 = vadd.f32 0.0, %v2602
      %v2604 = vpop.f32.mrf.mxu0
      %2605 = vmatprep.mubr.f32.mxu0 0.0
      %2606 = vmatmul.mubr.f32.gmra.mxu0 %v2456
      %v2607 = vpop.f32.mrf.mxu0
      %v2608 = vadd.f32 0.0, %v2607
      %v2609 = vpop.f32.mrf.mxu0
      %2610 = vmatprep.mubr.f32.mxu0 0.0
      %2611 = vmatmul.mubr.f32.gmra.mxu0 %v2459
      %v2612 = vpop.f32.mrf.mxu0
      %v2613 = vadd.f32 0.0, %v2612
      %v2614 = vpop.f32.mrf.mxu0
      %2615 = vmatprep.mubr.f32.mxu0 0.0
      %2616 = vmatmul.mubr.f32.gmra.mxu0 %v2462
      %v2617 = vpop.f32.mrf.mxu0
      %v2618 = vadd.f32 0.0, %v2617
      %v2619 = vpop.f32.mrf.mxu0
      %2620 = vmatprep.mubr.f32.mxu0 0.0
      %2621 = vmatmul.mubr.f32.gmra.mxu0 %v2465
      %v2622 = vpop.f32.mrf.mxu0
      %v2623 = vadd.f32 0.0, %v2622
      %v2624 = vpop.f32.mrf.mxu0
      %2625 = vmatprep.mubr.f32.mxu0 0.0
      %2626 = vmatmul.mubr.f32.gmra.mxu0 %v2468
      %v2627 = vpop.f32.mrf.mxu0
      %v2628 = vadd.f32 0.0, %v2627
      %v2629 = vpop.f32.mrf.mxu0
      %2630 = vmatprep.mubr.f32.mxu0 0.0
      %2631 = vmatmul.mubr.f32.gmra.mxu0 %v2471
      %v2632 = vpop.f32.mrf.mxu0
      %v2633 = vadd.f32 0.0, %v2632
      %v2634 = vpop.f32.mrf.mxu0
      %2635 = vmatprep.mubr.f32.mxu0 0.0
      %2636 = vmatmul.mubr.f32.gmra.mxu0 %v2474
      %v2637 = vpop.f32.mrf.mxu0
      %v2638 = vadd.f32 0.0, %v2637
      %v2639 = vpop.f32.mrf.mxu0
      %2640 = vmatprep.mubr.f32.mxu0 0.0
      %2641 = vmatmul.mubr.f32.gmra.mxu0 %v2477
      %v2642 = vpop.f32.mrf.mxu0
      %v2643 = vadd.f32 0.0, %v2642
      %v2644 = vpop.f32.mrf.mxu0
      %2645 = vmatprep.mubr.f32.mxu0 0.0
      %2646 = vmatmul.mubr.f32.gmra.mxu0 %v2480
      %v2647 = vpop.f32.mrf.mxu0
      %v2648 = vadd.f32 0.0, %v2647
      %v2649 = vpop.f32.mrf.mxu0
      %2650 = vmatprep.mubr.f32.mxu0 0.0
      %2651 = vmatmul.mubr.f32.gmra.mxu0 %v2483
      %v2652 = vpop.f32.mrf.mxu0
      %v2653 = vadd.f32 0.0, %v2652
      %v2654 = vpop.f32.mrf.mxu0
      %2655 = vmatprep.mubr.f32.mxu0 0.0
      %2656 = vmatmul.mubr.f32.gmra.mxu0 %v2486
      %v2657 = vpop.f32.mrf.mxu0
      %v2658 = vadd.f32 0.0, %v2657
      %v2659 = vpop.f32.mrf.mxu0
      %2660 = vmatprep.mubr.f32.mxu0 0.0
      %2661 = vmatmul.mubr.f32.gmra.mxu0 %v2489
      %v2662 = vpop.f32.mrf.mxu0
      %v2663 = vadd.f32 0.0, %v2662
      %v2664 = vpop.f32.mrf.mxu0
      %2665 = vmatprep.mubr.f32.mxu0 0.0
      %2666 = vmatmul.mubr.f32.gmra.mxu0 %v2492
      %v2667 = vpop.f32.mrf.mxu0
      %v2668 = vadd.f32 0.0, %v2667
      %v2669 = vpop.f32.mrf.mxu0
      %2670 = vmatprep.mubr.f32.mxu0 0.0
      %2671 = vmatmul.mubr.f32.gmra.mxu0 %v2495
      %v2672 = vpop.f32.mrf.mxu0
      %v2673 = vadd.f32 0.0, %v2672
      %v2674 = vpop.f32.mrf.mxu0
      %2675 = vmatprep.mubr.f32.mxu0 0.0
      %2676 = vmatmul.mubr.f32.gmra.mxu0 %v2498
      %v2677 = vpop.f32.mrf.mxu0
      %v2678 = vadd.f32 0.0, %v2677
      %v2679 = vpop.f32.mrf.mxu0
      %2680 = vmatprep.mubr.f32.mxu0 0.0
      %2681 = vmatmul.mubr.f32.gmra.mxu0 %v2501
      %v2682 = vpop.f32.mrf.mxu0
      %v2683 = vadd.f32 0.0, %v2682
      %v2684 = vpop.f32.mrf.mxu0
      %2685 = vmatprep.mubr.f32.mxu0 0.0
      %2686 = vmatmul.mubr.f32.gmra.mxu0 %v2504
      %v2687 = vpop.f32.mrf.mxu0
      %v2688 = vadd.f32 0.0, %v2687
      %v2689 = vpop.f32.mrf.mxu0
      %2690 = vmatprep.mubr.f32.mxu0 0.0
      %2691 = vmatmul.mubr.f32.gmra.mxu0 %v2507
      %v2692 = vpop.f32.mrf.mxu0
      %v2693 = vadd.f32 0.0, %v2692
      %v2694 = vpop.f32.mrf.mxu0
      %2695 = vmatprep.mubr.f32.mxu0 0.0
      %2696 = vmatmul.mubr.f32.gmra.mxu0 %v2510
      %v2697 = vpop.f32.mrf.mxu0
      %v2698 = vadd.f32 0.0, %v2697
      %v2699 = vpop.f32.mrf.mxu0
      %2700 = vmatprep.mubr.f32.mxu0 0.0
      %2701 = vmatmul.mubr.f32.gmra.mxu0 %v2513
      %v2702 = vpop.f32.mrf.mxu0
      %v2703 = vadd.f32 0.0, %v2702
      %v2704 = vpop.f32.mrf.mxu0
      %2705 = vmatprep.mubr.f32.mxu0 0.0
      %2706 = vmatmul.mubr.f32.gmra.mxu0 %v2516
      %v2707 = vpop.f32.mrf.mxu0
      %v2708 = vadd.f32 0.0, %v2707
      %v2709 = vpop.f32.mrf.mxu0
      %2710 = vmatprep.mubr.f32.mxu0 0.0
      %2711 = vmatmul.mubr.f32.gmra.mxu0 %v2519
      %v2712 = vpop.f32.mrf.mxu0
      %v2713 = vadd.f32 0.0, %v2712
      %v2714 = vpop.f32.mrf.mxu0
      %2715 = vmatprep.mubr.f32.mxu0 0.0
      %2716 = vmatmul.mubr.f32.gmra.mxu0 %v2522
      %v2717 = vpop.f32.mrf.mxu0
      %v2718 = vadd.f32 0.0, %v2717
      %v2719 = vpop.f32.mrf.mxu0
      %2720 = vmatprep.mubr.f32.mxu0 0.0
      %2721 = vmatmul.mubr.f32.gmra.mxu0 %v2525
      %v2722 = vpop.f32.mrf.mxu0
      %v2723 = vadd.f32 0.0, %v2722
      %v2724 = vpop.f32.mrf.mxu0
      %2725 = vmatprep.mubr.f32.mxu0 0.0
      %2726 = vmatmul.mubr.f32.gmra.mxu0 %v2528
      %v2727 = vpop.f32.mrf.mxu0
      %v2728 = vadd.f32 0.0, %v2727
      %v2729 = vpop.f32.mrf.mxu0
      %2730 = vmatprep.mubr.f32.mxu0 0.0
      %2731 = vmatmul.mubr.f32.gmra.mxu0 %v2531
      %v2732 = vpop.f32.mrf.mxu0
      %v2733 = vadd.f32 0.0, %v2732
      %v2734 = vpop.f32.mrf.mxu0
      %2735 = vmatprep.mubr.f32.mxu0 0.0
      %2736 = vmatmul.mubr.f32.gmra.mxu0 %v2534
      %v2737 = vpop.f32.mrf.mxu0
      %v2738 = vadd.f32 0.0, %v2737
      %v2739 = vpop.f32.mrf.mxu0
      %2740 = vdwg.mxu0
      %v2741 = vadd.f32 %v2314, %v2603
      %v2742 = vadd.f32 %v2319, %v2608
      %v2743 = vadd.f32 %v2324, %v2613
      %v2744 = vadd.f32 %v2329, %v2618
      %v2745 = vadd.f32 %v2334, %v2623
      %v2746 = vadd.f32 %v2339, %v2628
      %v2747 = vadd.f32 %v2344, %v2633
      %v2748 = vadd.f32 %v2349, %v2638
      %v2749 = vadd.f32 %v2354, %v2643
      %v2750 = vadd.f32 %v2359, %v2648
      %v2751 = vadd.f32 %v2364, %v2653
      %v2752 = vadd.f32 %v2369, %v2658
      %v2753 = vadd.f32 %v2374, %v2663
      %v2754 = vadd.f32 %v2379, %v2668
      %v2755 = vadd.f32 %v2384, %v2673
      %v2756 = vadd.f32 %v2389, %v2678
      %v2757 = vadd.f32 %v2394, %v2683
      %v2758 = vadd.f32 %v2399, %v2688
      %v2759 = vadd.f32 %v2404, %v2693
      %v2760 = vadd.f32 %v2409, %v2698
      %v2761 = vadd.f32 %v2414, %v2703
      %v2762 = vadd.f32 %v2419, %v2708
      %v2763 = vadd.f32 %v2424, %v2713
      %v2764 = vadd.f32 %v2429, %v2718
      %v2765 = vadd.f32 %v2434, %v2723
      %v2766 = vadd.f32 %v2439, %v2728
      %v2767 = vadd.f32 %v2444, %v2733
      %v2768 = vadd.f32 %v2449, %v2738
      %v2770 = vsel %vm1873, %v1829, 0
      %v2773 = vsel %vm1873, %v1830, 0
      %v2776 = vsel %vm1873, %v1831, 0
      %v2779 = vsel %vm1873, %v1832, 0
      %v2782 = vsel %vm1873, %v1833, 0
      %v2785 = vsel %vm1873, %v1834, 0
      %v2788 = vsel %vm1873, %v1835, 0
      %v2791 = vsel %vm1873, %v1836, 0
      %v2794 = vsel %vm1873, %v1837, 0
      %v2797 = vsel %vm1873, %v1838, 0
      %v2800 = vsel %vm1873, %v1839, 0
      %v2803 = vsel %vm1873, %v1840, 0
      %v2806 = vsel %vm1873, %v1841, 0
      %v2809 = vsel %vm1873, %v1842, 0
      %v2812 = vsel %vm1873, %v1843, 0
      %v2815 = vsel %vm1873, %v1844, 0
      %v2818 = vsel %vm1873, %v1845, 0
      %v2821 = vsel %vm1873, %v1846, 0
      %v2824 = vsel %vm1873, %v1847, 0
      %v2827 = vsel %vm1873, %v1848, 0
      %v2830 = vsel %vm1873, %v1849, 0
      %v2833 = vsel %vm1873, %v1850, 0
      %v2836 = vsel %vm1873, %v1851, 0
      %v2839 = vsel %vm1873, %v1852, 0
      %v2842 = vsel %vm1873, %v1853, 0
      %v2845 = vsel %vm1873, %v1854, 0
      %v2848 = vsel %vm1873, %v1855, 0
      %v2851 = vsel %vm1873, %v1856, 0
      %2853 = vmatprep.subr.mxu0 0.0
      %2854 = vmatpush1.msra.mxu0 0.0
      %2855 = vmatprep.subr.mxu0 0.0
      %2856 = vmatpush1.msra.mxu0 0.0
      %2857 = vmatprep.subr.mxu0 0.0
      %2858 = vmatpush1.msra.mxu0 0.0
      %2859 = vmatprep.subr.mxu0 0.0
      %2860 = vmatpush1.msra.mxu0 0.0
      %2861 = vmatprep.subr.mxu0 0.0
      %2862 = vmatpush1.msra.mxu0 0.0
      %2863 = vmatprep.subr.mxu0 0.0
      %2864 = vmatpush1.msra.mxu0 0.0
      %2865 = vmatprep.subr.mxu0 0.0
      %2866 = vmatpush1.msra.mxu0 0.0
      %2867 = vmatprep.subr.mxu0 0.0
      %2868 = vmatpush1.msra.mxu0 0.0
      %2869 = vmatprep.subr.mxu0 0.0
      %2870 = vmatpush1.msra.mxu0 0.0
      %2871 = vmatprep.subr.mxu0 0.0
      %2872 = vmatpush1.msra.mxu0 0.0
      %2873 = vmatprep.subr.mxu0 0.0
      %2874 = vmatpush1.msra.mxu0 0.0
      %2875 = vmatprep.subr.mxu0 0.0
      %2876 = vmatpush1.msra.mxu0 0.0
      %2877 = vmatprep.subr.mxu0 0.0
      %2878 = vmatpush1.msra.mxu0 0.0
      %2879 = vmatprep.subr.mxu0 0.0
      %2880 = vmatpush1.msra.mxu0 0.0
      %2881 = vmatprep.subr.mxu0 0.0
      %2882 = vmatpush1.msra.mxu0 %v1872
      %2883 = vmatprep.subr.mxu0 0.0
      %2884 = vmatpush1.msra.mxu0 %v1871
      %2885 = vmatprep.subr.mxu0 0.0
      %2886 = vmatpush2.msra.mxu0 0.0
      %2887 = vmatprep.subr.mxu0 0.0
      %2888 = vmatpush2.msra.mxu0 0.0
      %2889 = vmatprep.subr.mxu0 0.0
      %2890 = vmatpush2.msra.mxu0 0.0
      %2891 = vmatprep.subr.mxu0 0.0
      %2892 = vmatpush2.msra.mxu0 0.0
      %2893 = vmatprep.subr.mxu0 0.0
      %2894 = vmatpush2.msra.mxu0 0.0
      %2895 = vmatprep.subr.mxu0 0.0
      %2896 = vmatpush2.msra.mxu0 0.0
      %2897 = vmatprep.subr.mxu0 0.0
      %2898 = vmatpush2.msra.mxu0 0.0
      %2899 = vmatprep.subr.mxu0 0.0
      %2900 = vmatpush2.msra.mxu0 0.0
      %2901 = vmatprep.subr.mxu0 0.0
      %2902 = vmatpush2.msra.mxu0 0.0
      %2903 = vmatprep.subr.mxu0 0.0
      %2904 = vmatpush2.msra.mxu0 0.0
      %2905 = vmatprep.subr.mxu0 0.0
      %2906 = vmatpush2.msra.mxu0 0.0
      %2907 = vmatprep.subr.mxu0 0.0
      %2908 = vmatpush2.msra.mxu0 0.0
      %2909 = vmatprep.subr.mxu0 0.0
      %2910 = vmatpush2.msra.mxu0 0.0
      %2911 = vmatprep.subr.mxu0 0.0
      %2912 = vmatpush2.msra.mxu0 0.0
      %2913 = vmatprep.subr.mxu0 0.0
      %2914 = vmatpush2.msra.mxu0 0.0
      %2915 = vmatprep.subr.mxu0 0.0
      %2916 = vmatpush2.msra.mxu0 0.0
      %2917 = vmatprep.mubr.f32.mxu0 0.0
      %2918 = vmatmul.mubr.f32.gmra.mxu0 %v2770
      %v2919 = vpop.f32.mrf.mxu0
      %v2920 = vadd.f32 0.0, %v2919
      %v2921 = vpop.f32.mrf.mxu0
      %2922 = vmatprep.mubr.f32.mxu0 0.0
      %2923 = vmatmul.mubr.f32.gmra.mxu0 %v2773
      %v2924 = vpop.f32.mrf.mxu0
      %v2925 = vadd.f32 0.0, %v2924
      %v2926 = vpop.f32.mrf.mxu0
      %2927 = vmatprep.mubr.f32.mxu0 0.0
      %2928 = vmatmul.mubr.f32.gmra.mxu0 %v2776
      %v2929 = vpop.f32.mrf.mxu0
      %v2930 = vadd.f32 0.0, %v2929
      %v2931 = vpop.f32.mrf.mxu0
      %2932 = vmatprep.mubr.f32.mxu0 0.0
      %2933 = vmatmul.mubr.f32.gmra.mxu0 %v2779
      %v2934 = vpop.f32.mrf.mxu0
      %v2935 = vadd.f32 0.0, %v2934
      %v2936 = vpop.f32.mrf.mxu0
      %2937 = vmatprep.mubr.f32.mxu0 0.0
      %2938 = vmatmul.mubr.f32.gmra.mxu0 %v2782
      %v2939 = vpop.f32.mrf.mxu0
      %v2940 = vadd.f32 0.0, %v2939
      %v2941 = vpop.f32.mrf.mxu0
      %2942 = vmatprep.mubr.f32.mxu0 0.0
      %2943 = vmatmul.mubr.f32.gmra.mxu0 %v2785
      %v2944 = vpop.f32.mrf.mxu0
      %v2945 = vadd.f32 0.0, %v2944
      %v2946 = vpop.f32.mrf.mxu0
      %2947 = vmatprep.mubr.f32.mxu0 0.0
      %2948 = vmatmul.mubr.f32.gmra.mxu0 %v2788
      %v2949 = vpop.f32.mrf.mxu0
      %v2950 = vadd.f32 0.0, %v2949
      %v2951 = vpop.f32.mrf.mxu0
      %2952 = vmatprep.mubr.f32.mxu0 0.0
      %2953 = vmatmul.mubr.f32.gmra.mxu0 %v2791
      %v2954 = vpop.f32.mrf.mxu0
      %v2955 = vadd.f32 0.0, %v2954
      %v2956 = vpop.f32.mrf.mxu0
      %2957 = vmatprep.mubr.f32.mxu0 0.0
      %2958 = vmatmul.mubr.f32.gmra.mxu0 %v2794
      %v2959 = vpop.f32.mrf.mxu0
      %v2960 = vadd.f32 0.0, %v2959
      %v2961 = vpop.f32.mrf.mxu0
      %2962 = vmatprep.mubr.f32.mxu0 0.0
      %2963 = vmatmul.mubr.f32.gmra.mxu0 %v2797
      %v2964 = vpop.f32.mrf.mxu0
      %v2965 = vadd.f32 0.0, %v2964
      %v2966 = vpop.f32.mrf.mxu0
      %2967 = vmatprep.mubr.f32.mxu0 0.0
      %2968 = vmatmul.mubr.f32.gmra.mxu0 %v2800
      %v2969 = vpop.f32.mrf.mxu0
      %v2970 = vadd.f32 0.0, %v2969
      %v2971 = vpop.f32.mrf.mxu0
      %2972 = vmatprep.mubr.f32.mxu0 0.0
      %2973 = vmatmul.mubr.f32.gmra.mxu0 %v2803
      %v2974 = vpop.f32.mrf.mxu0
      %v2975 = vadd.f32 0.0, %v2974
      %v2976 = vpop.f32.mrf.mxu0
      %2977 = vmatprep.mubr.f32.mxu0 0.0
      %2978 = vmatmul.mubr.f32.gmra.mxu0 %v2806
      %v2979 = vpop.f32.mrf.mxu0
      %v2980 = vadd.f32 0.0, %v2979
      %v2981 = vpop.f32.mrf.mxu0
      %2982 = vmatprep.mubr.f32.mxu0 0.0
      %2983 = vmatmul.mubr.f32.gmra.mxu0 %v2809
      %v2984 = vpop.f32.mrf.mxu0
      %v2985 = vadd.f32 0.0, %v2984
      %v2986 = vpop.f32.mrf.mxu0
      %2987 = vmatprep.mubr.f32.mxu0 0.0
      %2988 = vmatmul.mubr.f32.gmra.mxu0 %v2812
      %v2989 = vpop.f32.mrf.mxu0
      %v2990 = vadd.f32 0.0, %v2989
      %v2991 = vpop.f32.mrf.mxu0
      %2992 = vmatprep.mubr.f32.mxu0 0.0
      %2993 = vmatmul.mubr.f32.gmra.mxu0 %v2815
      %v2994 = vpop.f32.mrf.mxu0
      %v2995 = vadd.f32 0.0, %v2994
      %v2996 = vpop.f32.mrf.mxu0
      %2997 = vmatprep.mubr.f32.mxu0 0.0
      %2998 = vmatmul.mubr.f32.gmra.mxu0 %v2818
      %v2999 = vpop.f32.mrf.mxu0
      %v3000 = vadd.f32 0.0, %v2999
      %v3001 = vpop.f32.mrf.mxu0
      %3002 = vmatprep.mubr.f32.mxu0 0.0
      %3003 = vmatmul.mubr.f32.gmra.mxu0 %v2821
      %v3004 = vpop.f32.mrf.mxu0
      %v3005 = vadd.f32 0.0, %v3004
      %v3006 = vpop.f32.mrf.mxu0
      %3007 = vmatprep.mubr.f32.mxu0 0.0
      %3008 = vmatmul.mubr.f32.gmra.mxu0 %v2824
      %v3009 = vpop.f32.mrf.mxu0
      %v3010 = vadd.f32 0.0, %v3009
      %v3011 = vpop.f32.mrf.mxu0
      %3012 = vmatprep.mubr.f32.mxu0 0.0
      %3013 = vmatmul.mubr.f32.gmra.mxu0 %v2827
      %v3014 = vpop.f32.mrf.mxu0
      %v3015 = vadd.f32 0.0, %v3014
      %v3016 = vpop.f32.mrf.mxu0
      %3017 = vmatprep.mubr.f32.mxu0 0.0
      %3018 = vmatmul.mubr.f32.gmra.mxu0 %v2830
      %v3019 = vpop.f32.mrf.mxu0
      %v3020 = vadd.f32 0.0, %v3019
      %v3021 = vpop.f32.mrf.mxu0
      %3022 = vmatprep.mubr.f32.mxu0 0.0
      %3023 = vmatmul.mubr.f32.gmra.mxu0 %v2833
      %v3024 = vpop.f32.mrf.mxu0
      %v3025 = vadd.f32 0.0, %v3024
      %v3026 = vpop.f32.mrf.mxu0
      %3027 = vmatprep.mubr.f32.mxu0 0.0
      %3028 = vmatmul.mubr.f32.gmra.mxu0 %v2836
      %v3029 = vpop.f32.mrf.mxu0
      %v3030 = vadd.f32 0.0, %v3029
      %v3031 = vpop.f32.mrf.mxu0
      %3032 = vmatprep.mubr.f32.mxu0 0.0
      %3033 = vmatmul.mubr.f32.gmra.mxu0 %v2839
      %v3034 = vpop.f32.mrf.mxu0
      %v3035 = vadd.f32 0.0, %v3034
      %v3036 = vpop.f32.mrf.mxu0
      %3037 = vmatprep.mubr.f32.mxu0 0.0
      %3038 = vmatmul.mubr.f32.gmra.mxu0 %v2842
      %v3039 = vpop.f32.mrf.mxu0
      %v3040 = vadd.f32 0.0, %v3039
      %v3041 = vpop.f32.mrf.mxu0
      %3042 = vmatprep.mubr.f32.mxu0 0.0
      %3043 = vmatmul.mubr.f32.gmra.mxu0 %v2845
      %v3044 = vpop.f32.mrf.mxu0
      %v3045 = vadd.f32 0.0, %v3044
      %v3046 = vpop.f32.mrf.mxu0
      %3047 = vmatprep.mubr.f32.mxu0 0.0
      %3048 = vmatmul.mubr.f32.gmra.mxu0 %v2848
      %v3049 = vpop.f32.mrf.mxu0
      %v3050 = vadd.f32 0.0, %v3049
      %v3051 = vpop.f32.mrf.mxu0
      %3052 = vmatprep.mubr.f32.mxu0 0.0
      %3053 = vmatmul.mubr.f32.gmra.mxu0 %v2851
      %v3054 = vpop.f32.mrf.mxu0
      %v3055 = vadd.f32 0.0, %v3054
      %v3056 = vpop.f32.mrf.mxu0
      %3057 = vdwg.mxu0
      %v3058 = vadd.f32 %v2741, %v2920
      %v3059 = vadd.f32 %v2742, %v2925
      %v3060 = vadd.f32 %v2743, %v2930
      %v3061 = vadd.f32 %v2744, %v2935
      %v3062 = vadd.f32 %v2745, %v2940
      %v3063 = vadd.f32 %v2746, %v2945
      %v3064 = vadd.f32 %v2747, %v2950
      %v3065 = vadd.f32 %v2748, %v2955
      %v3066 = vadd.f32 %v2749, %v2960
      %v3067 = vadd.f32 %v2750, %v2965
      %v3068 = vadd.f32 %v2751, %v2970
      %v3069 = vadd.f32 %v2752, %v2975
      %v3070 = vadd.f32 %v2753, %v2980
      %v3071 = vadd.f32 %v2754, %v2985
      %v3072 = vadd.f32 %v2755, %v2990
      %v3073 = vadd.f32 %v2756, %v2995
      %v3074 = vadd.f32 %v2757, %v3000
      %v3075 = vadd.f32 %v2758, %v3005
      %v3076 = vadd.f32 %v2759, %v3010
      %v3077 = vadd.f32 %v2760, %v3015
      %v3078 = vadd.f32 %v2761, %v3020
      %v3079 = vadd.f32 %v2762, %v3025
      %v3080 = vadd.f32 %v2763, %v3030
      %v3081 = vadd.f32 %v2764, %v3035
      %v3082 = vadd.f32 %v2765, %v3040
      %v3083 = vadd.f32 %v2766, %v3045
      %v3084 = vadd.f32 %v2767, %v3050
      %v3085 = vadd.f32 %v2768, %v3055
      %v3086 = vld [vmem:[%s6] sm:$0xf]
      %v3087 = vld [vmem:[%s7] sm:$0xff]
      %v3088 = vld [vmem:[%s7 + $0x8] sm:$0xff]
      %v3089 = vld [vmem:[%s7 + $0x10] sm:$0xff]
      %v3090 = vld [vmem:[%s7 + $0x18] sm:$0xff]
      %v3091 = vld [vmem:[%s7 + $0x20] sm:$0xff]
      %v3092 = vld [vmem:[%s7 + $0x28] sm:$0xff]
      %v3093 = vld [vmem:[%s7 + $0x30] sm:$0xff]
      %v3094 = vld [vmem:[%s7 + $0x38] sm:$0xff]
      %v3095 = vld [vmem:[%s7 + $0x40] sm:$0xff]
      %v3096 = vld [vmem:[%s7 + $0x48] sm:$0xff]
      %v3097 = vld [vmem:[%s7 + $0x50] sm:$0xff]
      %v3098 = vld [vmem:[%s7 + $0x58] sm:$0xff]
      %v3099 = vld [vmem:[%s7 + $0x60] sm:$0xff]
      %v3100 = vld [vmem:[%s7 + $0x68] sm:$0xff]
      %v3101 = vld [vmem:[%s7 + $0x70] sm:$0xff]
      %v3102 = vld [vmem:[%s7 + $0x78] sm:$0xff]
      %v3103 = vld [vmem:[%s7 + $0x80] sm:$0xff]
      %v3104 = vld [vmem:[%s7 + $0x88] sm:$0xff]
      %v3105 = vld [vmem:[%s7 + $0x90] sm:$0xff]
      %v3106 = vld [vmem:[%s7 + $0x98] sm:$0xff]
      %v3107 = vld [vmem:[%s7 + $0xa0] sm:$0xff]
      %v3108 = vld [vmem:[%s7 + $0xa8] sm:$0xff]
      %v3109 = vld [vmem:[%s7 + $0xb0] sm:$0xff]
      %v3110 = vld [vmem:[%s7 + $0xb8] sm:$0xff]
      %v3111 = vld [vmem:[%s7 + $0xc0] sm:$0xff]
      %v3112 = vld [vmem:[%s7 + $0xc8] sm:$0xff]
      %v3113 = vld [vmem:[%s7 + $0xd0] sm:$0xff]
      %v3114 = vld [vmem:[%s7 + $0xd8] sm:$0xff]
      %v3117 = vunpack.c.l.s4 1983009808
      %v3118 = vunpack.c.0.s8 %v3117
      %v3119 = vlaneseq
      %v3120 = vshrl.u32 %v3119, 7
      %v3121 = vsub.s32 %v3118, %v3120
      %v3122 = vrot.slane %v3086, %v3121
      %v3123 = vcombine.high %v3122, %v3122
      %vm3125 = vcmask 785408
      %v3126 = vsel %vm3125, %v3123, 0
      %3128 = vmatprep.subr.mxu0 0.0
      %3129 = vmatpush1.msra.mxu0 %v3073
      %3130 = vmatprep.subr.mxu0 0.0
      %3131 = vmatpush1.msra.mxu0 %v3072
      %3132 = vmatprep.subr.mxu0 0.0
      %3133 = vmatpush1.msra.mxu0 %v3071
      %3134 = vmatprep.subr.mxu0 0.0
      %3135 = vmatpush1.msra.mxu0 %v3070
      %3136 = vmatprep.subr.mxu0 0.0
      %3137 = vmatpush1.msra.mxu0 %v3069
      %3138 = vmatprep.subr.mxu0 0.0
      %3139 = vmatpush1.msra.mxu0 %v3068
      %3140 = vmatprep.subr.mxu0 0.0
      %3141 = vmatpush1.msra.mxu0 %v3067
      %3142 = vmatprep.subr.mxu0 0.0
      %3143 = vmatpush1.msra.mxu0 %v3066
      %3144 = vmatprep.subr.mxu0 0.0
      %3145 = vmatpush1.msra.mxu0 %v3065
      %3146 = vmatprep.subr.mxu0 0.0
      %3147 = vmatpush1.msra.mxu0 %v3064
      %3148 = vmatprep.subr.mxu0 0.0
      %3149 = vmatpush1.msra.mxu0 %v3063
      %3150 = vmatprep.subr.mxu0 0.0
      %3151 = vmatpush1.msra.mxu0 %v3062
      %3152 = vmatprep.subr.mxu0 0.0
      %3153 = vmatpush1.msra.mxu0 %v3061
      %3154 = vmatprep.subr.mxu0 0.0
      %3155 = vmatpush1.msra.mxu0 %v3060
      %3156 = vmatprep.subr.mxu0 0.0
      %3157 = vmatpush1.msra.mxu0 %v3059
      %3158 = vmatprep.subr.mxu0 0.0
      %3159 = vmatpush1.msra.mxu0 %v3058
      %3160 = vmatprep.subr.mxu0 0.0
      %3161 = vmatpush2.msra.mxu0 0.0
      %3162 = vmatprep.subr.mxu0 0.0
      %3163 = vmatpush2.msra.mxu0 0.0
      %3164 = vmatprep.subr.mxu0 0.0
      %3165 = vmatpush2.msra.mxu0 0.0
      %3166 = vmatprep.subr.mxu0 0.0
      %3167 = vmatpush2.msra.mxu0 0.0
      %3168 = vmatprep.subr.mxu0 0.0
      %3169 = vmatpush2.msra.mxu0 %v3085
      %3170 = vmatprep.subr.mxu0 0.0
      %3171 = vmatpush2.msra.mxu0 %v3084
      %3172 = vmatprep.subr.mxu0 0.0
      %3173 = vmatpush2.msra.mxu0 %v3083
      %3174 = vmatprep.subr.mxu0 0.0
      %3175 = vmatpush2.msra.mxu0 %v3082
      %3176 = vmatprep.subr.mxu0 0.0
      %3177 = vmatpush2.msra.mxu0 %v3081
      %3178 = vmatprep.subr.mxu0 0.0
      %3179 = vmatpush2.msra.mxu0 %v3080
      %3180 = vmatprep.subr.mxu0 0.0
      %3181 = vmatpush2.msra.mxu0 %v3079
      %3182 = vmatprep.subr.mxu0 0.0
      %3183 = vmatpush2.msra.mxu0 %v3078
      %3184 = vmatprep.subr.mxu0 0.0
      %3185 = vmatpush2.msra.mxu0 %v3077
      %3186 = vmatprep.subr.mxu0 0.0
      %3187 = vmatpush2.msra.mxu0 %v3076
      %3188 = vmatprep.subr.mxu0 0.0
      %3189 = vmatpush2.msra.mxu0 %v3075
      %3190 = vmatprep.subr.mxu0 0.0
      %3191 = vmatpush2.msra.mxu0 %v3074
      %3192 = vmatprep.mubr.f32.mxu0 %v3126
      %3193 = vmatmul.mubr.f32.gmra.mxu0 %v3122
      %v3194 = vpop.f32.mrf.mxu0
      %v3195 = vadd.f32 0.0, %v3194
      %v3196 = vpop.f32.mrf.mxu0
      %3197 = vdwg.mxu0
      %v3198 = vmul.f32 %v3058, %v3058
      %v3199 = vmul.f32 %v3059, %v3059
      %v3200 = vmul.f32 %v3060, %v3060
      %v3201 = vmul.f32 %v3061, %v3061
      %v3202 = vmul.f32 %v3062, %v3062
      %v3203 = vmul.f32 %v3063, %v3063
      %v3204 = vmul.f32 %v3064, %v3064
      %v3205 = vmul.f32 %v3065, %v3065
      %v3206 = vmul.f32 %v3066, %v3066
      %v3207 = vmul.f32 %v3067, %v3067
      %v3208 = vmul.f32 %v3068, %v3068
      %v3209 = vmul.f32 %v3069, %v3069
      %v3210 = vmul.f32 %v3070, %v3070
      %v3211 = vmul.f32 %v3071, %v3071
      %v3212 = vmul.f32 %v3072, %v3072
      %v3213 = vmul.f32 %v3073, %v3073
      %v3214 = vmul.f32 %v3074, %v3074
      %v3215 = vmul.f32 %v3075, %v3075
      %v3216 = vmul.f32 %v3076, %v3076
      %v3217 = vmul.f32 %v3077, %v3077
      %v3218 = vmul.f32 %v3078, %v3078
      %v3219 = vmul.f32 %v3079, %v3079
      %v3220 = vmul.f32 %v3080, %v3080
      %v3221 = vmul.f32 %v3081, %v3081
      %v3222 = vmul.f32 %v3082, %v3082
      %v3223 = vmul.f32 %v3083, %v3083
      %v3224 = vmul.f32 %v3084, %v3084
      %v3225 = vmul.f32 %v3085, %v3085
      %3226 = vmatprep.subr.mxu0 0.0
      %3227 = vmatpush1.msra.mxu0 %v3213
      %3228 = vmatprep.subr.mxu0 0.0
      %3229 = vmatpush1.msra.mxu0 %v3212
      %3230 = vmatprep.subr.mxu0 0.0
      %3231 = vmatpush1.msra.mxu0 %v3211
      %3232 = vmatprep.subr.mxu0 0.0
      %3233 = vmatpush1.msra.mxu0 %v3210
      %3234 = vmatprep.subr.mxu0 0.0
      %3235 = vmatpush1.msra.mxu0 %v3209
      %3236 = vmatprep.subr.mxu0 0.0
      %3237 = vmatpush1.msra.mxu0 %v3208
      %3238 = vmatprep.subr.mxu0 0.0
      %3239 = vmatpush1.msra.mxu0 %v3207
      %3240 = vmatprep.subr.mxu0 0.0
      %3241 = vmatpush1.msra.mxu0 %v3206
      %3242 = vmatprep.subr.mxu0 0.0
      %3243 = vmatpush1.msra.mxu0 %v3205
      %3244 = vmatprep.subr.mxu0 0.0
      %3245 = vmatpush1.msra.mxu0 %v3204
      %3246 = vmatprep.subr.mxu0 0.0
      %3247 = vmatpush1.msra.mxu0 %v3203
      %3248 = vmatprep.subr.mxu0 0.0
      %3249 = vmatpush1.msra.mxu0 %v3202
      %3250 = vmatprep.subr.mxu0 0.0
      %3251 = vmatpush1.msra.mxu0 %v3201
      %3252 = vmatprep.subr.mxu0 0.0
      %3253 = vmatpush1.msra.mxu0 %v3200
      %3254 = vmatprep.subr.mxu0 0.0
      %3255 = vmatpush1.msra.mxu0 %v3199
      %3256 = vmatprep.subr.mxu0 0.0
      %3257 = vmatpush1.msra.mxu0 %v3198
      %3258 = vmatprep.subr.mxu0 0.0
      %3259 = vmatpush2.msra.mxu0 0.0
      %3260 = vmatprep.subr.mxu0 0.0
      %3261 = vmatpush2.msra.mxu0 0.0
      %3262 = vmatprep.subr.mxu0 0.0
      %3263 = vmatpush2.msra.mxu0 0.0
      %3264 = vmatprep.subr.mxu0 0.0
      %3265 = vmatpush2.msra.mxu0 0.0
      %3266 = vmatprep.subr.mxu0 0.0
      %3267 = vmatpush2.msra.mxu0 %v3225
      %3268 = vmatprep.subr.mxu0 0.0
      %3269 = vmatpush2.msra.mxu0 %v3224
      %3270 = vmatprep.subr.mxu0 0.0
      %3271 = vmatpush2.msra.mxu0 %v3223
      %3272 = vmatprep.subr.mxu0 0.0
      %3273 = vmatpush2.msra.mxu0 %v3222
      %3274 = vmatprep.subr.mxu0 0.0
      %3275 = vmatpush2.msra.mxu0 %v3221
      %3276 = vmatprep.subr.mxu0 0.0
      %3277 = vmatpush2.msra.mxu0 %v3220
      %3278 = vmatprep.subr.mxu0 0.0
      %3279 = vmatpush2.msra.mxu0 %v3219
      %3280 = vmatprep.subr.mxu0 0.0
      %3281 = vmatpush2.msra.mxu0 %v3218
      %3282 = vmatprep.subr.mxu0 0.0
      %3283 = vmatpush2.msra.mxu0 %v3217
      %3284 = vmatprep.subr.mxu0 0.0
      %3285 = vmatpush2.msra.mxu0 %v3216
      %3286 = vmatprep.subr.mxu0 0.0
      %3287 = vmatpush2.msra.mxu0 %v3215
      %3288 = vmatprep.subr.mxu0 0.0
      %3289 = vmatpush2.msra.mxu0 %v3214
      %3290 = vmatprep.mubr.f32.mxu0 %v3126
      %3291 = vmatmul.mubr.f32.gmra.mxu0 %v3122
      %v3292 = vpop.f32.mrf.mxu0
      %v3293 = vadd.f32 0.0, %v3292
      %v3294 = vpop.f32.mrf.mxu0
      %3295 = vdwg.mxu0
      %v3296 = vmul.f32 %v3195, %v3195
      %v3297 = vsub.f32 %v3293, %v3296
      %v3298 = vadd.f32 %v3297, 1e-05
      %v3299 = vrsqrt.pop %v3298
      %vm3300 = vcmask 15360
      %v3302 = vsel %vm3300, %v3087, 0
      %v3305 = vsel %vm3300, %v3088, 0
      %v3308 = vsel %vm3300, %v3089, 0
      %v3311 = vsel %vm3300, %v3090, 0
      %v3314 = vsel %vm3300, %v3091, 0
      %v3317 = vsel %vm3300, %v3092, 0
      %v3320 = vsel %vm3300, %v3093, 0
      %v3323 = vsel %vm3300, %v3094, 0
      %v3326 = vsel %vm3300, %v3095, 0
      %v3329 = vsel %vm3300, %v3096, 0
      %v3332 = vsel %vm3300, %v3097, 0
      %v3335 = vsel %vm3300, %v3098, 0
      %v3338 = vsel %vm3300, %v3099, 0
      %v3341 = vsel %vm3300, %v3100, 0
      %v3344 = vsel %vm3300, %v3101, 0
      %v3347 = vsel %vm3300, %v3102, 0
      %v3350 = vsel %vm3300, %v3103, 0
      %v3353 = vsel %vm3300, %v3104, 0
      %v3356 = vsel %vm3300, %v3105, 0
      %v3359 = vsel %vm3300, %v3106, 0
      %v3362 = vsel %vm3300, %v3107, 0
      %v3365 = vsel %vm3300, %v3108, 0
      %v3368 = vsel %vm3300, %v3109, 0
      %v3371 = vsel %vm3300, %v3110, 0
      %v3374 = vsel %vm3300, %v3111, 0
      %v3377 = vsel %vm3300, %v3112, 0
      %v3380 = vsel %vm3300, %v3113, 0
      %v3383 = vsel %vm3300, %v3114, 0
      %vm3385 = vcmask 1041408
      %v3387 = vsel %vm3385, %v3195, 0
      %3389 = vmatprep.subr.mxu0 0.0
      %3390 = vmatpush1.msra.mxu0 0.0
      %3391 = vmatprep.subr.mxu0 0.0
      %3392 = vmatpush1.msra.mxu0 0.0
      %3393 = vmatprep.subr.mxu0 0.0
      %3394 = vmatpush1.msra.mxu0 0.0
      %3395 = vmatprep.subr.mxu0 0.0
      %3396 = vmatpush1.msra.mxu0 0.0
      %3397 = vmatprep.subr.mxu0 0.0
      %3398 = vmatpush1.msra.mxu0 0.0
      %3399 = vmatprep.subr.mxu0 0.0
      %3400 = vmatpush1.msra.mxu0 0.0
      %3401 = vmatprep.subr.mxu0 0.0
      %3402 = vmatpush1.msra.mxu0 0.0
      %3403 = vmatprep.subr.mxu0 0.0
      %3404 = vmatpush1.msra.mxu0 0.0
      %3405 = vmatprep.subr.mxu0 0.0
      %3406 = vmatpush1.msra.mxu0 0.0
      %3407 = vmatprep.subr.mxu0 0.0
      %3408 = vmatpush1.msra.mxu0 0.0
      %3409 = vmatprep.subr.mxu0 0.0
      %3410 = vmatpush1.msra.mxu0 0.0
      %3411 = vmatprep.subr.mxu0 0.0
      %3412 = vmatpush1.msra.mxu0 0.0
      %3413 = vmatprep.subr.mxu0 0.0
      %3414 = vmatpush1.msra.mxu0 0.0
      %3415 = vmatprep.subr.mxu0 0.0
      %3416 = vmatpush1.msra.mxu0 0.0
      %3417 = vmatprep.subr.mxu0 0.0
      %3418 = vmatpush1.msra.mxu0 0.0
      %3419 = vmatprep.subr.mxu0 0.0
      %3420 = vmatpush1.msra.mxu0 %v3387
      %3421 = vmatprep.subr.mxu0 0.0
      %3422 = vmatpush2.msra.mxu0 0.0
      %3423 = vmatprep.subr.mxu0 0.0
      %3424 = vmatpush2.msra.mxu0 0.0
      %3425 = vmatprep.subr.mxu0 0.0
      %3426 = vmatpush2.msra.mxu0 0.0
      %3427 = vmatprep.subr.mxu0 0.0
      %3428 = vmatpush2.msra.mxu0 0.0
      %3429 = vmatprep.subr.mxu0 0.0
      %3430 = vmatpush2.msra.mxu0 0.0
      %3431 = vmatprep.subr.mxu0 0.0
      %3432 = vmatpush2.msra.mxu0 0.0
      %3433 = vmatprep.subr.mxu0 0.0
      %3434 = vmatpush2.msra.mxu0 0.0
      %3435 = vmatprep.subr.mxu0 0.0
      %3436 = vmatpush2.msra.mxu0 0.0
      %3437 = vmatprep.subr.mxu0 0.0
      %3438 = vmatpush2.msra.mxu0 0.0
      %3439 = vmatprep.subr.mxu0 0.0
      %3440 = vmatpush2.msra.mxu0 0.0
      %3441 = vmatprep.subr.mxu0 0.0
      %3442 = vmatpush2.msra.mxu0 0.0
      %3443 = vmatprep.subr.mxu0 0.0
      %3444 = vmatpush2.msra.mxu0 0.0
      %3445 = vmatprep.subr.mxu0 0.0
      %3446 = vmatpush2.msra.mxu0 0.0
      %3447 = vmatprep.subr.mxu0 0.0
      %3448 = vmatpush2.msra.mxu0 0.0
      %3449 = vmatprep.subr.mxu0 0.0
      %3450 = vmatpush2.msra.mxu0 0.0
      %3451 = vmatprep.subr.mxu0 0.0
      %3452 = vmatpush2.msra.mxu0 0.0
      %3453 = vmatprep.mubr.f32.mxu0 0.0
      %3454 = vmatmul.mubr.f32.gmra.mxu0 %v3302
      %v3455 = vpop.f32.mrf.mxu0
      %v3456 = vadd.f32 0.0, %v3455
      %v3457 = vpop.f32.mrf.mxu0
      %3458 = vmatprep.mubr.f32.mxu0 0.0
      %3459 = vmatmul.mubr.f32.gmra.mxu0 %v3305
      %v3460 = vpop.f32.mrf.mxu0
      %v3461 = vadd.f32 0.0, %v3460
      %v3462 = vpop.f32.mrf.mxu0
      %3463 = vmatprep.mubr.f32.mxu0 0.0
      %3464 = vmatmul.mubr.f32.gmra.mxu0 %v3308
      %v3465 = vpop.f32.mrf.mxu0
      %v3466 = vadd.f32 0.0, %v3465
      %v3467 = vpop.f32.mrf.mxu0
      %3468 = vmatprep.mubr.f32.mxu0 0.0
      %3469 = vmatmul.mubr.f32.gmra.mxu0 %v3311
      %v3470 = vpop.f32.mrf.mxu0
      %v3471 = vadd.f32 0.0, %v3470
      %v3472 = vpop.f32.mrf.mxu0
      %3473 = vmatprep.mubr.f32.mxu0 0.0
      %3474 = vmatmul.mubr.f32.gmra.mxu0 %v3314
      %v3475 = vpop.f32.mrf.mxu0
      %v3476 = vadd.f32 0.0, %v3475
      %v3477 = vpop.f32.mrf.mxu0
      %3478 = vmatprep.mubr.f32.mxu0 0.0
      %3479 = vmatmul.mubr.f32.gmra.mxu0 %v3317
      %v3480 = vpop.f32.mrf.mxu0
      %v3481 = vadd.f32 0.0, %v3480
      %v3482 = vpop.f32.mrf.mxu0
      %3483 = vmatprep.mubr.f32.mxu0 0.0
      %3484 = vmatmul.mubr.f32.gmra.mxu0 %v3320
      %v3485 = vpop.f32.mrf.mxu0
      %v3486 = vadd.f32 0.0, %v3485
      %v3487 = vpop.f32.mrf.mxu0
      %3488 = vmatprep.mubr.f32.mxu0 0.0
      %3489 = vmatmul.mubr.f32.gmra.mxu0 %v3323
      %v3490 = vpop.f32.mrf.mxu0
      %v3491 = vadd.f32 0.0, %v3490
      %v3492 = vpop.f32.mrf.mxu0
      %3493 = vmatprep.mubr.f32.mxu0 0.0
      %3494 = vmatmul.mubr.f32.gmra.mxu0 %v3326
      %v3495 = vpop.f32.mrf.mxu0
      %v3496 = vadd.f32 0.0, %v3495
      %v3497 = vpop.f32.mrf.mxu0
      %3498 = vmatprep.mubr.f32.mxu0 0.0
      %3499 = vmatmul.mubr.f32.gmra.mxu0 %v3329
      %v3500 = vpop.f32.mrf.mxu0
      %v3501 = vadd.f32 0.0, %v3500
      %v3502 = vpop.f32.mrf.mxu0
      %3503 = vmatprep.mubr.f32.mxu0 0.0
      %3504 = vmatmul.mubr.f32.gmra.mxu0 %v3332
      %v3505 = vpop.f32.mrf.mxu0
      %v3506 = vadd.f32 0.0, %v3505
      %v3507 = vpop.f32.mrf.mxu0
      %3508 = vmatprep.mubr.f32.mxu0 0.0
      %3509 = vmatmul.mubr.f32.gmra.mxu0 %v3335
      %v3510 = vpop.f32.mrf.mxu0
      %v3511 = vadd.f32 0.0, %v3510
      %v3512 = vpop.f32.mrf.mxu0
      %3513 = vmatprep.mubr.f32.mxu0 0.0
      %3514 = vmatmul.mubr.f32.gmra.mxu0 %v3338
      %v3515 = vpop.f32.mrf.mxu0
      %v3516 = vadd.f32 0.0, %v3515
      %v3517 = vpop.f32.mrf.mxu0
      %3518 = vmatprep.mubr.f32.mxu0 0.0
      %3519 = vmatmul.mubr.f32.gmra.mxu0 %v3341
      %v3520 = vpop.f32.mrf.mxu0
      %v3521 = vadd.f32 0.0, %v3520
      %v3522 = vpop.f32.mrf.mxu0
      %3523 = vmatprep.mubr.f32.mxu0 0.0
      %3524 = vmatmul.mubr.f32.gmra.mxu0 %v3344
      %v3525 = vpop.f32.mrf.mxu0
      %v3526 = vadd.f32 0.0, %v3525
      %v3527 = vpop.f32.mrf.mxu0
      %3528 = vmatprep.mubr.f32.mxu0 0.0
      %3529 = vmatmul.mubr.f32.gmra.mxu0 %v3347
      %v3530 = vpop.f32.mrf.mxu0
      %v3531 = vadd.f32 0.0, %v3530
      %v3532 = vpop.f32.mrf.mxu0
      %3533 = vmatprep.mubr.f32.mxu0 0.0
      %3534 = vmatmul.mubr.f32.gmra.mxu0 %v3350
      %v3535 = vpop.f32.mrf.mxu0
      %v3536 = vadd.f32 0.0, %v3535
      %v3537 = vpop.f32.mrf.mxu0
      %3538 = vmatprep.mubr.f32.mxu0 0.0
      %3539 = vmatmul.mubr.f32.gmra.mxu0 %v3353
      %v3540 = vpop.f32.mrf.mxu0
      %v3541 = vadd.f32 0.0, %v3540
      %v3542 = vpop.f32.mrf.mxu0
      %3543 = vmatprep.mubr.f32.mxu0 0.0
      %3544 = vmatmul.mubr.f32.gmra.mxu0 %v3356
      %v3545 = vpop.f32.mrf.mxu0
      %v3546 = vadd.f32 0.0, %v3545
      %v3547 = vpop.f32.mrf.mxu0
      %3548 = vmatprep.mubr.f32.mxu0 0.0
      %3549 = vmatmul.mubr.f32.gmra.mxu0 %v3359
      %v3550 = vpop.f32.mrf.mxu0
      %v3551 = vadd.f32 0.0, %v3550
      %v3552 = vpop.f32.mrf.mxu0
      %3553 = vmatprep.mubr.f32.mxu0 0.0
      %3554 = vmatmul.mubr.f32.gmra.mxu0 %v3362
      %v3555 = vpop.f32.mrf.mxu0
      %v3556 = vadd.f32 0.0, %v3555
      %v3557 = vpop.f32.mrf.mxu0
      %3558 = vmatprep.mubr.f32.mxu0 0.0
      %3559 = vmatmul.mubr.f32.gmra.mxu0 %v3365
      %v3560 = vpop.f32.mrf.mxu0
      %v3561 = vadd.f32 0.0, %v3560
      %v3562 = vpop.f32.mrf.mxu0
      %3563 = vmatprep.mubr.f32.mxu0 0.0
      %3564 = vmatmul.mubr.f32.gmra.mxu0 %v3368
      %v3565 = vpop.f32.mrf.mxu0
      %v3566 = vadd.f32 0.0, %v3565
      %v3567 = vpop.f32.mrf.mxu0
      %3568 = vmatprep.mubr.f32.mxu0 0.0
      %3569 = vmatmul.mubr.f32.gmra.mxu0 %v3371
      %v3570 = vpop.f32.mrf.mxu0
      %v3571 = vadd.f32 0.0, %v3570
      %v3572 = vpop.f32.mrf.mxu0
      %3573 = vmatprep.mubr.f32.mxu0 0.0
      %3574 = vmatmul.mubr.f32.gmra.mxu0 %v3374
      %v3575 = vpop.f32.mrf.mxu0
      %v3576 = vadd.f32 0.0, %v3575
      %v3577 = vpop.f32.mrf.mxu0
      %3578 = vmatprep.mubr.f32.mxu0 0.0
      %3579 = vmatmul.mubr.f32.gmra.mxu0 %v3377
      %v3580 = vpop.f32.mrf.mxu0
      %v3581 = vadd.f32 0.0, %v3580
      %v3582 = vpop.f32.mrf.mxu0
      %3583 = vmatprep.mubr.f32.mxu0 0.0
      %3584 = vmatmul.mubr.f32.gmra.mxu0 %v3380
      %v3585 = vpop.f32.mrf.mxu0
      %v3586 = vadd.f32 0.0, %v3585
      %v3587 = vpop.f32.mrf.mxu0
      %3588 = vmatprep.mubr.f32.mxu0 0.0
      %3589 = vmatmul.mubr.f32.gmra.mxu0 %v3383
      %v3590 = vpop.f32.mrf.mxu0
      %v3591 = vadd.f32 0.0, %v3590
      %v3592 = vpop.f32.mrf.mxu0
      %3593 = vdwg.mxu0
      %v3595 = vsel %vm3385, %v3299, 0
      %3597 = vmatprep.subr.mxu0 0.0
      %3598 = vmatpush1.msra.mxu0 0.0
      %3599 = vmatprep.subr.mxu0 0.0
      %3600 = vmatpush1.msra.mxu0 0.0
      %3601 = vmatprep.subr.mxu0 0.0
      %3602 = vmatpush1.msra.mxu0 0.0
      %3603 = vmatprep.subr.mxu0 0.0
      %3604 = vmatpush1.msra.mxu0 0.0
      %3605 = vmatprep.subr.mxu0 0.0
      %3606 = vmatpush1.msra.mxu0 0.0
      %3607 = vmatprep.subr.mxu0 0.0
      %3608 = vmatpush1.msra.mxu0 0.0
      %3609 = vmatprep.subr.mxu0 0.0
      %3610 = vmatpush1.msra.mxu0 0.0
      %3611 = vmatprep.subr.mxu0 0.0
      %3612 = vmatpush1.msra.mxu0 0.0
      %3613 = vmatprep.subr.mxu0 0.0
      %3614 = vmatpush1.msra.mxu0 0.0
      %3615 = vmatprep.subr.mxu0 0.0
      %3616 = vmatpush1.msra.mxu0 0.0
      %3617 = vmatprep.subr.mxu0 0.0
      %3618 = vmatpush1.msra.mxu0 0.0
      %3619 = vmatprep.subr.mxu0 0.0
      %3620 = vmatpush1.msra.mxu0 0.0
      %3621 = vmatprep.subr.mxu0 0.0
      %3622 = vmatpush1.msra.mxu0 0.0
      %3623 = vmatprep.subr.mxu0 0.0
      %3624 = vmatpush1.msra.mxu0 0.0
      %3625 = vmatprep.subr.mxu0 0.0
      %3626 = vmatpush1.msra.mxu0 0.0
      %3627 = vmatprep.subr.mxu0 0.0
      %3628 = vmatpush1.msra.mxu0 %v3595
      %3629 = vmatprep.subr.mxu0 0.0
      %3630 = vmatpush2.msra.mxu0 0.0
      %3631 = vmatprep.subr.mxu0 0.0
      %3632 = vmatpush2.msra.mxu0 0.0
      %3633 = vmatprep.subr.mxu0 0.0
      %3634 = vmatpush2.msra.mxu0 0.0
      %3635 = vmatprep.subr.mxu0 0.0
      %3636 = vmatpush2.msra.mxu0 0.0
      %3637 = vmatprep.subr.mxu0 0.0
      %3638 = vmatpush2.msra.mxu0 0.0
      %3639 = vmatprep.subr.mxu0 0.0
      %3640 = vmatpush2.msra.mxu0 0.0
      %3641 = vmatprep.subr.mxu0 0.0
      %3642 = vmatpush2.msra.mxu0 0.0
      %3643 = vmatprep.subr.mxu0 0.0
      %3644 = vmatpush2.msra.mxu0 0.0
      %3645 = vmatprep.subr.mxu0 0.0
      %3646 = vmatpush2.msra.mxu0 0.0
      %3647 = vmatprep.subr.mxu0 0.0
      %3648 = vmatpush2.msra.mxu0 0.0
      %3649 = vmatprep.subr.mxu0 0.0
      %3650 = vmatpush2.msra.mxu0 0.0
      %3651 = vmatprep.subr.mxu0 0.0
      %3652 = vmatpush2.msra.mxu0 0.0
      %3653 = vmatprep.subr.mxu0 0.0
      %3654 = vmatpush2.msra.mxu0 0.0
      %3655 = vmatprep.subr.mxu0 0.0
      %3656 = vmatpush2.msra.mxu0 0.0
      %3657 = vmatprep.subr.mxu0 0.0
      %3658 = vmatpush2.msra.mxu0 0.0
      %3659 = vmatprep.subr.mxu0 0.0
      %3660 = vmatpush2.msra.mxu0 0.0
      %3661 = vmatprep.mubr.f32.mxu0 0.0
      %3662 = vmatmul.mubr.f32.gmra.mxu0 %v3302
      %v3663 = vpop.f32.mrf.mxu0
      %v3664 = vadd.f32 0.0, %v3663
      %v3665 = vpop.f32.mrf.mxu0
      %3666 = vmatprep.mubr.f32.mxu0 0.0
      %3667 = vmatmul.mubr.f32.gmra.mxu0 %v3305
      %v3668 = vpop.f32.mrf.mxu0
      %v3669 = vadd.f32 0.0, %v3668
      %v3670 = vpop.f32.mrf.mxu0
      %3671 = vmatprep.mubr.f32.mxu0 0.0
      %3672 = vmatmul.mubr.f32.gmra.mxu0 %v3308
      %v3673 = vpop.f32.mrf.mxu0
      %v3674 = vadd.f32 0.0, %v3673
      %v3675 = vpop.f32.mrf.mxu0
      %3676 = vmatprep.mubr.f32.mxu0 0.0
      %3677 = vmatmul.mubr.f32.gmra.mxu0 %v3311
      %v3678 = vpop.f32.mrf.mxu0
      %v3679 = vadd.f32 0.0, %v3678
      %v3680 = vpop.f32.mrf.mxu0
      %3681 = vmatprep.mubr.f32.mxu0 0.0
      %3682 = vmatmul.mubr.f32.gmra.mxu0 %v3314
      %v3683 = vpop.f32.mrf.mxu0
      %v3684 = vadd.f32 0.0, %v3683
      %v3685 = vpop.f32.mrf.mxu0
      %3686 = vmatprep.mubr.f32.mxu0 0.0
      %3687 = vmatmul.mubr.f32.gmra.mxu0 %v3317
      %v3688 = vpop.f32.mrf.mxu0
      %v3689 = vadd.f32 0.0, %v3688
      %v3690 = vpop.f32.mrf.mxu0
      %3691 = vmatprep.mubr.f32.mxu0 0.0
      %3692 = vmatmul.mubr.f32.gmra.mxu0 %v3320
      %v3693 = vpop.f32.mrf.mxu0
      %v3694 = vadd.f32 0.0, %v3693
      %v3695 = vpop.f32.mrf.mxu0
      %3696 = vmatprep.mubr.f32.mxu0 0.0
      %3697 = vmatmul.mubr.f32.gmra.mxu0 %v3323
      %v3698 = vpop.f32.mrf.mxu0
      %v3699 = vadd.f32 0.0, %v3698
      %v3700 = vpop.f32.mrf.mxu0
      %3701 = vmatprep.mubr.f32.mxu0 0.0
      %3702 = vmatmul.mubr.f32.gmra.mxu0 %v3326
      %v3703 = vpop.f32.mrf.mxu0
      %v3704 = vadd.f32 0.0, %v3703
      %v3705 = vpop.f32.mrf.mxu0
      %3706 = vmatprep.mubr.f32.mxu0 0.0
      %3707 = vmatmul.mubr.f32.gmra.mxu0 %v3329
      %v3708 = vpop.f32.mrf.mxu0
      %v3709 = vadd.f32 0.0, %v3708
      %v3710 = vpop.f32.mrf.mxu0
      %3711 = vmatprep.mubr.f32.mxu0 0.0
      %3712 = vmatmul.mubr.f32.gmra.mxu0 %v3332
      %v3713 = vpop.f32.mrf.mxu0
      %v3714 = vadd.f32 0.0, %v3713
      %v3715 = vpop.f32.mrf.mxu0
      %3716 = vmatprep.mubr.f32.mxu0 0.0
      %3717 = vmatmul.mubr.f32.gmra.mxu0 %v3335
      %v3718 = vpop.f32.mrf.mxu0
      %v3719 = vadd.f32 0.0, %v3718
      %v3720 = vpop.f32.mrf.mxu0
      %3721 = vmatprep.mubr.f32.mxu0 0.0
      %3722 = vmatmul.mubr.f32.gmra.mxu0 %v3338
      %v3723 = vpop.f32.mrf.mxu0
      %v3724 = vadd.f32 0.0, %v3723
      %v3725 = vpop.f32.mrf.mxu0
      %3726 = vmatprep.mubr.f32.mxu0 0.0
      %3727 = vmatmul.mubr.f32.gmra.mxu0 %v3341
      %v3728 = vpop.f32.mrf.mxu0
      %v3729 = vadd.f32 0.0, %v3728
      %v3730 = vpop.f32.mrf.mxu0
      %3731 = vmatprep.mubr.f32.mxu0 0.0
      %3732 = vmatmul.mubr.f32.gmra.mxu0 %v3344
      %v3733 = vpop.f32.mrf.mxu0
      %v3734 = vadd.f32 0.0, %v3733
      %v3735 = vpop.f32.mrf.mxu0
      %3736 = vmatprep.mubr.f32.mxu0 0.0
      %3737 = vmatmul.mubr.f32.gmra.mxu0 %v3347
      %v3738 = vpop.f32.mrf.mxu0
      %v3739 = vadd.f32 0.0, %v3738
      %v3740 = vpop.f32.mrf.mxu0
      %3741 = vmatprep.mubr.f32.mxu0 0.0
      %3742 = vmatmul.mubr.f32.gmra.mxu0 %v3350
      %v3743 = vpop.f32.mrf.mxu0
      %v3744 = vadd.f32 0.0, %v3743
      %v3745 = vpop.f32.mrf.mxu0
      %3746 = vmatprep.mubr.f32.mxu0 0.0
      %3747 = vmatmul.mubr.f32.gmra.mxu0 %v3353
      %v3748 = vpop.f32.mrf.mxu0
      %v3749 = vadd.f32 0.0, %v3748
      %v3750 = vpop.f32.mrf.mxu0
      %3751 = vmatprep.mubr.f32.mxu0 0.0
      %3752 = vmatmul.mubr.f32.gmra.mxu0 %v3356
      %v3753 = vpop.f32.mrf.mxu0
      %v3754 = vadd.f32 0.0, %v3753
      %v3755 = vpop.f32.mrf.mxu0
      %3756 = vmatprep.mubr.f32.mxu0 0.0
      %3757 = vmatmul.mubr.f32.gmra.mxu0 %v3359
      %v3758 = vpop.f32.mrf.mxu0
      %v3759 = vadd.f32 0.0, %v3758
      %v3760 = vpop.f32.mrf.mxu0
      %3761 = vmatprep.mubr.f32.mxu0 0.0
      %3762 = vmatmul.mubr.f32.gmra.mxu0 %v3362
      %v3763 = vpop.f32.mrf.mxu0
      %v3764 = vadd.f32 0.0, %v3763
      %v3765 = vpop.f32.mrf.mxu0
      %3766 = vmatprep.mubr.f32.mxu0 0.0
      %3767 = vmatmul.mubr.f32.gmra.mxu0 %v3365
      %v3768 = vpop.f32.mrf.mxu0
      %v3769 = vadd.f32 0.0, %v3768
      %v3770 = vpop.f32.mrf.mxu0
      %3771 = vmatprep.mubr.f32.mxu0 0.0
      %3772 = vmatmul.mubr.f32.gmra.mxu0 %v3368
      %v3773 = vpop.f32.mrf.mxu0
      %v3774 = vadd.f32 0.0, %v3773
      %v3775 = vpop.f32.mrf.mxu0
      %3776 = vmatprep.mubr.f32.mxu0 0.0
      %3777 = vmatmul.mubr.f32.gmra.mxu0 %v3371
      %v3778 = vpop.f32.mrf.mxu0
      %v3779 = vadd.f32 0.0, %v3778
      %v3780 = vpop.f32.mrf.mxu0
      %3781 = vmatprep.mubr.f32.mxu0 0.0
      %3782 = vmatmul.mubr.f32.gmra.mxu0 %v3374
      %v3783 = vpop.f32.mrf.mxu0
      %v3784 = vadd.f32 0.0, %v3783
      %v3785 = vpop.f32.mrf.mxu0
      %3786 = vmatprep.mubr.f32.mxu0 0.0
      %3787 = vmatmul.mubr.f32.gmra.mxu0 %v3377
      %v3788 = vpop.f32.mrf.mxu0
      %v3789 = vadd.f32 0.0, %v3788
      %v3790 = vpop.f32.mrf.mxu0
      %3791 = vmatprep.mubr.f32.mxu0 0.0
      %3792 = vmatmul.mubr.f32.gmra.mxu0 %v3380
      %v3793 = vpop.f32.mrf.mxu0
      %v3794 = vadd.f32 0.0, %v3793
      %v3795 = vpop.f32.mrf.mxu0
      %3796 = vmatprep.mubr.f32.mxu0 0.0
      %3797 = vmatmul.mubr.f32.gmra.mxu0 %v3383
      %v3798 = vpop.f32.mrf.mxu0
      %v3799 = vadd.f32 0.0, %v3798
      %v3800 = vpop.f32.mrf.mxu0
      %3801 = vdwg.mxu0
      %v3802 = vsub.f32 %v3058, %v3456
      %v3803 = vsub.f32 %v3059, %v3461
      %v3804 = vsub.f32 %v3060, %v3466
      %v3805 = vsub.f32 %v3061, %v3471
      %v3806 = vsub.f32 %v3062, %v3476
      %v3807 = vsub.f32 %v3063, %v3481
      %v3808 = vsub.f32 %v3064, %v3486
      %v3809 = vsub.f32 %v3065, %v3491
      %v3810 = vsub.f32 %v3066, %v3496
      %v3811 = vsub.f32 %v3067, %v3501
      %v3812 = vsub.f32 %v3068, %v3506
      %v3813 = vsub.f32 %v3069, %v3511
      %v3814 = vsub.f32 %v3070, %v3516
      %v3815 = vsub.f32 %v3071, %v3521
      %v3816 = vsub.f32 %v3072, %v3526
      %v3817 = vsub.f32 %v3073, %v3531
      %v3818 = vsub.f32 %v3074, %v3536
      %v3819 = vsub.f32 %v3075, %v3541
      %v3820 = vsub.f32 %v3076, %v3546
      %v3821 = vsub.f32 %v3077, %v3551
      %v3822 = vsub.f32 %v3078, %v3556
      %v3823 = vsub.f32 %v3079, %v3561
      %v3824 = vsub.f32 %v3080, %v3566
      %v3825 = vsub.f32 %v3081, %v3571
      %v3826 = vsub.f32 %v3082, %v3576
      %v3827 = vsub.f32 %v3083, %v3581
      %v3828 = vsub.f32 %v3084, %v3586
      %v3829 = vsub.f32 %v3085, %v3591
      %v3830 = vmul.f32 %v3802, %v3664
      %v3831 = vmul.f32 %v3803, %v3669
      %v3832 = vmul.f32 %v3804, %v3674
      %v3833 = vmul.f32 %v3805, %v3679
      %v3834 = vmul.f32 %v3806, %v3684
      %v3835 = vmul.f32 %v3807, %v3689
      %v3836 = vmul.f32 %v3808, %v3694
      %v3837 = vmul.f32 %v3809, %v3699
      %v3838 = vmul.f32 %v3810, %v3704
      %v3839 = vmul.f32 %v3811, %v3709
      %v3840 = vmul.f32 %v3812, %v3714
      %v3841 = vmul.f32 %v3813, %v3719
      %v3842 = vmul.f32 %v3814, %v3724
      %v3843 = vmul.f32 %v3815, %v3729
      %v3844 = vmul.f32 %v3816, %v3734
      %v3845 = vmul.f32 %v3817, %v3739
      %v3846 = vmul.f32 %v3818, %v3744
      %v3847 = vmul.f32 %v3819, %v3749
      %v3848 = vmul.f32 %v3820, %v3754
      %v3849 = vmul.f32 %v3821, %v3759
      %v3850 = vmul.f32 %v3822, %v3764
      %v3851 = vmul.f32 %v3823, %v3769
      %v3852 = vmul.f32 %v3824, %v3774
      %v3853 = vmul.f32 %v3825, %v3779
      %v3854 = vmul.f32 %v3826, %v3784
      %v3855 = vmul.f32 %v3827, %v3789
      %v3856 = vmul.f32 %v3828, %v3794
      %v3857 = vmul.f32 %v3829, %v3799
      %vm3858 = vcmp.ge.f32.partialorder %v3830, 0.0
      %vm3859 = vcmp.ge.f32.partialorder %v3831, 0.0
      %vm3860 = vcmp.ge.f32.partialorder %v3832, 0.0
      %vm3861 = vcmp.ge.f32.partialorder %v3833, 0.0
      %vm3862 = vcmp.ge.f32.partialorder %v3834, 0.0
      %vm3863 = vcmp.ge.f32.partialorder %v3835, 0.0
      %vm3864 = vcmp.ge.f32.partialorder %v3836, 0.0
      %vm3865 = vcmp.ge.f32.partialorder %v3837, 0.0
      %vm3866 = vcmp.ge.f32.partialorder %v3838, 0.0
      %vm3867 = vcmp.ge.f32.partialorder %v3839, 0.0
      %vm3868 = vcmp.ge.f32.partialorder %v3840, 0.0
      %vm3869 = vcmp.ge.f32.partialorder %v3841, 0.0
      %vm3870 = vcmp.ge.f32.partialorder %v3842, 0.0
      %vm3871 = vcmp.ge.f32.partialorder %v3843, 0.0
      %vm3872 = vcmp.ge.f32.partialorder %v3844, 0.0
      %vm3873 = vcmp.ge.f32.partialorder %v3845, 0.0
      %vm3874 = vcmp.ge.f32.partialorder %v3846, 0.0
      %vm3875 = vcmp.ge.f32.partialorder %v3847, 0.0
      %vm3876 = vcmp.ge.f32.partialorder %v3848, 0.0
      %vm3877 = vcmp.ge.f32.partialorder %v3849, 0.0
      %vm3878 = vcmp.ge.f32.partialorder %v3850, 0.0
      %vm3879 = vcmp.ge.f32.partialorder %v3851, 0.0
      %vm3880 = vcmp.ge.f32.partialorder %v3852, 0.0
      %vm3881 = vcmp.ge.f32.partialorder %v3853, 0.0
      %vm3882 = vcmp.ge.f32.partialorder %v3854, 0.0
      %vm3883 = vcmp.ge.f32.partialorder %v3855, 0.0
      %vm3884 = vcmp.ge.f32.partialorder %v3856, 0.0
      %vm3885 = vcmp.ge.f32.partialorder %v3857, 0.0
      %v3886 = vmul.f32 %v3830, 0.2
      %v3887 = vmul.f32 %v3831, 0.2
      %v3888 = vmul.f32 %v3832, 0.2
      %v3889 = vmul.f32 %v3833, 0.2
      %v3890 = vmul.f32 %v3834, 0.2
      %v3891 = vmul.f32 %v3835, 0.2
      %v3892 = vmul.f32 %v3836, 0.2
      %v3893 = vmul.f32 %v3837, 0.2
      %v3894 = vmul.f32 %v3838, 0.2
      %v3895 = vmul.f32 %v3839, 0.2
      %v3896 = vmul.f32 %v3840, 0.2
      %v3897 = vmul.f32 %v3841, 0.2
      %v3898 = vmul.f32 %v3842, 0.2
      %v3899 = vmul.f32 %v3843, 0.2
      %v3900 = vmul.f32 %v3844, 0.2
      %v3901 = vmul.f32 %v3845, 0.2
      %v3902 = vmul.f32 %v3846, 0.2
      %v3903 = vmul.f32 %v3847, 0.2
      %v3904 = vmul.f32 %v3848, 0.2
      %v3905 = vmul.f32 %v3849, 0.2
      %v3906 = vmul.f32 %v3850, 0.2
      %v3907 = vmul.f32 %v3851, 0.2
      %v3908 = vmul.f32 %v3852, 0.2
      %v3909 = vmul.f32 %v3853, 0.2
      %v3910 = vmul.f32 %v3854, 0.2
      %v3911 = vmul.f32 %v3855, 0.2
      %v3912 = vmul.f32 %v3856, 0.2
      %v3913 = vmul.f32 %v3857, 0.2
      %v3914 = vsel %vm3858, %v3830, %v3886
      %v3915 = vsel %vm3859, %v3831, %v3887
      %v3916 = vsel %vm3860, %v3832, %v3888
      %v3917 = vsel %vm3861, %v3833, %v3889
      %v3918 = vsel %vm3862, %v3834, %v3890
      %v3919 = vsel %vm3863, %v3835, %v3891
      %v3920 = vsel %vm3864, %v3836, %v3892
      %v3921 = vsel %vm3865, %v3837, %v3893
      %v3922 = vsel %vm3866, %v3838, %v3894
      %v3923 = vsel %vm3867, %v3839, %v3895
      %v3924 = vsel %vm3868, %v3840, %v3896
      %v3925 = vsel %vm3869, %v3841, %v3897
      %v3926 = vsel %vm3870, %v3842, %v3898
      %v3927 = vsel %vm3871, %v3843, %v3899
      %v3928 = vsel %vm3872, %v3844, %v3900
      %v3929 = vsel %vm3873, %v3845, %v3901
      %v3930 = vsel %vm3874, %v3846, %v3902
      %v3931 = vsel %vm3875, %v3847, %v3903
      %v3932 = vsel %vm3876, %v3848, %v3904
      %v3933 = vsel %vm3877, %v3849, %v3905
      %v3934 = vsel %vm3878, %v3850, %v3906
      %v3935 = vsel %vm3879, %v3851, %v3907
      %v3936 = vsel %vm3880, %v3852, %v3908
      %v3937 = vsel %vm3881, %v3853, %v3909
      %v3938 = vsel %vm3882, %v3854, %v3910
      %v3939 = vsel %vm3883, %v3855, %v3911
      %v3940 = vsel %vm3884, %v3856, %v3912
      %v3941 = vsel %vm3885, %v3857, %v3913
      %v3942 = vld [vmem:[%s3] sm:$0xf]
      %v3943 = vld [vmem:[%s3 + $0x4] sm:$0xf]
      %v3944 = vld [vmem:[%s3 + $0x8] sm:$0xf]
      %v3945 = vld [vmem:[%s3 + $0xc] sm:$0xf]
      %v3946 = vld [vmem:[%s3 + $0x10] sm:$0xf]
      %v3947 = vld [vmem:[%s3 + $0x14] sm:$0xf]
      %v3948 = vld [vmem:[%s3 + $0x18] sm:$0xf]
      %v3949 = vld [vmem:[%s3 + $0x1c] sm:$0xf]
      %v3950 = vunpack.c.l.bf16 %v3942
      %v3951 = vunpack.c.l.bf16 %v3943
      %v3952 = vunpack.c.l.bf16 %v3944
      %v3953 = vunpack.c.l.bf16 %v3945
      %v3954 = vunpack.c.l.bf16 %v3946
      %v3955 = vunpack.c.l.bf16 %v3947
      %v3956 = vunpack.c.l.bf16 %v3948
      %v3957 = vunpack.c.l.bf16 %v3949
      %vm3958 = vcmask 261120
      %v3960 = vsel %vm3958, %v3928, 0
      %v3963 = vsel %vm3958, %v3929, 0
      %v3966 = vsel %vm3958, %v3930, 0
      %v3969 = vsel %vm3958, %v3931, 0
      %v3972 = vsel %vm3958, %v3932, 0
      %v3975 = vsel %vm3958, %v3933, 0
      %v3978 = vsel %vm3958, %v3934, 0
      %v3981 = vsel %vm3958, %v3935, 0
      %v3984 = vsel %vm3958, %v3936, 0
      %v3987 = vsel %vm3958, %v3937, 0
      %v3990 = vsel %vm3958, %v3938, 0
      %v3993 = vsel %vm3958, %v3939, 0
      %v3996 = vsel %vm3958, %v3940, 0
      %v3999 = vsel %vm3958, %v3941, 0
      %4001 = vmatprep.subr.mxu0 0.0
      %4002 = vmatpush1.msra.mxu0 0.0
      %4003 = vmatprep.subr.mxu0 0.0
      %4004 = vmatpush1.msra.mxu0 0.0
      %4005 = vmatprep.subr.mxu0 0.0
      %4006 = vmatpush1.msra.mxu0 0.0
      %4007 = vmatprep.subr.mxu0 0.0
      %4008 = vmatpush1.msra.mxu0 0.0
      %4009 = vmatprep.subr.mxu0 0.0
      %4010 = vmatpush1.msra.mxu0 0.0
      %4011 = vmatprep.subr.mxu0 0.0
      %4012 = vmatpush1.msra.mxu0 0.0
      %4013 = vmatprep.subr.mxu0 0.0
      %4014 = vmatpush1.msra.mxu0 0.0
      %4015 = vmatprep.subr.mxu0 0.0
      %4016 = vmatpush1.msra.mxu0 0.0
      %4017 = vmatprep.subr.mxu0 0.0
      %4018 = vmatpush1.msra.mxu0 0.0
      %4019 = vmatprep.subr.mxu0 0.0
      %4020 = vmatpush1.msra.mxu0 0.0
      %4021 = vmatprep.subr.mxu0 0.0
      %4022 = vmatpush1.msra.mxu0 0.0
      %4023 = vmatprep.subr.mxu0 0.0
      %4024 = vmatpush1.msra.mxu0 0.0
      %4025 = vmatprep.subr.mxu0 0.0
      %4026 = vmatpush1.msra.mxu0 %v3957
      %4027 = vmatprep.subr.mxu0 0.0
      %4028 = vmatpush1.msra.mxu0 %v3956
      %4029 = vmatprep.subr.mxu0 0.0
      %4030 = vmatpush1.msra.mxu0 %v3955
      %4031 = vmatprep.subr.mxu0 0.0
      %4032 = vmatpush1.msra.mxu0 %v3954
      %4033 = vmatprep.subr.mxu0 0.0
      %4034 = vmatpush2.msra.mxu0 0.0
      %4035 = vmatprep.subr.mxu0 0.0
      %4036 = vmatpush2.msra.mxu0 0.0
      %4037 = vmatprep.subr.mxu0 0.0
      %4038 = vmatpush2.msra.mxu0 0.0
      %4039 = vmatprep.subr.mxu0 0.0
      %4040 = vmatpush2.msra.mxu0 0.0
      %4041 = vmatprep.subr.mxu0 0.0
      %4042 = vmatpush2.msra.mxu0 0.0
      %4043 = vmatprep.subr.mxu0 0.0
      %4044 = vmatpush2.msra.mxu0 0.0
      %4045 = vmatprep.subr.mxu0 0.0
      %4046 = vmatpush2.msra.mxu0 0.0
      %4047 = vmatprep.subr.mxu0 0.0
      %4048 = vmatpush2.msra.mxu0 0.0
      %4049 = vmatprep.subr.mxu0 0.0
      %4050 = vmatpush2.msra.mxu0 0.0
      %4051 = vmatprep.subr.mxu0 0.0
      %4052 = vmatpush2.msra.mxu0 0.0
      %4053 = vmatprep.subr.mxu0 0.0
      %4054 = vmatpush2.msra.mxu0 0.0
      %4055 = vmatprep.subr.mxu0 0.0
      %4056 = vmatpush2.msra.mxu0 0.0
      %4057 = vmatprep.subr.mxu0 0.0
      %4058 = vmatpush2.msra.mxu0 0.0
      %4059 = vmatprep.subr.mxu0 0.0
      %4060 = vmatpush2.msra.mxu0 0.0
      %4061 = vmatprep.subr.mxu0 0.0
      %4062 = vmatpush2.msra.mxu0 0.0
      %4063 = vmatprep.subr.mxu0 0.0
      %4064 = vmatpush2.msra.mxu0 0.0
      %4065 = vmatprep.mubr.f32.mxu0 0.0
      %4066 = vmatmul.mubr.f32.gmra.mxu0 %v3960
      %v4067 = vpop.f32.mrf.mxu0
      %v4068 = vadd.f32 0.0, %v4067
      %v4069 = vpop.f32.mrf.mxu0
      %4070 = vmatprep.mubr.f32.mxu0 0.0
      %4071 = vmatmul.mubr.f32.gmra.mxu0 %v3963
      %v4072 = vpop.f32.mrf.mxu0
      %v4073 = vadd.f32 0.0, %v4072
      %v4074 = vpop.f32.mrf.mxu0
      %4075 = vmatprep.mubr.f32.mxu0 0.0
      %4076 = vmatmul.mubr.f32.gmra.mxu0 %v3966
      %v4077 = vpop.f32.mrf.mxu0
      %v4078 = vadd.f32 0.0, %v4077
      %v4079 = vpop.f32.mrf.mxu0
      %4080 = vmatprep.mubr.f32.mxu0 0.0
      %4081 = vmatmul.mubr.f32.gmra.mxu0 %v3969
      %v4082 = vpop.f32.mrf.mxu0
      %v4083 = vadd.f32 0.0, %v4082
      %v4084 = vpop.f32.mrf.mxu0
      %4085 = vmatprep.mubr.f32.mxu0 0.0
      %4086 = vmatmul.mubr.f32.gmra.mxu0 %v3972
      %v4087 = vpop.f32.mrf.mxu0
      %v4088 = vadd.f32 0.0, %v4087
      %v4089 = vpop.f32.mrf.mxu0
      %4090 = vmatprep.mubr.f32.mxu0 0.0
      %4091 = vmatmul.mubr.f32.gmra.mxu0 %v3975
      %v4092 = vpop.f32.mrf.mxu0
      %v4093 = vadd.f32 0.0, %v4092
      %v4094 = vpop.f32.mrf.mxu0
      %4095 = vmatprep.mubr.f32.mxu0 0.0
      %4096 = vmatmul.mubr.f32.gmra.mxu0 %v3978
      %v4097 = vpop.f32.mrf.mxu0
      %v4098 = vadd.f32 0.0, %v4097
      %v4099 = vpop.f32.mrf.mxu0
      %4100 = vmatprep.mubr.f32.mxu0 0.0
      %4101 = vmatmul.mubr.f32.gmra.mxu0 %v3981
      %v4102 = vpop.f32.mrf.mxu0
      %v4103 = vadd.f32 0.0, %v4102
      %v4104 = vpop.f32.mrf.mxu0
      %4105 = vmatprep.mubr.f32.mxu0 0.0
      %4106 = vmatmul.mubr.f32.gmra.mxu0 %v3984
      %v4107 = vpop.f32.mrf.mxu0
      %v4108 = vadd.f32 0.0, %v4107
      %v4109 = vpop.f32.mrf.mxu0
      %4110 = vmatprep.mubr.f32.mxu0 0.0
      %4111 = vmatmul.mubr.f32.gmra.mxu0 %v3987
      %v4112 = vpop.f32.mrf.mxu0
      %v4113 = vadd.f32 0.0, %v4112
      %v4114 = vpop.f32.mrf.mxu0
      %4115 = vmatprep.mubr.f32.mxu0 0.0
      %4116 = vmatmul.mubr.f32.gmra.mxu0 %v3990
      %v4117 = vpop.f32.mrf.mxu0
      %v4118 = vadd.f32 0.0, %v4117
      %v4119 = vpop.f32.mrf.mxu0
      %4120 = vmatprep.mubr.f32.mxu0 0.0
      %4121 = vmatmul.mubr.f32.gmra.mxu0 %v3993
      %v4122 = vpop.f32.mrf.mxu0
      %v4123 = vadd.f32 0.0, %v4122
      %v4124 = vpop.f32.mrf.mxu0
      %4125 = vmatprep.mubr.f32.mxu0 0.0
      %4126 = vmatmul.mubr.f32.gmra.mxu0 %v3996
      %v4127 = vpop.f32.mrf.mxu0
      %v4128 = vadd.f32 0.0, %v4127
      %v4129 = vpop.f32.mrf.mxu0
      %4130 = vmatprep.mubr.f32.mxu0 0.0
      %4131 = vmatmul.mubr.f32.gmra.mxu0 %v3999
      %v4132 = vpop.f32.mrf.mxu0
      %v4133 = vadd.f32 0.0, %v4132
      %v4134 = vpop.f32.mrf.mxu0
      %4135 = vdwg.mxu0
      %v4137 = vsel %vm3958, %v3914, 0
      %v4140 = vsel %vm3958, %v3915, 0
      %v4143 = vsel %vm3958, %v3916, 0
      %v4146 = vsel %vm3958, %v3917, 0
      %v4149 = vsel %vm3958, %v3918, 0
      %v4152 = vsel %vm3958, %v3919, 0
      %v4155 = vsel %vm3958, %v3920, 0
      %v4158 = vsel %vm3958, %v3921, 0
      %v4161 = vsel %vm3958, %v3922, 0
      %v4164 = vsel %vm3958, %v3923, 0
      %v4167 = vsel %vm3958, %v3924, 0
      %v4170 = vsel %vm3958, %v3925, 0
      %v4173 = vsel %vm3958, %v3926, 0
      %v4176 = vsel %vm3958, %v3927, 0
      %4178 = vmatprep.subr.mxu0 0.0
      %4179 = vmatpush1.msra.mxu0 0.0
      %4180 = vmatprep.subr.mxu0 0.0
      %4181 = vmatpush1.msra.mxu0 0.0
      %4182 = vmatprep.subr.mxu0 0.0
      %4183 = vmatpush1.msra.mxu0 0.0
      %4184 = vmatprep.subr.mxu0 0.0
      %4185 = vmatpush1.msra.mxu0 0.0
      %4186 = vmatprep.subr.mxu0 0.0
      %4187 = vmatpush1.msra.mxu0 0.0
      %4188 = vmatprep.subr.mxu0 0.0
      %4189 = vmatpush1.msra.mxu0 0.0
      %4190 = vmatprep.subr.mxu0 0.0
      %4191 = vmatpush1.msra.mxu0 0.0
      %4192 = vmatprep.subr.mxu0 0.0
      %4193 = vmatpush1.msra.mxu0 0.0
      %4194 = vmatprep.subr.mxu0 0.0
      %4195 = vmatpush1.msra.mxu0 0.0
      %4196 = vmatprep.subr.mxu0 0.0
      %4197 = vmatpush1.msra.mxu0 0.0
      %4198 = vmatprep.subr.mxu0 0.0
      %4199 = vmatpush1.msra.mxu0 0.0
      %4200 = vmatprep.subr.mxu0 0.0
      %4201 = vmatpush1.msra.mxu0 0.0
      %4202 = vmatprep.subr.mxu0 0.0
      %4203 = vmatpush1.msra.mxu0 %v3953
      %4204 = vmatprep.subr.mxu0 0.0
      %4205 = vmatpush1.msra.mxu0 %v3952
      %4206 = vmatprep.subr.mxu0 0.0
      %4207 = vmatpush1.msra.mxu0 %v3951
      %4208 = vmatprep.subr.mxu0 0.0
      %4209 = vmatpush1.msra.mxu0 %v3950
      %4210 = vmatprep.subr.mxu0 0.0
      %4211 = vmatpush2.msra.mxu0 0.0
      %4212 = vmatprep.subr.mxu0 0.0
      %4213 = vmatpush2.msra.mxu0 0.0
      %4214 = vmatprep.subr.mxu0 0.0
      %4215 = vmatpush2.msra.mxu0 0.0
      %4216 = vmatprep.subr.mxu0 0.0
      %4217 = vmatpush2.msra.mxu0 0.0
      %4218 = vmatprep.subr.mxu0 0.0
      %4219 = vmatpush2.msra.mxu0 0.0
      %4220 = vmatprep.subr.mxu0 0.0
      %4221 = vmatpush2.msra.mxu0 0.0
      %4222 = vmatprep.subr.mxu0 0.0
      %4223 = vmatpush2.msra.mxu0 0.0
      %4224 = vmatprep.subr.mxu0 0.0
      %4225 = vmatpush2.msra.mxu0 0.0
      %4226 = vmatprep.subr.mxu0 0.0
      %4227 = vmatpush2.msra.mxu0 0.0
      %4228 = vmatprep.subr.mxu0 0.0
      %4229 = vmatpush2.msra.mxu0 0.0
      %4230 = vmatprep.subr.mxu0 0.0
      %4231 = vmatpush2.msra.mxu0 0.0
      %4232 = vmatprep.subr.mxu0 0.0
      %4233 = vmatpush2.msra.mxu0 0.0
      %4234 = vmatprep.subr.mxu0 0.0
      %4235 = vmatpush2.msra.mxu0 0.0
      %4236 = vmatprep.subr.mxu0 0.0
      %4237 = vmatpush2.msra.mxu0 0.0
      %4238 = vmatprep.subr.mxu0 0.0
      %4239 = vmatpush2.msra.mxu0 0.0
      %4240 = vmatprep.subr.mxu0 0.0
      %4241 = vmatpush2.msra.mxu0 0.0
      %4242 = vmatprep.mubr.f32.mxu0 0.0
      %4243 = vmatmul.mubr.f32.gmra.mxu0 %v4137
      %v4244 = vpop.f32.mrf.mxu0
      %v4245 = vadd.f32 %v4068, %v4244
      %v4246 = vpop.f32.mrf.mxu0
      %4247 = vmatprep.mubr.f32.mxu0 0.0
      %4248 = vmatmul.mubr.f32.gmra.mxu0 %v4140
      %v4249 = vpop.f32.mrf.mxu0
      %v4250 = vadd.f32 %v4073, %v4249
      %v4251 = vpop.f32.mrf.mxu0
      %4252 = vmatprep.mubr.f32.mxu0 0.0
      %4253 = vmatmul.mubr.f32.gmra.mxu0 %v4143
      %v4254 = vpop.f32.mrf.mxu0
      %v4255 = vadd.f32 %v4078, %v4254
      %v4256 = vpop.f32.mrf.mxu0
      %4257 = vmatprep.mubr.f32.mxu0 0.0
      %4258 = vmatmul.mubr.f32.gmra.mxu0 %v4146
      %v4259 = vpop.f32.mrf.mxu0
      %v4260 = vadd.f32 %v4083, %v4259
      %v4261 = vpop.f32.mrf.mxu0
      %4262 = vmatprep.mubr.f32.mxu0 0.0
      %4263 = vmatmul.mubr.f32.gmra.mxu0 %v4149
      %v4264 = vpop.f32.mrf.mxu0
      %v4265 = vadd.f32 %v4088, %v4264
      %v4266 = vpop.f32.mrf.mxu0
      %4267 = vmatprep.mubr.f32.mxu0 0.0
      %4268 = vmatmul.mubr.f32.gmra.mxu0 %v4152
      %v4269 = vpop.f32.mrf.mxu0
      %v4270 = vadd.f32 %v4093, %v4269
      %v4271 = vpop.f32.mrf.mxu0
      %4272 = vmatprep.mubr.f32.mxu0 0.0
      %4273 = vmatmul.mubr.f32.gmra.mxu0 %v4155
      %v4274 = vpop.f32.mrf.mxu0
      %v4275 = vadd.f32 %v4098, %v4274
      %v4276 = vpop.f32.mrf.mxu0
      %4277 = vmatprep.mubr.f32.mxu0 0.0
      %4278 = vmatmul.mubr.f32.gmra.mxu0 %v4158
      %v4279 = vpop.f32.mrf.mxu0
      %v4280 = vadd.f32 %v4103, %v4279
      %v4281 = vpop.f32.mrf.mxu0
      %4282 = vmatprep.mubr.f32.mxu0 0.0
      %4283 = vmatmul.mubr.f32.gmra.mxu0 %v4161
      %v4284 = vpop.f32.mrf.mxu0
      %v4285 = vadd.f32 %v4108, %v4284
      %v4286 = vpop.f32.mrf.mxu0
      %4287 = vmatprep.mubr.f32.mxu0 0.0
      %4288 = vmatmul.mubr.f32.gmra.mxu0 %v4164
      %v4289 = vpop.f32.mrf.mxu0
      %v4290 = vadd.f32 %v4113, %v4289
      %v4291 = vpop.f32.mrf.mxu0
      %4292 = vmatprep.mubr.f32.mxu0 0.0
      %4293 = vmatmul.mubr.f32.gmra.mxu0 %v4167
      %v4294 = vpop.f32.mrf.mxu0
      %v4295 = vadd.f32 %v4118, %v4294
      %v4296 = vpop.f32.mrf.mxu0
      %4297 = vmatprep.mubr.f32.mxu0 0.0
      %4298 = vmatmul.mubr.f32.gmra.mxu0 %v4170
      %v4299 = vpop.f32.mrf.mxu0
      %v4300 = vadd.f32 %v4123, %v4299
      %v4301 = vpop.f32.mrf.mxu0
      %4302 = vmatprep.mubr.f32.mxu0 0.0
      %4303 = vmatmul.mubr.f32.gmra.mxu0 %v4173
      %v4304 = vpop.f32.mrf.mxu0
      %v4305 = vadd.f32 %v4128, %v4304
      %v4306 = vpop.f32.mrf.mxu0
      %4307 = vmatprep.mubr.f32.mxu0 0.0
      %4308 = vmatmul.mubr.f32.gmra.mxu0 %v4176
      %v4309 = vpop.f32.mrf.mxu0
      %v4310 = vadd.f32 %v4133, %v4309
      %v4311 = vpop.f32.mrf.mxu0
      %4312 = vdwg.mxu0
      %v4313 = vld [vmem:[%s8] sm:$0x3]
      %v4314 = vld [vmem:[%s9] sm:$0xff]
      %v4315 = vld [vmem:[%s9 + $0x8] sm:$0xff]
      %v4316 = vld [vmem:[%s9 + $0x10] sm:$0xff]
      %v4317 = vld [vmem:[%s9 + $0x18] sm:$0xff]
      %v4318 = vld [vmem:[%s9 + $0x20] sm:$0xff]
      %v4319 = vld [vmem:[%s9 + $0x28] sm:$0xff]
      %v4320 = vld [vmem:[%s9 + $0x30] sm:$0xff]
      %v4321 = vld [vmem:[%s9 + $0x38] sm:$0xff]
      %v4322 = vld [vmem:[%s9 + $0x40] sm:$0xff]
      %v4323 = vld [vmem:[%s9 + $0x48] sm:$0xff]
      %v4324 = vld [vmem:[%s9 + $0x50] sm:$0xff]
      %v4325 = vld [vmem:[%s9 + $0x58] sm:$0xff]
      %v4326 = vld [vmem:[%s9 + $0x60] sm:$0xff]
      %v4327 = vld [vmem:[%s9 + $0x68] sm:$0xff]
      %vm4328 = vcmask 916480
      %v4330 = vsel %vm4328, %v4313, 0
      %4332 = vmatprep.subr.mxu0 0.0
      %4333 = vmatpush1.msra.mxu0 0.0
      %4334 = vmatprep.subr.mxu0 0.0
      %4335 = vmatpush1.msra.mxu0 0.0
      %4336 = vmatprep.subr.mxu0 0.0
      %4337 = vmatpush1.msra.mxu0 %v4310
      %4338 = vmatprep.subr.mxu0 0.0
      %4339 = vmatpush1.msra.mxu0 %v4305
      %4340 = vmatprep.subr.mxu0 0.0
      %4341 = vmatpush1.msra.mxu0 %v4300
      %4342 = vmatprep.subr.mxu0 0.0
      %4343 = vmatpush1.msra.mxu0 %v4295
      %4344 = vmatprep.subr.mxu0 0.0
      %4345 = vmatpush1.msra.mxu0 %v4290
      %4346 = vmatprep.subr.mxu0 0.0
      %4347 = vmatpush1.msra.mxu0 %v4285
      %4348 = vmatprep.subr.mxu0 0.0
      %4349 = vmatpush1.msra.mxu0 %v4280
      %4350 = vmatprep.subr.mxu0 0.0
      %4351 = vmatpush1.msra.mxu0 %v4275
      %4352 = vmatprep.subr.mxu0 0.0
      %4353 = vmatpush1.msra.mxu0 %v4270
      %4354 = vmatprep.subr.mxu0 0.0
      %4355 = vmatpush1.msra.mxu0 %v4265
      %4356 = vmatprep.subr.mxu0 0.0
      %4357 = vmatpush1.msra.mxu0 %v4260
      %4358 = vmatprep.subr.mxu0 0.0
      %4359 = vmatpush1.msra.mxu0 %v4255
      %4360 = vmatprep.subr.mxu0 0.0
      %4361 = vmatpush1.msra.mxu0 %v4250
      %4362 = vmatprep.subr.mxu0 0.0
      %4363 = vmatpush1.msra.mxu0 %v4245
      %4364 = vmatprep.subr.mxu0 0.0
      %4365 = vmatpush2.msra.mxu0 0.0
      %4366 = vmatprep.subr.mxu0 0.0
      %4367 = vmatpush2.msra.mxu0 0.0
      %4368 = vmatprep.subr.mxu0 0.0
      %4369 = vmatpush2.msra.mxu0 0.0
      %4370 = vmatprep.subr.mxu0 0.0
      %4371 = vmatpush2.msra.mxu0 0.0
      %4372 = vmatprep.subr.mxu0 0.0
      %4373 = vmatpush2.msra.mxu0 0.0
      %4374 = vmatprep.subr.mxu0 0.0
      %4375 = vmatpush2.msra.mxu0 0.0
      %4376 = vmatprep.subr.mxu0 0.0
      %4377 = vmatpush2.msra.mxu0 0.0
      %4378 = vmatprep.subr.mxu0 0.0
      %4379 = vmatpush2.msra.mxu0 0.0
      %4380 = vmatprep.subr.mxu0 0.0
      %4381 = vmatpush2.msra.mxu0 0.0
      %4382 = vmatprep.subr.mxu0 0.0
      %4383 = vmatpush2.msra.mxu0 0.0
      %4384 = vmatprep.subr.mxu0 0.0
      %4385 = vmatpush2.msra.mxu0 0.0
      %4386 = vmatprep.subr.mxu0 0.0
      %4387 = vmatpush2.msra.mxu0 0.0
      %4388 = vmatprep.subr.mxu0 0.0
      %4389 = vmatpush2.msra.mxu0 0.0
      %4390 = vmatprep.subr.mxu0 0.0
      %4391 = vmatpush2.msra.mxu0 0.0
      %4392 = vmatprep.subr.mxu0 0.0
      %4393 = vmatpush2.msra.mxu0 0.0
      %4394 = vmatprep.subr.mxu0 0.0
      %4395 = vmatpush2.msra.mxu0 0.0
      %4396 = vmatprep.mubr.f32.mxu0 0.0
      %4397 = vmatmul.mubr.f32.gmra.mxu0 %v4330
      %v4398 = vpop.f32.mrf.mxu0
      %v4399 = vadd.f32 0.0, %v4398
      %v4400 = vpop.f32.mrf.mxu0
      %4401 = vdwg.mxu0
      %v4402 = vmul.f32 %v4245, %v4245
      %v4403 = vmul.f32 %v4250, %v4250
      %v4404 = vmul.f32 %v4255, %v4255
      %v4405 = vmul.f32 %v4260, %v4260
      %v4406 = vmul.f32 %v4265, %v4265
      %v4407 = vmul.f32 %v4270, %v4270
      %v4408 = vmul.f32 %v4275, %v4275
      %v4409 = vmul.f32 %v4280, %v4280
      %v4410 = vmul.f32 %v4285, %v4285
      %v4411 = vmul.f32 %v4290, %v4290
      %v4412 = vmul.f32 %v4295, %v4295
      %v4413 = vmul.f32 %v4300, %v4300
      %v4414 = vmul.f32 %v4305, %v4305
      %v4415 = vmul.f32 %v4310, %v4310
      %4416 = vmatprep.subr.mxu0 0.0
      %4417 = vmatpush1.msra.mxu0 0.0
      %4418 = vmatprep.subr.mxu0 0.0
      %4419 = vmatpush1.msra.mxu0 0.0
      %4420 = vmatprep.subr.mxu0 0.0
      %4421 = vmatpush1.msra.mxu0 %v4415
      %4422 = vmatprep.subr.mxu0 0.0
      %4423 = vmatpush1.msra.mxu0 %v4414
      %4424 = vmatprep.subr.mxu0 0.0
      %4425 = vmatpush1.msra.mxu0 %v4413
      %4426 = vmatprep.subr.mxu0 0.0
      %4427 = vmatpush1.msra.mxu0 %v4412
      %4428 = vmatprep.subr.mxu0 0.0
      %4429 = vmatpush1.msra.mxu0 %v4411
      %4430 = vmatprep.subr.mxu0 0.0
      %4431 = vmatpush1.msra.mxu0 %v4410
      %4432 = vmatprep.subr.mxu0 0.0
      %4433 = vmatpush1.msra.mxu0 %v4409
      %4434 = vmatprep.subr.mxu0 0.0
      %4435 = vmatpush1.msra.mxu0 %v4408
      %4436 = vmatprep.subr.mxu0 0.0
      %4437 = vmatpush1.msra.mxu0 %v4407
      %4438 = vmatprep.subr.mxu0 0.0
      %4439 = vmatpush1.msra.mxu0 %v4406
      %4440 = vmatprep.subr.mxu0 0.0
      %4441 = vmatpush1.msra.mxu0 %v4405
      %4442 = vmatprep.subr.mxu0 0.0
      %4443 = vmatpush1.msra.mxu0 %v4404
      %4444 = vmatprep.subr.mxu0 0.0
      %4445 = vmatpush1.msra.mxu0 %v4403
      %4446 = vmatprep.subr.mxu0 0.0
      %4447 = vmatpush1.msra.mxu0 %v4402
      %4448 = vmatprep.subr.mxu0 0.0
      %4449 = vmatpush2.msra.mxu0 0.0
      %4450 = vmatprep.subr.mxu0 0.0
      %4451 = vmatpush2.msra.mxu0 0.0
      %4452 = vmatprep.subr.mxu0 0.0
      %4453 = vmatpush2.msra.mxu0 0.0
      %4454 = vmatprep.subr.mxu0 0.0
      %4455 = vmatpush2.msra.mxu0 0.0
      %4456 = vmatprep.subr.mxu0 0.0
      %4457 = vmatpush2.msra.mxu0 0.0
      %4458 = vmatprep.subr.mxu0 0.0
      %4459 = vmatpush2.msra.mxu0 0.0
      %4460 = vmatprep.subr.mxu0 0.0
      %4461 = vmatpush2.msra.mxu0 0.0
      %4462 = vmatprep.subr.mxu0 0.0
      %4463 = vmatpush2.msra.mxu0 0.0
      %4464 = vmatprep.subr.mxu0 0.0
      %4465 = vmatpush2.msra.mxu0 0.0
      %4466 = vmatprep.subr.mxu0 0.0
      %4467 = vmatpush2.msra.mxu0 0.0
      %4468 = vmatprep.subr.mxu0 0.0
      %4469 = vmatpush2.msra.mxu0 0.0
      %4470 = vmatprep.subr.mxu0 0.0
      %4471 = vmatpush2.msra.mxu0 0.0
      %4472 = vmatprep.subr.mxu0 0.0
      %4473 = vmatpush2.msra.mxu0 0.0
      %4474 = vmatprep.subr.mxu0 0.0
      %4475 = vmatpush2.msra.mxu0 0.0
      %4476 = vmatprep.subr.mxu0 0.0
      %4477 = vmatpush2.msra.mxu0 0.0
      %4478 = vmatprep.subr.mxu0 0.0
      %4479 = vmatpush2.msra.mxu0 0.0
      %4480 = vmatprep.mubr.f32.mxu0 0.0
      %4481 = vmatmul.mubr.f32.gmra.mxu0 %v4330
      %v4482 = vpop.f32.mrf.mxu0
      %v4483 = vadd.f32 0.0, %v4482
      %v4484 = vpop.f32.mrf.mxu0
      %4485 = vdwg.mxu0
      %v4486 = vmul.f32 %v4399, %v4399
      %v4487 = vsub.f32 %v4483, %v4486
      %v4488 = vadd.f32 %v4487, 1e-05
      %v4489 = vrsqrt.pop %v4488
      %v4491 = vsel %vm3300, %v4314, 0
      %v4494 = vsel %vm3300, %v4315, 0
      %v4497 = vsel %vm3300, %v4316, 0
      %v4500 = vsel %vm3300, %v4317, 0
      %v4503 = vsel %vm3300, %v4318, 0
      %v4506 = vsel %vm3300, %v4319, 0
      %v4509 = vsel %vm3300, %v4320, 0
      %v4512 = vsel %vm3300, %v4321, 0
      %v4515 = vsel %vm3300, %v4322, 0
      %v4518 = vsel %vm3300, %v4323, 0
      %v4521 = vsel %vm3300, %v4324, 0
      %v4524 = vsel %vm3300, %v4325, 0
      %v4527 = vsel %vm3300, %v4326, 0
      %v4530 = vsel %vm3300, %v4327, 0
      %v4533 = vsel %vm3385, %v4399, 0
      %4535 = vmatprep.subr.mxu0 0.0
      %4536 = vmatpush1.msra.mxu0 0.0
      %4537 = vmatprep.subr.mxu0 0.0
      %4538 = vmatpush1.msra.mxu0 0.0
      %4539 = vmatprep.subr.mxu0 0.0
      %4540 = vmatpush1.msra.mxu0 0.0
      %4541 = vmatprep.subr.mxu0 0.0
      %4542 = vmatpush1.msra.mxu0 0.0
      %4543 = vmatprep.subr.mxu0 0.0
      %4544 = vmatpush1.msra.mxu0 0.0
      %4545 = vmatprep.subr.mxu0 0.0
      %4546 = vmatpush1.msra.mxu0 0.0
      %4547 = vmatprep.subr.mxu0 0.0
      %4548 = vmatpush1.msra.mxu0 0.0
      %4549 = vmatprep.subr.mxu0 0.0
      %4550 = vmatpush1.msra.mxu0 0.0
      %4551 = vmatprep.subr.mxu0 0.0
      %4552 = vmatpush1.msra.mxu0 0.0
      %4553 = vmatprep.subr.mxu0 0.0
      %4554 = vmatpush1.msra.mxu0 0.0
      %4555 = vmatprep.subr.mxu0 0.0
      %4556 = vmatpush1.msra.mxu0 0.0
      %4557 = vmatprep.subr.mxu0 0.0
      %4558 = vmatpush1.msra.mxu0 0.0
      %4559 = vmatprep.subr.mxu0 0.0
      %4560 = vmatpush1.msra.mxu0 0.0
      %4561 = vmatprep.subr.mxu0 0.0
      %4562 = vmatpush1.msra.mxu0 0.0
      %4563 = vmatprep.subr.mxu0 0.0
      %4564 = vmatpush1.msra.mxu0 0.0
      %4565 = vmatprep.subr.mxu0 0.0
      %4566 = vmatpush1.msra.mxu0 %v4533
      %4567 = vmatprep.subr.mxu0 0.0
      %4568 = vmatpush2.msra.mxu0 0.0
      %4569 = vmatprep.subr.mxu0 0.0
      %4570 = vmatpush2.msra.mxu0 0.0
      %4571 = vmatprep.subr.mxu0 0.0
      %4572 = vmatpush2.msra.mxu0 0.0
      %4573 = vmatprep.subr.mxu0 0.0
      %4574 = vmatpush2.msra.mxu0 0.0
      %4575 = vmatprep.subr.mxu0 0.0
      %4576 = vmatpush2.msra.mxu0 0.0
      %4577 = vmatprep.subr.mxu0 0.0
      %4578 = vmatpush2.msra.mxu0 0.0
      %4579 = vmatprep.subr.mxu0 0.0
      %4580 = vmatpush2.msra.mxu0 0.0
      %4581 = vmatprep.subr.mxu0 0.0
      %4582 = vmatpush2.msra.mxu0 0.0
      %4583 = vmatprep.subr.mxu0 0.0
      %4584 = vmatpush2.msra.mxu0 0.0
      %4585 = vmatprep.subr.mxu0 0.0
      %4586 = vmatpush2.msra.mxu0 0.0
      %4587 = vmatprep.subr.mxu0 0.0
      %4588 = vmatpush2.msra.mxu0 0.0
      %4589 = vmatprep.subr.mxu0 0.0
      %4590 = vmatpush2.msra.mxu0 0.0
      %4591 = vmatprep.subr.mxu0 0.0
      %4592 = vmatpush2.msra.mxu0 0.0
      %4593 = vmatprep.subr.mxu0 0.0
      %4594 = vmatpush2.msra.mxu0 0.0
      %4595 = vmatprep.subr.mxu0 0.0
      %4596 = vmatpush2.msra.mxu0 0.0
      %4597 = vmatprep.subr.mxu0 0.0
      %4598 = vmatpush2.msra.mxu0 0.0
      %4599 = vmatprep.mubr.f32.mxu0 0.0
      %4600 = vmatmul.mubr.f32.gmra.mxu0 %v4491
      %v4601 = vpop.f32.mrf.mxu0
      %v4602 = vadd.f32 0.0, %v4601
      %v4603 = vpop.f32.mrf.mxu0
      %4604 = vmatprep.mubr.f32.mxu0 0.0
      %4605 = vmatmul.mubr.f32.gmra.mxu0 %v4494
      %v4606 = vpop.f32.mrf.mxu0
      %v4607 = vadd.f32 0.0, %v4606
      %v4608 = vpop.f32.mrf.mxu0
      %4609 = vmatprep.mubr.f32.mxu0 0.0
      %4610 = vmatmul.mubr.f32.gmra.mxu0 %v4497
      %v4611 = vpop.f32.mrf.mxu0
      %v4612 = vadd.f32 0.0, %v4611
      %v4613 = vpop.f32.mrf.mxu0
      %4614 = vmatprep.mubr.f32.mxu0 0.0
      %4615 = vmatmul.mubr.f32.gmra.mxu0 %v4500
      %v4616 = vpop.f32.mrf.mxu0
      %v4617 = vadd.f32 0.0, %v4616
      %v4618 = vpop.f32.mrf.mxu0
      %4619 = vmatprep.mubr.f32.mxu0 0.0
      %4620 = vmatmul.mubr.f32.gmra.mxu0 %v4503
      %v4621 = vpop.f32.mrf.mxu0
      %v4622 = vadd.f32 0.0, %v4621
      %v4623 = vpop.f32.mrf.mxu0
      %4624 = vmatprep.mubr.f32.mxu0 0.0
      %4625 = vmatmul.mubr.f32.gmra.mxu0 %v4506
      %v4626 = vpop.f32.mrf.mxu0
      %v4627 = vadd.f32 0.0, %v4626
      %v4628 = vpop.f32.mrf.mxu0
      %4629 = vmatprep.mubr.f32.mxu0 0.0
      %4630 = vmatmul.mubr.f32.gmra.mxu0 %v4509
      %v4631 = vpop.f32.mrf.mxu0
      %v4632 = vadd.f32 0.0, %v4631
      %v4633 = vpop.f32.mrf.mxu0
      %4634 = vmatprep.mubr.f32.mxu0 0.0
      %4635 = vmatmul.mubr.f32.gmra.mxu0 %v4512
      %v4636 = vpop.f32.mrf.mxu0
      %v4637 = vadd.f32 0.0, %v4636
      %v4638 = vpop.f32.mrf.mxu0
      %4639 = vmatprep.mubr.f32.mxu0 0.0
      %4640 = vmatmul.mubr.f32.gmra.mxu0 %v4515
      %v4641 = vpop.f32.mrf.mxu0
      %v4642 = vadd.f32 0.0, %v4641
      %v4643 = vpop.f32.mrf.mxu0
      %4644 = vmatprep.mubr.f32.mxu0 0.0
      %4645 = vmatmul.mubr.f32.gmra.mxu0 %v4518
      %v4646 = vpop.f32.mrf.mxu0
      %v4647 = vadd.f32 0.0, %v4646
      %v4648 = vpop.f32.mrf.mxu0
      %4649 = vmatprep.mubr.f32.mxu0 0.0
      %4650 = vmatmul.mubr.f32.gmra.mxu0 %v4521
      %v4651 = vpop.f32.mrf.mxu0
      %v4652 = vadd.f32 0.0, %v4651
      %v4653 = vpop.f32.mrf.mxu0
      %4654 = vmatprep.mubr.f32.mxu0 0.0
      %4655 = vmatmul.mubr.f32.gmra.mxu0 %v4524
      %v4656 = vpop.f32.mrf.mxu0
      %v4657 = vadd.f32 0.0, %v4656
      %v4658 = vpop.f32.mrf.mxu0
      %4659 = vmatprep.mubr.f32.mxu0 0.0
      %4660 = vmatmul.mubr.f32.gmra.mxu0 %v4527
      %v4661 = vpop.f32.mrf.mxu0
      %v4662 = vadd.f32 0.0, %v4661
      %v4663 = vpop.f32.mrf.mxu0
      %4664 = vmatprep.mubr.f32.mxu0 0.0
      %4665 = vmatmul.mubr.f32.gmra.mxu0 %v4530
      %v4666 = vpop.f32.mrf.mxu0
      %v4667 = vadd.f32 0.0, %v4666
      %v4668 = vpop.f32.mrf.mxu0
      %4669 = vdwg.mxu0
      %v4671 = vsel %vm3385, %v4489, 0
      %4673 = vmatprep.subr.mxu0 0.0
      %4674 = vmatpush1.msra.mxu0 0.0
      %4675 = vmatprep.subr.mxu0 0.0
      %4676 = vmatpush1.msra.mxu0 0.0
      %4677 = vmatprep.subr.mxu0 0.0
      %4678 = vmatpush1.msra.mxu0 0.0
      %4679 = vmatprep.subr.mxu0 0.0
      %4680 = vmatpush1.msra.mxu0 0.0
      %4681 = vmatprep.subr.mxu0 0.0
      %4682 = vmatpush1.msra.mxu0 0.0
      %4683 = vmatprep.subr.mxu0 0.0
      %4684 = vmatpush1.msra.mxu0 0.0
      %4685 = vmatprep.subr.mxu0 0.0
      %4686 = vmatpush1.msra.mxu0 0.0
      %4687 = vmatprep.subr.mxu0 0.0
      %4688 = vmatpush1.msra.mxu0 0.0
      %4689 = vmatprep.subr.mxu0 0.0
      %4690 = vmatpush1.msra.mxu0 0.0
      %4691 = vmatprep.subr.mxu0 0.0
      %4692 = vmatpush1.msra.mxu0 0.0
      %4693 = vmatprep.subr.mxu0 0.0
      %4694 = vmatpush1.msra.mxu0 0.0
      %4695 = vmatprep.subr.mxu0 0.0
      %4696 = vmatpush1.msra.mxu0 0.0
      %4697 = vmatprep.subr.mxu0 0.0
      %4698 = vmatpush1.msra.mxu0 0.0
      %4699 = vmatprep.subr.mxu0 0.0
      %4700 = vmatpush1.msra.mxu0 0.0
      %4701 = vmatprep.subr.mxu0 0.0
      %4702 = vmatpush1.msra.mxu0 0.0
      %4703 = vmatprep.subr.mxu0 0.0
      %4704 = vmatpush1.msra.mxu0 %v4671
      %4705 = vmatprep.subr.mxu0 0.0
      %4706 = vmatpush2.msra.mxu0 0.0
      %4707 = vmatprep.subr.mxu0 0.0
      %4708 = vmatpush2.msra.mxu0 0.0
      %4709 = vmatprep.subr.mxu0 0.0
      %4710 = vmatpush2.msra.mxu0 0.0
      %4711 = vmatprep.subr.mxu0 0.0
      %4712 = vmatpush2.msra.mxu0 0.0
      %4713 = vmatprep.subr.mxu0 0.0
      %4714 = vmatpush2.msra.mxu0 0.0
      %4715 = vmatprep.subr.mxu0 0.0
      %4716 = vmatpush2.msra.mxu0 0.0
      %4717 = vmatprep.subr.mxu0 0.0
      %4718 = vmatpush2.msra.mxu0 0.0
      %4719 = vmatprep.subr.mxu0 0.0
      %4720 = vmatpush2.msra.mxu0 0.0
      %4721 = vmatprep.subr.mxu0 0.0
      %4722 = vmatpush2.msra.mxu0 0.0
      %4723 = vmatprep.subr.mxu0 0.0
      %4724 = vmatpush2.msra.mxu0 0.0
      %4725 = vmatprep.subr.mxu0 0.0
      %4726 = vmatpush2.msra.mxu0 0.0
      %4727 = vmatprep.subr.mxu0 0.0
      %4728 = vmatpush2.msra.mxu0 0.0
      %4729 = vmatprep.subr.mxu0 0.0
      %4730 = vmatpush2.msra.mxu0 0.0
      %4731 = vmatprep.subr.mxu0 0.0
      %4732 = vmatpush2.msra.mxu0 0.0
      %4733 = vmatprep.subr.mxu0 0.0
      %4734 = vmatpush2.msra.mxu0 0.0
      %4735 = vmatprep.subr.mxu0 0.0
      %4736 = vmatpush2.msra.mxu0 0.0
      %4737 = vmatprep.mubr.f32.mxu0 0.0
      %4738 = vmatmul.mubr.f32.gmra.mxu0 %v4491
      %v4739 = vpop.f32.mrf.mxu0
      %v4740 = vadd.f32 0.0, %v4739
      %v4741 = vpop.f32.mrf.mxu0
      %4742 = vmatprep.mubr.f32.mxu0 0.0
      %4743 = vmatmul.mubr.f32.gmra.mxu0 %v4494
      %v4744 = vpop.f32.mrf.mxu0
      %v4745 = vadd.f32 0.0, %v4744
      %v4746 = vpop.f32.mrf.mxu0
      %4747 = vmatprep.mubr.f32.mxu0 0.0
      %4748 = vmatmul.mubr.f32.gmra.mxu0 %v4497
      %v4749 = vpop.f32.mrf.mxu0
      %v4750 = vadd.f32 0.0, %v4749
      %v4751 = vpop.f32.mrf.mxu0
      %4752 = vmatprep.mubr.f32.mxu0 0.0
      %4753 = vmatmul.mubr.f32.gmra.mxu0 %v4500
      %v4754 = vpop.f32.mrf.mxu0
      %v4755 = vadd.f32 0.0, %v4754
      %v4756 = vpop.f32.mrf.mxu0
      %4757 = vmatprep.mubr.f32.mxu0 0.0
      %4758 = vmatmul.mubr.f32.gmra.mxu0 %v4503
      %v4759 = vpop.f32.mrf.mxu0
      %v4760 = vadd.f32 0.0, %v4759
      %v4761 = vpop.f32.mrf.mxu0
      %4762 = vmatprep.mubr.f32.mxu0 0.0
      %4763 = vmatmul.mubr.f32.gmra.mxu0 %v4506
      %v4764 = vpop.f32.mrf.mxu0
      %v4765 = vadd.f32 0.0, %v4764
      %v4766 = vpop.f32.mrf.mxu0
      %4767 = vmatprep.mubr.f32.mxu0 0.0
      %4768 = vmatmul.mubr.f32.gmra.mxu0 %v4509
      %v4769 = vpop.f32.mrf.mxu0
      %v4770 = vadd.f32 0.0, %v4769
      %v4771 = vpop.f32.mrf.mxu0
      %4772 = vmatprep.mubr.f32.mxu0 0.0
      %4773 = vmatmul.mubr.f32.gmra.mxu0 %v4512
      %v4774 = vpop.f32.mrf.mxu0
      %v4775 = vadd.f32 0.0, %v4774
      %v4776 = vpop.f32.mrf.mxu0
      %4777 = vmatprep.mubr.f32.mxu0 0.0
      %4778 = vmatmul.mubr.f32.gmra.mxu0 %v4515
      %v4779 = vpop.f32.mrf.mxu0
      %v4780 = vadd.f32 0.0, %v4779
      %v4781 = vpop.f32.mrf.mxu0
      %4782 = vmatprep.mubr.f32.mxu0 0.0
      %4783 = vmatmul.mubr.f32.gmra.mxu0 %v4518
      %v4784 = vpop.f32.mrf.mxu0
      %v4785 = vadd.f32 0.0, %v4784
      %v4786 = vpop.f32.mrf.mxu0
      %4787 = vmatprep.mubr.f32.mxu0 0.0
      %4788 = vmatmul.mubr.f32.gmra.mxu0 %v4521
      %v4789 = vpop.f32.mrf.mxu0
      %v4790 = vadd.f32 0.0, %v4789
      %v4791 = vpop.f32.mrf.mxu0
      %4792 = vmatprep.mubr.f32.mxu0 0.0
      %4793 = vmatmul.mubr.f32.gmra.mxu0 %v4524
      %v4794 = vpop.f32.mrf.mxu0
      %v4795 = vadd.f32 0.0, %v4794
      %v4796 = vpop.f32.mrf.mxu0
      %4797 = vmatprep.mubr.f32.mxu0 0.0
      %4798 = vmatmul.mubr.f32.gmra.mxu0 %v4527
      %v4799 = vpop.f32.mrf.mxu0
      %v4800 = vadd.f32 0.0, %v4799
      %v4801 = vpop.f32.mrf.mxu0
      %4802 = vmatprep.mubr.f32.mxu0 0.0
      %4803 = vmatmul.mubr.f32.gmra.mxu0 %v4530
      %v4804 = vpop.f32.mrf.mxu0
      %v4805 = vadd.f32 0.0, %v4804
      %v4806 = vpop.f32.mrf.mxu0
      %4807 = vdwg.mxu0
      %v4808 = vsub.f32 %v4245, %v4602
      %v4809 = vsub.f32 %v4250, %v4607
      %v4810 = vsub.f32 %v4255, %v4612
      %v4811 = vsub.f32 %v4260, %v4617
      %v4812 = vsub.f32 %v4265, %v4622
      %v4813 = vsub.f32 %v4270, %v4627
      %v4814 = vsub.f32 %v4275, %v4632
      %v4815 = vsub.f32 %v4280, %v4637
      %v4816 = vsub.f32 %v4285, %v4642
      %v4817 = vsub.f32 %v4290, %v4647
      %v4818 = vsub.f32 %v4295, %v4652
      %v4819 = vsub.f32 %v4300, %v4657
      %v4820 = vsub.f32 %v4305, %v4662
      %v4821 = vsub.f32 %v4310, %v4667
      %v4822 = vmul.f32 %v4808, %v4740
      %v4823 = vmul.f32 %v4809, %v4745
      %v4824 = vmul.f32 %v4810, %v4750
      %v4825 = vmul.f32 %v4811, %v4755
      %v4826 = vmul.f32 %v4812, %v4760
      %v4827 = vmul.f32 %v4813, %v4765
      %v4828 = vmul.f32 %v4814, %v4770
      %v4829 = vmul.f32 %v4815, %v4775
      %v4830 = vmul.f32 %v4816, %v4780
      %v4831 = vmul.f32 %v4817, %v4785
      %v4832 = vmul.f32 %v4818, %v4790
      %v4833 = vmul.f32 %v4819, %v4795
      %v4834 = vmul.f32 %v4820, %v4800
      %v4835 = vmul.f32 %v4821, %v4805
      %vm4836 = vcmp.ge.f32.partialorder %v4822, 0.0
      %vm4837 = vcmp.ge.f32.partialorder %v4823, 0.0
      %vm4838 = vcmp.ge.f32.partialorder %v4824, 0.0
      %vm4839 = vcmp.ge.f32.partialorder %v4825, 0.0
      %vm4840 = vcmp.ge.f32.partialorder %v4826, 0.0
      %vm4841 = vcmp.ge.f32.partialorder %v4827, 0.0
      %vm4842 = vcmp.ge.f32.partialorder %v4828, 0.0
      %vm4843 = vcmp.ge.f32.partialorder %v4829, 0.0
      %vm4844 = vcmp.ge.f32.partialorder %v4830, 0.0
      %vm4845 = vcmp.ge.f32.partialorder %v4831, 0.0
      %vm4846 = vcmp.ge.f32.partialorder %v4832, 0.0
      %vm4847 = vcmp.ge.f32.partialorder %v4833, 0.0
      %vm4848 = vcmp.ge.f32.partialorder %v4834, 0.0
      %vm4849 = vcmp.ge.f32.partialorder %v4835, 0.0
      %v4850 = vmul.f32 %v4822, 0.2
      %v4851 = vmul.f32 %v4823, 0.2
      %v4852 = vmul.f32 %v4824, 0.2
      %v4853 = vmul.f32 %v4825, 0.2
      %v4854 = vmul.f32 %v4826, 0.2
      %v4855 = vmul.f32 %v4827, 0.2
      %v4856 = vmul.f32 %v4828, 0.2
      %v4857 = vmul.f32 %v4829, 0.2
      %v4858 = vmul.f32 %v4830, 0.2
      %v4859 = vmul.f32 %v4831, 0.2
      %v4860 = vmul.f32 %v4832, 0.2
      %v4861 = vmul.f32 %v4833, 0.2
      %v4862 = vmul.f32 %v4834, 0.2
      %v4863 = vmul.f32 %v4835, 0.2
      %v4864 = vsel %vm4836, %v4822, %v4850
      %v4865 = vsel %vm4837, %v4823, %v4851
      %v4866 = vsel %vm4838, %v4824, %v4852
      %v4867 = vsel %vm4839, %v4825, %v4853
      %v4868 = vsel %vm4840, %v4826, %v4854
      %v4869 = vsel %vm4841, %v4827, %v4855
      %v4870 = vsel %vm4842, %v4828, %v4856
      %v4871 = vsel %vm4843, %v4829, %v4857
      %v4872 = vsel %vm4844, %v4830, %v4858
      %v4873 = vsel %vm4845, %v4831, %v4859
      %v4874 = vsel %vm4846, %v4832, %v4860
      %v4875 = vsel %vm4847, %v4833, %v4861
      %v4876 = vsel %vm4848, %v4834, %v4862
      %v4877 = vsel %vm4849, %v4835, %v4863
      %v4878 = vld [vmem:[%s4] sm:$0xf]
      %v4879 = vld [vmem:[%s4 + $0x4] sm:$0xf]
      %v4880 = vld [vmem:[%s4 + $0x8] sm:$0xf]
      %v4881 = vld [vmem:[%s4 + $0xc] sm:$0xf]
      %v4882 = vld [vmem:[%s4 + $0x10] sm:$0xf]
      %v4883 = vld [vmem:[%s4 + $0x14] sm:$0xf]
      %v4884 = vld [vmem:[%s4 + $0x18] sm:$0xf]
      %v4885 = vld [vmem:[%s4 + $0x1c] sm:$0xf]
      %v4886 = vld [vmem:[%s4 + $0x20] sm:$0xf]
      %v4887 = vld [vmem:[%s4 + $0x24] sm:$0xf]
      %v4888 = vld [vmem:[%s4 + $0x28] sm:$0xf]
      %v4889 = vld [vmem:[%s4 + $0x2c] sm:$0xf]
      %v4890 = vld [vmem:[%s4 + $0x30] sm:$0xf]
      %v4891 = vld [vmem:[%s4 + $0x34] sm:$0xf]
      %v4892 = vld [vmem:[%s4 + $0x38] sm:$0xf]
      %v4893 = vld [vmem:[%s4 + $0x3c] sm:$0xf]
      %v4894 = vld [vmem:[%s4 + $0x40] sm:$0xf]
      %v4895 = vld [vmem:[%s4 + $0x44] sm:$0xf]
      %v4896 = vld [vmem:[%s4 + $0x48] sm:$0xf]
      %v4897 = vld [vmem:[%s4 + $0x4c] sm:$0xf]
      %v4898 = vld [vmem:[%s4 + $0x50] sm:$0xf]
      %v4899 = vld [vmem:[%s4 + $0x54] sm:$0xf]
      %v4900 = vld [vmem:[%s4 + $0x58] sm:$0xf]
      %v4901 = vld [vmem:[%s4 + $0x5c] sm:$0xf]
      %v4902 = vld [vmem:[%s4 + $0x60] sm:$0xf]
      %v4903 = vld [vmem:[%s4 + $0x64] sm:$0xf]
      %v4904 = vld [vmem:[%s4 + $0x68] sm:$0xf]
      %v4905 = vld [vmem:[%s4 + $0x6c] sm:$0xf]
      %v4906 = vld [vmem:[%s4 + $0x70] sm:$0xf]
      %v4907 = vld [vmem:[%s4 + $0x74] sm:$0xf]
      %v4908 = vld [vmem:[%s4 + $0x78] sm:$0xf]
      %v4909 = vld [vmem:[%s4 + $0x7c] sm:$0xf]
      %v4910 = vld [vmem:[%s4 + $0x80] sm:$0xf]
      %v4911 = vld [vmem:[%s4 + $0x84] sm:$0xf]
      %v4912 = vld [vmem:[%s4 + $0x88] sm:$0xf]
      %v4913 = vld [vmem:[%s4 + $0x8c] sm:$0xf]
      %v4914 = vld [vmem:[%s4 + $0x90] sm:$0xf]
      %v4915 = vld [vmem:[%s4 + $0x94] sm:$0xf]
      %v4916 = vld [vmem:[%s4 + $0x98] sm:$0xf]
      %v4917 = vld [vmem:[%s4 + $0x9c] sm:$0xf]
      %v4918 = vld [vmem:[%s4 + $0xa0] sm:$0xf]
      %v4919 = vld [vmem:[%s4 + $0xa4] sm:$0xf]
      %v4920 = vld [vmem:[%s4 + $0xa8] sm:$0xf]
      %v4921 = vld [vmem:[%s4 + $0xac] sm:$0xf]
      %v4922 = vld [vmem:[%s4 + $0xb0] sm:$0xf]
      %v4923 = vld [vmem:[%s4 + $0xb4] sm:$0xf]
      %v4924 = vld [vmem:[%s4 + $0xb8] sm:$0xf]
      %v4925 = vld [vmem:[%s4 + $0xbc] sm:$0xf]
      %v4926 = vld [vmem:[%s4 + $0xc0] sm:$0xf]
      %v4927 = vld [vmem:[%s4 + $0xc4] sm:$0xf]
      %v4928 = vld [vmem:[%s4 + $0xc8] sm:$0xf]
      %v4929 = vld [vmem:[%s4 + $0xcc] sm:$0xf]
      %v4930 = vld [vmem:[%s4 + $0xd0] sm:$0xf]
      %v4931 = vld [vmem:[%s4 + $0xd4] sm:$0xf]
      %v4932 = vld [vmem:[%s4 + $0xd8] sm:$0xf]
      %v4933 = vld [vmem:[%s4 + $0xdc] sm:$0xf]
      %v4934 = vld [vmem:[%s4 + $0xe0] sm:$0xf]
      %v4935 = vld [vmem:[%s4 + $0xe4] sm:$0xf]
      %v4936 = vld [vmem:[%s4 + $0xe8] sm:$0xf]
      %v4937 = vld [vmem:[%s4 + $0xec] sm:$0xf]
      %v4938 = vld [vmem:[%s4 + $0xf0] sm:$0xf]
      %v4939 = vld [vmem:[%s4 + $0xf4] sm:$0xf]
      %v4940 = vld [vmem:[%s4 + $0xf8] sm:$0xf]
      %v4941 = vld [vmem:[%s4 + $0xfc] sm:$0xf]
      %v4942 = vunpack.c.l.bf16 %v4878
      %v4943 = vunpack.c.l.bf16 %v4879
      %v4944 = vunpack.c.l.bf16 %v4880
      %v4945 = vunpack.c.l.bf16 %v4881
      %v4946 = vunpack.c.l.bf16 %v4882
      %v4947 = vunpack.c.l.bf16 %v4883
      %v4948 = vunpack.c.l.bf16 %v4884
      %v4949 = vunpack.c.l.bf16 %v4885
      %v4950 = vunpack.c.l.bf16 %v4886
      %v4951 = vunpack.c.l.bf16 %v4887
      %v4952 = vunpack.c.l.bf16 %v4888
      %v4953 = vunpack.c.l.bf16 %v4889
      %v4954 = vunpack.c.l.bf16 %v4890
      %v4955 = vunpack.c.l.bf16 %v4891
      %v4956 = vunpack.c.l.bf16 %v4892
      %v4957 = vunpack.c.l.bf16 %v4893
      %v4958 = vunpack.c.l.bf16 %v4894
      %v4959 = vunpack.c.l.bf16 %v4895
      %v4960 = vunpack.c.l.bf16 %v4896
      %v4961 = vunpack.c.l.bf16 %v4897
      %v4962 = vunpack.c.l.bf16 %v4898
      %v4963 = vunpack.c.l.bf16 %v4899
      %v4964 = vunpack.c.l.bf16 %v4900
      %v4965 = vunpack.c.l.bf16 %v4901
      %v4966 = vunpack.c.l.bf16 %v4902
      %v4967 = vunpack.c.l.bf16 %v4903
      %v4968 = vunpack.c.l.bf16 %v4904
      %v4969 = vunpack.c.l.bf16 %v4905
      %v4970 = vunpack.c.l.bf16 %v4906
      %v4971 = vunpack.c.l.bf16 %v4907
      %v4972 = vunpack.c.l.bf16 %v4908
      %v4973 = vunpack.c.l.bf16 %v4909
      %v4974 = vunpack.c.l.bf16 %v4910
      %v4975 = vunpack.c.l.bf16 %v4911
      %v4976 = vunpack.c.l.bf16 %v4912
      %v4977 = vunpack.c.l.bf16 %v4913
      %v4978 = vunpack.c.l.bf16 %v4914
      %v4979 = vunpack.c.l.bf16 %v4915
      %v4980 = vunpack.c.l.bf16 %v4916
      %v4981 = vunpack.c.l.bf16 %v4917
      %v4982 = vunpack.c.l.bf16 %v4918
      %v4983 = vunpack.c.l.bf16 %v4919
      %v4984 = vunpack.c.l.bf16 %v4920
      %v4985 = vunpack.c.l.bf16 %v4921
      %v4986 = vunpack.c.l.bf16 %v4922
      %v4987 = vunpack.c.l.bf16 %v4923
      %v4988 = vunpack.c.l.bf16 %v4924
      %v4989 = vunpack.c.l.bf16 %v4925
      %v4990 = vunpack.c.l.bf16 %v4926
      %v4991 = vunpack.c.l.bf16 %v4927
      %v4992 = vunpack.c.l.bf16 %v4928
      %v4993 = vunpack.c.l.bf16 %v4929
      %v4994 = vunpack.c.l.bf16 %v4930
      %v4995 = vunpack.c.l.bf16 %v4931
      %v4996 = vunpack.c.l.bf16 %v4932
      %v4997 = vunpack.c.l.bf16 %v4933
      %v4998 = vunpack.c.l.bf16 %v4934
      %v4999 = vunpack.c.l.bf16 %v4935
      %v5000 = vunpack.c.l.bf16 %v4936
      %v5001 = vunpack.c.l.bf16 %v4937
      %v5002 = vunpack.c.l.bf16 %v4938
      %v5003 = vunpack.c.l.bf16 %v4939
      %v5004 = vunpack.c.l.bf16 %v4940
      %v5005 = vunpack.c.l.bf16 %v4941
      %v5009 = vrot.slane %v4865, 6
      %v5010 = vrot.slane %v4866, 6
      %v5011 = vsel %vm3385, %v5009, %v5010
      %v5012 = vrot.slane %v4867, 6
      %v5013 = vsel %vm3385, %v5010, %v5012
      %vm5014 = vcmask 523264
      %v5015 = vsel %vm5014, %v5011, 0
      %v5017 = vsel %vm5014, %v5013, 0
      %5019 = vmatprep.subr.mxu0 0.0
      %5020 = vmatpush1.msra.mxu0 0.0
      %5021 = vmatprep.subr.mxu0 0.0
      %5022 = vmatpush1.msra.mxu0 0.0
      %5023 = vmatprep.subr.mxu0 0.0
      %5024 = vmatpush1.msra.mxu0 0.0
      %5025 = vmatprep.subr.mxu0 0.0
      %5026 = vmatpush1.msra.mxu0 0.0
      %5027 = vmatprep.subr.mxu0 0.0
      %5028 = vmatpush1.msra.mxu0 0.0
      %5029 = vmatprep.subr.mxu0 0.0
      %5030 = vmatpush1.msra.mxu0 0.0
      %5031 = vmatprep.subr.mxu0 0.0
      %5032 = vmatpush1.msra.mxu0 0.0
      %5033 = vmatprep.subr.mxu0 0.0
      %5034 = vmatpush1.msra.mxu0 0.0
      %5035 = vmatprep.subr.mxu0 0.0
      %5036 = vmatpush1.msra.mxu0 %v4957
      %5037 = vmatprep.subr.mxu0 0.0
      %5038 = vmatpush1.msra.mxu0 %v4956
      %5039 = vmatprep.subr.mxu0 0.0
      %5040 = vmatpush1.msra.mxu0 %v4955
      %5041 = vmatprep.subr.mxu0 0.0
      %5042 = vmatpush1.msra.mxu0 %v4954
      %5043 = vmatprep.subr.mxu0 0.0
      %5044 = vmatpush1.msra.mxu0 %v4953
      %5045 = vmatprep.subr.mxu0 0.0
      %5046 = vmatpush1.msra.mxu0 %v4952
      %5047 = vmatprep.subr.mxu0 0.0
      %5048 = vmatpush1.msra.mxu0 %v4951
      %5049 = vmatprep.subr.mxu0 0.0
      %5050 = vmatpush1.msra.mxu0 %v4950
      %5051 = vmatprep.subr.mxu0 0.0
      %5052 = vmatpush2.msra.mxu0 0.0
      %5053 = vmatprep.subr.mxu0 0.0
      %5054 = vmatpush2.msra.mxu0 0.0
      %5055 = vmatprep.subr.mxu0 0.0
      %5056 = vmatpush2.msra.mxu0 0.0
      %5057 = vmatprep.subr.mxu0 0.0
      %5058 = vmatpush2.msra.mxu0 0.0
      %5059 = vmatprep.subr.mxu0 0.0
      %5060 = vmatpush2.msra.mxu0 0.0
      %5061 = vmatprep.subr.mxu0 0.0
      %5062 = vmatpush2.msra.mxu0 0.0
      %5063 = vmatprep.subr.mxu0 0.0
      %5064 = vmatpush2.msra.mxu0 0.0
      %5065 = vmatprep.subr.mxu0 0.0
      %5066 = vmatpush2.msra.mxu0 0.0
      %5067 = vmatprep.subr.mxu0 0.0
      %5068 = vmatpush2.msra.mxu0 0.0
      %5069 = vmatprep.subr.mxu0 0.0
      %5070 = vmatpush2.msra.mxu0 0.0
      %5071 = vmatprep.subr.mxu0 0.0
      %5072 = vmatpush2.msra.mxu0 0.0
      %5073 = vmatprep.subr.mxu0 0.0
      %5074 = vmatpush2.msra.mxu0 0.0
      %5075 = vmatprep.subr.mxu0 0.0
      %5076 = vmatpush2.msra.mxu0 0.0
      %5077 = vmatprep.subr.mxu0 0.0
      %5078 = vmatpush2.msra.mxu0 0.0
      %5079 = vmatprep.subr.mxu0 0.0
      %5080 = vmatpush2.msra.mxu0 0.0
      %5081 = vmatprep.subr.mxu0 0.0
      %5082 = vmatpush2.msra.mxu0 0.0
      %5083 = vmatprep.mubr.f32.mxu0 0.0
      %5084 = vmatmul.mubr.f32.gmra.mxu0 %v5015
      %v5085 = vpop.f32.mrf.mxu0
      %v5086 = vadd.f32 0.0, %v5085
      %v5087 = vpop.f32.mrf.mxu0
      %5088 = vmatprep.mubr.f32.mxu0 0.0
      %5089 = vmatmul.mubr.f32.gmra.mxu0 %v5017
      %v5090 = vpop.f32.mrf.mxu0
      %v5091 = vadd.f32 0.0, %v5090
      %v5092 = vpop.f32.mrf.mxu0
      %5093 = vdwg.mxu0
      %v5095 = vsel %vm5014, %v4864, 0
      %v5097 = vsel %vm5014, %v4865, 0
      %5099 = vmatprep.subr.mxu0 0.0
      %5100 = vmatpush1.msra.mxu0 0.0
      %5101 = vmatprep.subr.mxu0 0.0
      %5102 = vmatpush1.msra.mxu0 0.0
      %5103 = vmatprep.subr.mxu0 0.0
      %5104 = vmatpush1.msra.mxu0 0.0
      %5105 = vmatprep.subr.mxu0 0.0
      %5106 = vmatpush1.msra.mxu0 0.0
      %5107 = vmatprep.subr.mxu0 0.0
      %5108 = vmatpush1.msra.mxu0 0.0
      %5109 = vmatprep.subr.mxu0 0.0
      %5110 = vmatpush1.msra.mxu0 0.0
      %5111 = vmatprep.subr.mxu0 0.0
      %5112 = vmatpush1.msra.mxu0 0.0
      %5113 = vmatprep.subr.mxu0 0.0
      %5114 = vmatpush1.msra.mxu0 0.0
      %5115 = vmatprep.subr.mxu0 0.0
      %5116 = vmatpush1.msra.mxu0 %v4949
      %5117 = vmatprep.subr.mxu0 0.0
      %5118 = vmatpush1.msra.mxu0 %v4948
      %5119 = vmatprep.subr.mxu0 0.0
      %5120 = vmatpush1.msra.mxu0 %v4947
      %5121 = vmatprep.subr.mxu0 0.0
      %5122 = vmatpush1.msra.mxu0 %v4946
      %5123 = vmatprep.subr.mxu0 0.0
      %5124 = vmatpush1.msra.mxu0 %v4945
      %5125 = vmatprep.subr.mxu0 0.0
      %5126 = vmatpush1.msra.mxu0 %v4944
      %5127 = vmatprep.subr.mxu0 0.0
      %5128 = vmatpush1.msra.mxu0 %v4943
      %5129 = vmatprep.subr.mxu0 0.0
      %5130 = vmatpush1.msra.mxu0 %v4942
      %5131 = vmatprep.subr.mxu0 0.0
      %5132 = vmatpush2.msra.mxu0 0.0
      %5133 = vmatprep.subr.mxu0 0.0
      %5134 = vmatpush2.msra.mxu0 0.0
      %5135 = vmatprep.subr.mxu0 0.0
      %5136 = vmatpush2.msra.mxu0 0.0
      %5137 = vmatprep.subr.mxu0 0.0
      %5138 = vmatpush2.msra.mxu0 0.0
      %5139 = vmatprep.subr.mxu0 0.0
      %5140 = vmatpush2.msra.mxu0 0.0
      %5141 = vmatprep.subr.mxu0 0.0
      %5142 = vmatpush2.msra.mxu0 0.0
      %5143 = vmatprep.subr.mxu0 0.0
      %5144 = vmatpush2.msra.mxu0 0.0
      %5145 = vmatprep.subr.mxu0 0.0
      %5146 = vmatpush2.msra.mxu0 0.0
      %5147 = vmatprep.subr.mxu0 0.0
      %5148 = vmatpush2.msra.mxu0 0.0
      %5149 = vmatprep.subr.mxu0 0.0
      %5150 = vmatpush2.msra.mxu0 0.0
      %5151 = vmatprep.subr.mxu0 0.0
      %5152 = vmatpush2.msra.mxu0 0.0
      %5153 = vmatprep.subr.mxu0 0.0
      %5154 = vmatpush2.msra.mxu0 0.0
      %5155 = vmatprep.subr.mxu0 0.0
      %5156 = vmatpush2.msra.mxu0 0.0
      %5157 = vmatprep.subr.mxu0 0.0
      %5158 = vmatpush2.msra.mxu0 0.0
      %5159 = vmatprep.subr.mxu0 0.0
      %5160 = vmatpush2.msra.mxu0 0.0
      %5161 = vmatprep.subr.mxu0 0.0
      %5162 = vmatpush2.msra.mxu0 0.0
      %5163 = vmatprep.mubr.f32.mxu0 0.0
      %5164 = vmatmul.mubr.f32.gmra.mxu0 %v5095
      %v5165 = vpop.f32.mrf.mxu0
      %v5166 = vadd.f32 %v5086, %v5165
      %v5167 = vpop.f32.mrf.mxu0
      %5168 = vmatprep.mubr.f32.mxu0 0.0
      %5169 = vmatmul.mubr.f32.gmra.mxu0 %v5097
      %v5170 = vpop.f32.mrf.mxu0
      %v5171 = vadd.f32 %v5091, %v5170
      %v5172 = vpop.f32.mrf.mxu0
      %5173 = vdwg.mxu0
      %v5176 = vrot.slane %v4867, 4
      %v5177 = vrot.slane %v4868, 4
      %v5178 = vsel %vm892, %v5176, %v5177
      %v5179 = vrot.slane %v4869, 4
      %v5180 = vsel %vm892, %v5177, %v5179
      %v5181 = vsel %vm5014, %v5178, 0
      %v5183 = vsel %vm5014, %v5180, 0
      %5185 = vmatprep.subr.mxu0 0.0
      %5186 = vmatpush1.msra.mxu0 0.0
      %5187 = vmatprep.subr.mxu0 0.0
      %5188 = vmatpush1.msra.mxu0 0.0
      %5189 = vmatprep.subr.mxu0 0.0
      %5190 = vmatpush1.msra.mxu0 0.0
      %5191 = vmatprep.subr.mxu0 0.0
      %5192 = vmatpush1.msra.mxu0 0.0
      %5193 = vmatprep.subr.mxu0 0.0
      %5194 = vmatpush1.msra.mxu0 0.0
      %5195 = vmatprep.subr.mxu0 0.0
      %5196 = vmatpush1.msra.mxu0 0.0
      %5197 = vmatprep.subr.mxu0 0.0
      %5198 = vmatpush1.msra.mxu0 0.0
      %5199 = vmatprep.subr.mxu0 0.0
      %5200 = vmatpush1.msra.mxu0 0.0
      %5201 = vmatprep.subr.mxu0 0.0
      %5202 = vmatpush1.msra.mxu0 %v4965
      %5203 = vmatprep.subr.mxu0 0.0
      %5204 = vmatpush1.msra.mxu0 %v4964
      %5205 = vmatprep.subr.mxu0 0.0
      %5206 = vmatpush1.msra.mxu0 %v4963
      %5207 = vmatprep.subr.mxu0 0.0
      %5208 = vmatpush1.msra.mxu0 %v4962
      %5209 = vmatprep.subr.mxu0 0.0
      %5210 = vmatpush1.msra.mxu0 %v4961
      %5211 = vmatprep.subr.mxu0 0.0
      %5212 = vmatpush1.msra.mxu0 %v4960
      %5213 = vmatprep.subr.mxu0 0.0
      %5214 = vmatpush1.msra.mxu0 %v4959
      %5215 = vmatprep.subr.mxu0 0.0
      %5216 = vmatpush1.msra.mxu0 %v4958
      %5217 = vmatprep.subr.mxu0 0.0
      %5218 = vmatpush2.msra.mxu0 0.0
      %5219 = vmatprep.subr.mxu0 0.0
      %5220 = vmatpush2.msra.mxu0 0.0
      %5221 = vmatprep.subr.mxu0 0.0
      %5222 = vmatpush2.msra.mxu0 0.0
      %5223 = vmatprep.subr.mxu0 0.0
      %5224 = vmatpush2.msra.mxu0 0.0
      %5225 = vmatprep.subr.mxu0 0.0
      %5226 = vmatpush2.msra.mxu0 0.0
      %5227 = vmatprep.subr.mxu0 0.0
      %5228 = vmatpush2.msra.mxu0 0.0
      %5229 = vmatprep.subr.mxu0 0.0
      %5230 = vmatpush2.msra.mxu0 0.0
      %5231 = vmatprep.subr.mxu0 0.0
      %5232 = vmatpush2.msra.mxu0 0.0
      %5233 = vmatprep.subr.mxu0 0.0
      %5234 = vmatpush2.msra.mxu0 0.0
      %5235 = vmatprep.subr.mxu0 0.0
      %5236 = vmatpush2.msra.mxu0 0.0
      %5237 = vmatprep.subr.mxu0 0.0
      %5238 = vmatpush2.msra.mxu0 0.0
      %5239 = vmatprep.subr.mxu0 0.0
      %5240 = vmatpush2.msra.mxu0 0.0
      %5241 = vmatprep.subr.mxu0 0.0
      %5242 = vmatpush2.msra.mxu0 0.0
      %5243 = vmatprep.subr.mxu0 0.0
      %5244 = vmatpush2.msra.mxu0 0.0
      %5245 = vmatprep.subr.mxu0 0.0
      %5246 = vmatpush2.msra.mxu0 0.0
      %5247 = vmatprep.subr.mxu0 0.0
      %5248 = vmatpush2.msra.mxu0 0.0
      %5249 = vmatprep.mubr.f32.mxu0 0.0
      %5250 = vmatmul.mubr.f32.gmra.mxu0 %v5181
      %v5251 = vpop.f32.mrf.mxu0
      %v5252 = vadd.f32 0.0, %v5251
      %v5253 = vpop.f32.mrf.mxu0
      %5254 = vmatprep.mubr.f32.mxu0 0.0
      %5255 = vmatmul.mubr.f32.gmra.mxu0 %v5183
      %v5256 = vpop.f32.mrf.mxu0
      %v5257 = vadd.f32 0.0, %v5256
      %v5258 = vpop.f32.mrf.mxu0
      %5259 = vdwg.mxu0
      %v5260 = vadd.f32 %v5166, %v5252
      %v5261 = vadd.f32 %v5171, %v5257
      %vm5263 = vcmask 1045504
      %v5264 = vrot.slane %v4869, 2
      %v5265 = vrot.slane %v4870, 2
      %v5266 = vsel %vm5263, %v5264, %v5265
      %v5267 = vsel %vm5014, %v5266, 0
      %v5269 = vsel %vm5014, %v5265, 0
      %5271 = vmatprep.subr.mxu0 0.0
      %5272 = vmatpush1.msra.mxu0 0.0
      %5273 = vmatprep.subr.mxu0 0.0
      %5274 = vmatpush1.msra.mxu0 0.0
      %5275 = vmatprep.subr.mxu0 0.0
      %5276 = vmatpush1.msra.mxu0 0.0
      %5277 = vmatprep.subr.mxu0 0.0
      %5278 = vmatpush1.msra.mxu0 0.0
      %5279 = vmatprep.subr.mxu0 0.0
      %5280 = vmatpush1.msra.mxu0 0.0
      %5281 = vmatprep.subr.mxu0 0.0
      %5282 = vmatpush1.msra.mxu0 0.0
      %5283 = vmatprep.subr.mxu0 0.0
      %5284 = vmatpush1.msra.mxu0 0.0
      %5285 = vmatprep.subr.mxu0 0.0
      %5286 = vmatpush1.msra.mxu0 0.0
      %5287 = vmatprep.subr.mxu0 0.0
      %5288 = vmatpush1.msra.mxu0 %v4973
      %5289 = vmatprep.subr.mxu0 0.0
      %5290 = vmatpush1.msra.mxu0 %v4972
      %5291 = vmatprep.subr.mxu0 0.0
      %5292 = vmatpush1.msra.mxu0 %v4971
      %5293 = vmatprep.subr.mxu0 0.0
      %5294 = vmatpush1.msra.mxu0 %v4970
      %5295 = vmatprep.subr.mxu0 0.0
      %5296 = vmatpush1.msra.mxu0 %v4969
      %5297 = vmatprep.subr.mxu0 0.0
      %5298 = vmatpush1.msra.mxu0 %v4968
      %5299 = vmatprep.subr.mxu0 0.0
      %5300 = vmatpush1.msra.mxu0 %v4967
      %5301 = vmatprep.subr.mxu0 0.0
      %5302 = vmatpush1.msra.mxu0 %v4966
      %5303 = vmatprep.subr.mxu0 0.0
      %5304 = vmatpush2.msra.mxu0 0.0
      %5305 = vmatprep.subr.mxu0 0.0
      %5306 = vmatpush2.msra.mxu0 0.0
      %5307 = vmatprep.subr.mxu0 0.0
      %5308 = vmatpush2.msra.mxu0 0.0
      %5309 = vmatprep.subr.mxu0 0.0
      %5310 = vmatpush2.msra.mxu0 0.0
      %5311 = vmatprep.subr.mxu0 0.0
      %5312 = vmatpush2.msra.mxu0 0.0
      %5313 = vmatprep.subr.mxu0 0.0
      %5314 = vmatpush2.msra.mxu0 0.0
      %5315 = vmatprep.subr.mxu0 0.0
      %5316 = vmatpush2.msra.mxu0 0.0
      %5317 = vmatprep.subr.mxu0 0.0
      %5318 = vmatpush2.msra.mxu0 0.0
      %5319 = vmatprep.subr.mxu0 0.0
      %5320 = vmatpush2.msra.mxu0 0.0
      %5321 = vmatprep.subr.mxu0 0.0
      %5322 = vmatpush2.msra.mxu0 0.0
      %5323 = vmatprep.subr.mxu0 0.0
      %5324 = vmatpush2.msra.mxu0 0.0
      %5325 = vmatprep.subr.mxu0 0.0
      %5326 = vmatpush2.msra.mxu0 0.0
      %5327 = vmatprep.subr.mxu0 0.0
      %5328 = vmatpush2.msra.mxu0 0.0
      %5329 = vmatprep.subr.mxu0 0.0
      %5330 = vmatpush2.msra.mxu0 0.0
      %5331 = vmatprep.subr.mxu0 0.0
      %5332 = vmatpush2.msra.mxu0 0.0
      %5333 = vmatprep.subr.mxu0 0.0
      %5334 = vmatpush2.msra.mxu0 0.0
      %5335 = vmatprep.mubr.f32.mxu0 0.0
      %5336 = vmatmul.mubr.f32.gmra.mxu0 %v5267
      %v5337 = vpop.f32.mrf.mxu0
      %v5338 = vadd.f32 0.0, %v5337
      %v5339 = vpop.f32.mrf.mxu0
      %5340 = vmatprep.mubr.f32.mxu0 0.0
      %5341 = vmatmul.mubr.f32.gmra.mxu0 %v5269
      %v5342 = vpop.f32.mrf.mxu0
      %v5343 = vadd.f32 0.0, %v5342
      %v5344 = vpop.f32.mrf.mxu0
      %5345 = vdwg.mxu0
      %v5346 = vadd.f32 %v5260, %v5338
      %v5347 = vadd.f32 %v5261, %v5343
      %v5349 = vsel %vm5014, %v4871, 0
      %v5352 = vsel %vm5014, %v4872, 0
      %5354 = vmatprep.subr.mxu0 0.0
      %5355 = vmatpush1.msra.mxu0 0.0
      %5356 = vmatprep.subr.mxu0 0.0
      %5357 = vmatpush1.msra.mxu0 0.0
      %5358 = vmatprep.subr.mxu0 0.0
      %5359 = vmatpush1.msra.mxu0 0.0
      %5360 = vmatprep.subr.mxu0 0.0
      %5361 = vmatpush1.msra.mxu0 0.0
      %5362 = vmatprep.subr.mxu0 0.0
      %5363 = vmatpush1.msra.mxu0 0.0
      %5364 = vmatprep.subr.mxu0 0.0
      %5365 = vmatpush1.msra.mxu0 0.0
      %5366 = vmatprep.subr.mxu0 0.0
      %5367 = vmatpush1.msra.mxu0 0.0
      %5368 = vmatprep.subr.mxu0 0.0
      %5369 = vmatpush1.msra.mxu0 0.0
      %5370 = vmatprep.subr.mxu0 0.0
      %5371 = vmatpush1.msra.mxu0 %v4981
      %5372 = vmatprep.subr.mxu0 0.0
      %5373 = vmatpush1.msra.mxu0 %v4980
      %5374 = vmatprep.subr.mxu0 0.0
      %5375 = vmatpush1.msra.mxu0 %v4979
      %5376 = vmatprep.subr.mxu0 0.0
      %5377 = vmatpush1.msra.mxu0 %v4978
      %5378 = vmatprep.subr.mxu0 0.0
      %5379 = vmatpush1.msra.mxu0 %v4977
      %5380 = vmatprep.subr.mxu0 0.0
      %5381 = vmatpush1.msra.mxu0 %v4976
      %5382 = vmatprep.subr.mxu0 0.0
      %5383 = vmatpush1.msra.mxu0 %v4975
      %5384 = vmatprep.subr.mxu0 0.0
      %5385 = vmatpush1.msra.mxu0 %v4974
      %5386 = vmatprep.subr.mxu0 0.0
      %5387 = vmatpush2.msra.mxu0 0.0
      %5388 = vmatprep.subr.mxu0 0.0
      %5389 = vmatpush2.msra.mxu0 0.0
      %5390 = vmatprep.subr.mxu0 0.0
      %5391 = vmatpush2.msra.mxu0 0.0
      %5392 = vmatprep.subr.mxu0 0.0
      %5393 = vmatpush2.msra.mxu0 0.0
      %5394 = vmatprep.subr.mxu0 0.0
      %5395 = vmatpush2.msra.mxu0 0.0
      %5396 = vmatprep.subr.mxu0 0.0
      %5397 = vmatpush2.msra.mxu0 0.0
      %5398 = vmatprep.subr.mxu0 0.0
      %5399 = vmatpush2.msra.mxu0 0.0
      %5400 = vmatprep.subr.mxu0 0.0
      %5401 = vmatpush2.msra.mxu0 0.0
      %5402 = vmatprep.subr.mxu0 0.0
      %5403 = vmatpush2.msra.mxu0 0.0
      %5404 = vmatprep.subr.mxu0 0.0
      %5405 = vmatpush2.msra.mxu0 0.0
      %5406 = vmatprep.subr.mxu0 0.0
      %5407 = vmatpush2.msra.mxu0 0.0
      %5408 = vmatprep.subr.mxu0 0.0
      %5409 = vmatpush2.msra.mxu0 0.0
      %5410 = vmatprep.subr.mxu0 0.0
      %5411 = vmatpush2.msra.mxu0 0.0
      %5412 = vmatprep.subr.mxu0 0.0
      %5413 = vmatpush2.msra.mxu0 0.0
      %5414 = vmatprep.subr.mxu0 0.0
      %5415 = vmatpush2.msra.mxu0 0.0
      %5416 = vmatprep.subr.mxu0 0.0
      %5417 = vmatpush2.msra.mxu0 0.0
      %5418 = vmatprep.mubr.f32.mxu0 0.0
      %5419 = vmatmul.mubr.f32.gmra.mxu0 %v5349
      %v5420 = vpop.f32.mrf.mxu0
      %v5421 = vadd.f32 0.0, %v5420
      %v5422 = vpop.f32.mrf.mxu0
      %5423 = vmatprep.mubr.f32.mxu0 0.0
      %5424 = vmatmul.mubr.f32.gmra.mxu0 %v5352
      %v5425 = vpop.f32.mrf.mxu0
      %v5426 = vadd.f32 0.0, %v5425
      %v5427 = vpop.f32.mrf.mxu0
      %5428 = vdwg.mxu0
      %v5429 = vadd.f32 %v5346, %v5421
      %v5430 = vadd.f32 %v5347, %v5426
      %v5433 = vrot.slane %v4872, 6
      %v5434 = vrot.slane %v4873, 6
      %v5435 = vsel %vm3385, %v5433, %v5434
      %v5436 = vrot.slane %v4874, 6
      %v5437 = vsel %vm3385, %v5434, %v5436
      %v5438 = vsel %vm5014, %v5435, 0
      %v5440 = vsel %vm5014, %v5437, 0
      %5442 = vmatprep.subr.mxu0 0.0
      %5443 = vmatpush1.msra.mxu0 0.0
      %5444 = vmatprep.subr.mxu0 0.0
      %5445 = vmatpush1.msra.mxu0 0.0
      %5446 = vmatprep.subr.mxu0 0.0
      %5447 = vmatpush1.msra.mxu0 0.0
      %5448 = vmatprep.subr.mxu0 0.0
      %5449 = vmatpush1.msra.mxu0 0.0
      %5450 = vmatprep.subr.mxu0 0.0
      %5451 = vmatpush1.msra.mxu0 0.0
      %5452 = vmatprep.subr.mxu0 0.0
      %5453 = vmatpush1.msra.mxu0 0.0
      %5454 = vmatprep.subr.mxu0 0.0
      %5455 = vmatpush1.msra.mxu0 0.0
      %5456 = vmatprep.subr.mxu0 0.0
      %5457 = vmatpush1.msra.mxu0 0.0
      %5458 = vmatprep.subr.mxu0 0.0
      %5459 = vmatpush1.msra.mxu0 %v4989
      %5460 = vmatprep.subr.mxu0 0.0
      %5461 = vmatpush1.msra.mxu0 %v4988
      %5462 = vmatprep.subr.mxu0 0.0
      %5463 = vmatpush1.msra.mxu0 %v4987
      %5464 = vmatprep.subr.mxu0 0.0
      %5465 = vmatpush1.msra.mxu0 %v4986
      %5466 = vmatprep.subr.mxu0 0.0
      %5467 = vmatpush1.msra.mxu0 %v4985
      %5468 = vmatprep.subr.mxu0 0.0
      %5469 = vmatpush1.msra.mxu0 %v4984
      %5470 = vmatprep.subr.mxu0 0.0
      %5471 = vmatpush1.msra.mxu0 %v4983
      %5472 = vmatprep.subr.mxu0 0.0
      %5473 = vmatpush1.msra.mxu0 %v4982
      %5474 = vmatprep.subr.mxu0 0.0
      %5475 = vmatpush2.msra.mxu0 0.0
      %5476 = vmatprep.subr.mxu0 0.0
      %5477 = vmatpush2.msra.mxu0 0.0
      %5478 = vmatprep.subr.mxu0 0.0
      %5479 = vmatpush2.msra.mxu0 0.0
      %5480 = vmatprep.subr.mxu0 0.0
      %5481 = vmatpush2.msra.mxu0 0.0
      %5482 = vmatprep.subr.mxu0 0.0
      %5483 = vmatpush2.msra.mxu0 0.0
      %5484 = vmatprep.subr.mxu0 0.0
      %5485 = vmatpush2.msra.mxu0 0.0
      %5486 = vmatprep.subr.mxu0 0.0
      %5487 = vmatpush2.msra.mxu0 0.0
      %5488 = vmatprep.subr.mxu0 0.0
      %5489 = vmatpush2.msra.mxu0 0.0
      %5490 = vmatprep.subr.mxu0 0.0
      %5491 = vmatpush2.msra.mxu0 0.0
      %5492 = vmatprep.subr.mxu0 0.0
      %5493 = vmatpush2.msra.mxu0 0.0
      %5494 = vmatprep.subr.mxu0 0.0
      %5495 = vmatpush2.msra.mxu0 0.0
      %5496 = vmatprep.subr.mxu0 0.0
      %5497 = vmatpush2.msra.mxu0 0.0
      %5498 = vmatprep.subr.mxu0 0.0
      %5499 = vmatpush2.msra.mxu0 0.0
      %5500 = vmatprep.subr.mxu0 0.0
      %5501 = vmatpush2.msra.mxu0 0.0
      %5502 = vmatprep.subr.mxu0 0.0
      %5503 = vmatpush2.msra.mxu0 0.0
      %5504 = vmatprep.subr.mxu0 0.0
      %5505 = vmatpush2.msra.mxu0 0.0
      %5506 = vmatprep.mubr.f32.mxu0 0.0
      %5507 = vmatmul.mubr.f32.gmra.mxu0 %v5438
      %v5508 = vpop.f32.mrf.mxu0
      %v5509 = vadd.f32 0.0, %v5508
      %v5510 = vpop.f32.mrf.mxu0
      %5511 = vmatprep.mubr.f32.mxu0 0.0
      %5512 = vmatmul.mubr.f32.gmra.mxu0 %v5440
      %v5513 = vpop.f32.mrf.mxu0
      %v5514 = vadd.f32 0.0, %v5513
      %v5515 = vpop.f32.mrf.mxu0
      %5516 = vdwg.mxu0
      %v5517 = vadd.f32 %v5429, %v5509
      %v5518 = vadd.f32 %v5430, %v5514
      %v5521 = vrot.slane %v4874, 4
      %v5522 = vrot.slane %v4875, 4
      %v5523 = vsel %vm892, %v5521, %v5522
      %v5524 = vrot.slane %v4876, 4
      %v5525 = vsel %vm892, %v5522, %v5524
      %v5526 = vsel %vm5014, %v5523, 0
      %v5528 = vsel %vm5014, %v5525, 0
      %5530 = vmatprep.subr.mxu0 0.0
      %5531 = vmatpush1.msra.mxu0 0.0
      %5532 = vmatprep.subr.mxu0 0.0
      %5533 = vmatpush1.msra.mxu0 0.0
      %5534 = vmatprep.subr.mxu0 0.0
      %5535 = vmatpush1.msra.mxu0 0.0
      %5536 = vmatprep.subr.mxu0 0.0
      %5537 = vmatpush1.msra.mxu0 0.0
      %5538 = vmatprep.subr.mxu0 0.0
      %5539 = vmatpush1.msra.mxu0 0.0
      %5540 = vmatprep.subr.mxu0 0.0
      %5541 = vmatpush1.msra.mxu0 0.0
      %5542 = vmatprep.subr.mxu0 0.0
      %5543 = vmatpush1.msra.mxu0 0.0
      %5544 = vmatprep.subr.mxu0 0.0
      %5545 = vmatpush1.msra.mxu0 0.0
      %5546 = vmatprep.subr.mxu0 0.0
      %5547 = vmatpush1.msra.mxu0 %v4997
      %5548 = vmatprep.subr.mxu0 0.0
      %5549 = vmatpush1.msra.mxu0 %v4996
      %5550 = vmatprep.subr.mxu0 0.0
      %5551 = vmatpush1.msra.mxu0 %v4995
      %5552 = vmatprep.subr.mxu0 0.0
      %5553 = vmatpush1.msra.mxu0 %v4994
      %5554 = vmatprep.subr.mxu0 0.0
      %5555 = vmatpush1.msra.mxu0 %v4993
      %5556 = vmatprep.subr.mxu0 0.0
      %5557 = vmatpush1.msra.mxu0 %v4992
      %5558 = vmatprep.subr.mxu0 0.0
      %5559 = vmatpush1.msra.mxu0 %v4991
      %5560 = vmatprep.subr.mxu0 0.0
      %5561 = vmatpush1.msra.mxu0 %v4990
      %5562 = vmatprep.subr.mxu0 0.0
      %5563 = vmatpush2.msra.mxu0 0.0
      %5564 = vmatprep.subr.mxu0 0.0
      %5565 = vmatpush2.msra.mxu0 0.0
      %5566 = vmatprep.subr.mxu0 0.0
      %5567 = vmatpush2.msra.mxu0 0.0
      %5568 = vmatprep.subr.mxu0 0.0
      %5569 = vmatpush2.msra.mxu0 0.0
      %5570 = vmatprep.subr.mxu0 0.0
      %5571 = vmatpush2.msra.mxu0 0.0
      %5572 = vmatprep.subr.mxu0 0.0
      %5573 = vmatpush2.msra.mxu0 0.0
      %5574 = vmatprep.subr.mxu0 0.0
      %5575 = vmatpush2.msra.mxu0 0.0
      %5576 = vmatprep.subr.mxu0 0.0
      %5577 = vmatpush2.msra.mxu0 0.0
      %5578 = vmatprep.subr.mxu0 0.0
      %5579 = vmatpush2.msra.mxu0 0.0
      %5580 = vmatprep.subr.mxu0 0.0
      %5581 = vmatpush2.msra.mxu0 0.0
      %5582 = vmatprep.subr.mxu0 0.0
      %5583 = vmatpush2.msra.mxu0 0.0
      %5584 = vmatprep.subr.mxu0 0.0
      %5585 = vmatpush2.msra.mxu0 0.0
      %5586 = vmatprep.subr.mxu0 0.0
      %5587 = vmatpush2.msra.mxu0 0.0
      %5588 = vmatprep.subr.mxu0 0.0
      %5589 = vmatpush2.msra.mxu0 0.0
      %5590 = vmatprep.subr.mxu0 0.0
      %5591 = vmatpush2.msra.mxu0 0.0
      %5592 = vmatprep.subr.mxu0 0.0
      %5593 = vmatpush2.msra.mxu0 0.0
      %5594 = vmatprep.mubr.f32.mxu0 0.0
      %5595 = vmatmul.mubr.f32.gmra.mxu0 %v5526
      %v5596 = vpop.f32.mrf.mxu0
      %v5597 = vadd.f32 0.0, %v5596
      %v5598 = vpop.f32.mrf.mxu0
      %5599 = vmatprep.mubr.f32.mxu0 0.0
      %5600 = vmatmul.mubr.f32.gmra.mxu0 %v5528
      %v5601 = vpop.f32.mrf.mxu0
      %v5602 = vadd.f32 0.0, %v5601
      %v5603 = vpop.f32.mrf.mxu0
      %5604 = vdwg.mxu0
      %v5605 = vadd.f32 %v5517, %v5597
      %v5606 = vadd.f32 %v5518, %v5602
      %v5608 = vrot.slane %v4876, 2
      %v5609 = vrot.slane %v4877, 2
      %v5610 = vsel %vm5263, %v5608, %v5609
      %v5611 = vsel %vm5014, %v5610, 0
      %v5613 = vsel %vm5014, %v5609, 0
      %5615 = vmatprep.subr.mxu0 0.0
      %5616 = vmatpush1.msra.mxu0 0.0
      %5617 = vmatprep.subr.mxu0 0.0
      %5618 = vmatpush1.msra.mxu0 0.0
      %5619 = vmatprep.subr.mxu0 0.0
      %5620 = vmatpush1.msra.mxu0 0.0
      %5621 = vmatprep.subr.mxu0 0.0
      %5622 = vmatpush1.msra.mxu0 0.0
      %5623 = vmatprep.subr.mxu0 0.0
      %5624 = vmatpush1.msra.mxu0 0.0
      %5625 = vmatprep.subr.mxu0 0.0
      %5626 = vmatpush1.msra.mxu0 0.0
      %5627 = vmatprep.subr.mxu0 0.0
      %5628 = vmatpush1.msra.mxu0 0.0
      %5629 = vmatprep.subr.mxu0 0.0
      %5630 = vmatpush1.msra.mxu0 0.0
      %5631 = vmatprep.subr.mxu0 0.0
      %5632 = vmatpush1.msra.mxu0 %v5005
      %5633 = vmatprep.subr.mxu0 0.0
      %5634 = vmatpush1.msra.mxu0 %v5004
      %5635 = vmatprep.subr.mxu0 0.0
      %5636 = vmatpush1.msra.mxu0 %v5003
      %5637 = vmatprep.subr.mxu0 0.0
      %5638 = vmatpush1.msra.mxu0 %v5002
      %5639 = vmatprep.subr.mxu0 0.0
      %5640 = vmatpush1.msra.mxu0 %v5001
      %5641 = vmatprep.subr.mxu0 0.0
      %5642 = vmatpush1.msra.mxu0 %v5000
      %5643 = vmatprep.subr.mxu0 0.0
      %5644 = vmatpush1.msra.mxu0 %v4999
      %5645 = vmatprep.subr.mxu0 0.0
      %5646 = vmatpush1.msra.mxu0 %v4998
      %5647 = vmatprep.subr.mxu0 0.0
      %5648 = vmatpush2.msra.mxu0 0.0
      %5649 = vmatprep.subr.mxu0 0.0
      %5650 = vmatpush2.msra.mxu0 0.0
      %5651 = vmatprep.subr.mxu0 0.0
      %5652 = vmatpush2.msra.mxu0 0.0
      %5653 = vmatprep.subr.mxu0 0.0
      %5654 = vmatpush2.msra.mxu0 0.0
      %5655 = vmatprep.subr.mxu0 0.0
      %5656 = vmatpush2.msra.mxu0 0.0
      %5657 = vmatprep.subr.mxu0 0.0
      %5658 = vmatpush2.msra.mxu0 0.0
      %5659 = vmatprep.subr.mxu0 0.0
      %5660 = vmatpush2.msra.mxu0 0.0
      %5661 = vmatprep.subr.mxu0 0.0
      %5662 = vmatpush2.msra.mxu0 0.0
      %5663 = vmatprep.subr.mxu0 0.0
      %5664 = vmatpush2.msra.mxu0 0.0
      %5665 = vmatprep.subr.mxu0 0.0
      %5666 = vmatpush2.msra.mxu0 0.0
      %5667 = vmatprep.subr.mxu0 0.0
      %5668 = vmatpush2.msra.mxu0 0.0
      %5669 = vmatprep.subr.mxu0 0.0
      %5670 = vmatpush2.msra.mxu0 0.0
      %5671 = vmatprep.subr.mxu0 0.0
      %5672 = vmatpush2.msra.mxu0 0.0
      %5673 = vmatprep.subr.mxu0 0.0
      %5674 = vmatpush2.msra.mxu0 0.0
      %5675 = vmatprep.subr.mxu0 0.0
      %5676 = vmatpush2.msra.mxu0 0.0
      %5677 = vmatprep.subr.mxu0 0.0
      %5678 = vmatpush2.msra.mxu0 0.0
      %5679 = vmatprep.mubr.f32.mxu0 0.0
      %5680 = vmatmul.mubr.f32.gmra.mxu0 %v5611
      %v5681 = vpop.f32.mrf.mxu0
      %v5682 = vadd.f32 0.0, %v5681
      %v5683 = vpop.f32.mrf.mxu0
      %5684 = vmatprep.mubr.f32.mxu0 0.0
      %5685 = vmatmul.mubr.f32.gmra.mxu0 %v5613
      %v5686 = vpop.f32.mrf.mxu0
      %v5687 = vadd.f32 0.0, %v5686
      %v5688 = vpop.f32.mrf.mxu0
      %5689 = vdwg.mxu0
      %v5690 = vadd.f32 %v5605, %v5682
      %v5691 = vadd.f32 %v5606, %v5687
      %v5692 = vld [vmem:[%s10] sm:$0x3]
      %v5693 = vld [vmem:[%s11] sm:$0xff]
      %v5694 = vld [vmem:[%s11 + $0x8] sm:$0x3f]
      %vm5695 = vcmask 113664
      %v5697 = vsel %vm5695, %v5692, 0
      %v5700 = vsel %vm5263, %v5691, 0
      %5702 = vmatprep.subr.mxu0 0.0
      %5703 = vmatpush1.msra.mxu0 0.0
      %5704 = vmatprep.subr.mxu0 0.0
      %5705 = vmatpush1.msra.mxu0 0.0
      %5706 = vmatprep.subr.mxu0 0.0
      %5707 = vmatpush1.msra.mxu0 0.0
      %5708 = vmatprep.subr.mxu0 0.0
      %5709 = vmatpush1.msra.mxu0 0.0
      %5710 = vmatprep.subr.mxu0 0.0
      %5711 = vmatpush1.msra.mxu0 0.0
      %5712 = vmatprep.subr.mxu0 0.0
      %5713 = vmatpush1.msra.mxu0 0.0
      %5714 = vmatprep.subr.mxu0 0.0
      %5715 = vmatpush1.msra.mxu0 0.0
      %5716 = vmatprep.subr.mxu0 0.0
      %5717 = vmatpush1.msra.mxu0 0.0
      %5718 = vmatprep.subr.mxu0 0.0
      %5719 = vmatpush1.msra.mxu0 0.0
      %5720 = vmatprep.subr.mxu0 0.0
      %5721 = vmatpush1.msra.mxu0 0.0
      %5722 = vmatprep.subr.mxu0 0.0
      %5723 = vmatpush1.msra.mxu0 0.0
      %5724 = vmatprep.subr.mxu0 0.0
      %5725 = vmatpush1.msra.mxu0 0.0
      %5726 = vmatprep.subr.mxu0 0.0
      %5727 = vmatpush1.msra.mxu0 0.0
      %5728 = vmatprep.subr.mxu0 0.0
      %5729 = vmatpush1.msra.mxu0 0.0
      %5730 = vmatprep.subr.mxu0 0.0
      %5731 = vmatpush1.msra.mxu0 %v5700
      %5732 = vmatprep.subr.mxu0 0.0
      %5733 = vmatpush1.msra.mxu0 %v5690
      %5734 = vmatprep.subr.mxu0 0.0
      %5735 = vmatpush2.msra.mxu0 0.0
      %5736 = vmatprep.subr.mxu0 0.0
      %5737 = vmatpush2.msra.mxu0 0.0
      %5738 = vmatprep.subr.mxu0 0.0
      %5739 = vmatpush2.msra.mxu0 0.0
      %5740 = vmatprep.subr.mxu0 0.0
      %5741 = vmatpush2.msra.mxu0 0.0
      %5742 = vmatprep.subr.mxu0 0.0
      %5743 = vmatpush2.msra.mxu0 0.0
      %5744 = vmatprep.subr.mxu0 0.0
      %5745 = vmatpush2.msra.mxu0 0.0
      %5746 = vmatprep.subr.mxu0 0.0
      %5747 = vmatpush2.msra.mxu0 0.0
      %5748 = vmatprep.subr.mxu0 0.0
      %5749 = vmatpush2.msra.mxu0 0.0
      %5750 = vmatprep.subr.mxu0 0.0
      %5751 = vmatpush2.msra.mxu0 0.0
      %5752 = vmatprep.subr.mxu0 0.0
      %5753 = vmatpush2.msra.mxu0 0.0
      %5754 = vmatprep.subr.mxu0 0.0
      %5755 = vmatpush2.msra.mxu0 0.0
      %5756 = vmatprep.subr.mxu0 0.0
      %5757 = vmatpush2.msra.mxu0 0.0
      %5758 = vmatprep.subr.mxu0 0.0
      %5759 = vmatpush2.msra.mxu0 0.0
      %5760 = vmatprep.subr.mxu0 0.0
      %5761 = vmatpush2.msra.mxu0 0.0
      %5762 = vmatprep.subr.mxu0 0.0
      %5763 = vmatpush2.msra.mxu0 0.0
      %5764 = vmatprep.subr.mxu0 0.0
      %5765 = vmatpush2.msra.mxu0 0.0
      %5766 = vmatprep.mubr.f32.mxu0 0.0
      %5767 = vmatmul.mubr.f32.gmra.mxu0 %v5697
      %v5768 = vpop.f32.mrf.mxu0
      %v5769 = vadd.f32 0.0, %v5768
      %v5770 = vpop.f32.mrf.mxu0
      %5771 = vdwg.mxu0
      %v5772 = vmul.f32 %v5690, %v5690
      %v5773 = vmul.f32 %v5691, %v5691
      %v5775 = vsel %vm5263, %v5773, 0
      %5777 = vmatprep.subr.mxu0 0.0
      %5778 = vmatpush1.msra.mxu0 0.0
      %5779 = vmatprep.subr.mxu0 0.0
      %5780 = vmatpush1.msra.mxu0 0.0
      %5781 = vmatprep.subr.mxu0 0.0
      %5782 = vmatpush1.msra.mxu0 0.0
      %5783 = vmatprep.subr.mxu0 0.0
      %5784 = vmatpush1.msra.mxu0 0.0
      %5785 = vmatprep.subr.mxu0 0.0
      %5786 = vmatpush1.msra.mxu0 0.0
      %5787 = vmatprep.subr.mxu0 0.0
      %5788 = vmatpush1.msra.mxu0 0.0
      %5789 = vmatprep.subr.mxu0 0.0
      %5790 = vmatpush1.msra.mxu0 0.0
      %5791 = vmatprep.subr.mxu0 0.0
      %5792 = vmatpush1.msra.mxu0 0.0
      %5793 = vmatprep.subr.mxu0 0.0
      %5794 = vmatpush1.msra.mxu0 0.0
      %5795 = vmatprep.subr.mxu0 0.0
      %5796 = vmatpush1.msra.mxu0 0.0
      %5797 = vmatprep.subr.mxu0 0.0
      %5798 = vmatpush1.msra.mxu0 0.0
      %5799 = vmatprep.subr.mxu0 0.0
      %5800 = vmatpush1.msra.mxu0 0.0
      %5801 = vmatprep.subr.mxu0 0.0
      %5802 = vmatpush1.msra.mxu0 0.0
      %5803 = vmatprep.subr.mxu0 0.0
      %5804 = vmatpush1.msra.mxu0 0.0
      %5805 = vmatprep.subr.mxu0 0.0
      %5806 = vmatpush1.msra.mxu0 %v5775
      %5807 = vmatprep.subr.mxu0 0.0
      %5808 = vmatpush1.msra.mxu0 %v5772
      %5809 = vmatprep.subr.mxu0 0.0
      %5810 = vmatpush2.msra.mxu0 0.0
      %5811 = vmatprep.subr.mxu0 0.0
      %5812 = vmatpush2.msra.mxu0 0.0
      %5813 = vmatprep.subr.mxu0 0.0
      %5814 = vmatpush2.msra.mxu0 0.0
      %5815 = vmatprep.subr.mxu0 0.0
      %5816 = vmatpush2.msra.mxu0 0.0
      %5817 = vmatprep.subr.mxu0 0.0
      %5818 = vmatpush2.msra.mxu0 0.0
      %5819 = vmatprep.subr.mxu0 0.0
      %5820 = vmatpush2.msra.mxu0 0.0
      %5821 = vmatprep.subr.mxu0 0.0
      %5822 = vmatpush2.msra.mxu0 0.0
      %5823 = vmatprep.subr.mxu0 0.0
      %5824 = vmatpush2.msra.mxu0 0.0
      %5825 = vmatprep.subr.mxu0 0.0
      %5826 = vmatpush2.msra.mxu0 0.0
      %5827 = vmatprep.subr.mxu0 0.0
      %5828 = vmatpush2.msra.mxu0 0.0
      %5829 = vmatprep.subr.mxu0 0.0
      %5830 = vmatpush2.msra.mxu0 0.0
      %5831 = vmatprep.subr.mxu0 0.0
      %5832 = vmatpush2.msra.mxu0 0.0
      %5833 = vmatprep.subr.mxu0 0.0
      %5834 = vmatpush2.msra.mxu0 0.0
      %5835 = vmatprep.subr.mxu0 0.0
      %5836 = vmatpush2.msra.mxu0 0.0
      %5837 = vmatprep.subr.mxu0 0.0
      %5838 = vmatpush2.msra.mxu0 0.0
      %5839 = vmatprep.subr.mxu0 0.0
      %5840 = vmatpush2.msra.mxu0 0.0
      %5841 = vmatprep.mubr.f32.mxu0 0.0
      %5842 = vmatmul.mubr.f32.gmra.mxu0 %v5697
      %v5843 = vpop.f32.mrf.mxu0
      %v5844 = vadd.f32 0.0, %v5843
      %v5845 = vpop.f32.mrf.mxu0
      %5846 = vdwg.mxu0
      %v5847 = vmul.f32 %v5769, %v5769
      %v5848 = vsub.f32 %v5844, %v5847
      %v5849 = vadd.f32 %v5848, 1e-05
      %v5850 = vrsqrt.pop %v5849
      %v5852 = vsel %vm3300, %v5693, 0
      %v5855 = vsel %vm3300, %v5694, 0
      %v5858 = vsel %vm3385, %v5769, 0
      %5860 = vmatprep.subr.mxu0 0.0
      %5861 = vmatpush1.msra.mxu0 0.0
      %5862 = vmatprep.subr.mxu0 0.0
      %5863 = vmatpush1.msra.mxu0 0.0
      %5864 = vmatprep.subr.mxu0 0.0
      %5865 = vmatpush1.msra.mxu0 0.0
      %5866 = vmatprep.subr.mxu0 0.0
      %5867 = vmatpush1.msra.mxu0 0.0
      %5868 = vmatprep.subr.mxu0 0.0
      %5869 = vmatpush1.msra.mxu0 0.0
      %5870 = vmatprep.subr.mxu0 0.0
      %5871 = vmatpush1.msra.mxu0 0.0
      %5872 = vmatprep.subr.mxu0 0.0
      %5873 = vmatpush1.msra.mxu0 0.0
      %5874 = vmatprep.subr.mxu0 0.0
      %5875 = vmatpush1.msra.mxu0 0.0
      %5876 = vmatprep.subr.mxu0 0.0
      %5877 = vmatpush1.msra.mxu0 0.0
      %5878 = vmatprep.subr.mxu0 0.0
      %5879 = vmatpush1.msra.mxu0 0.0
      %5880 = vmatprep.subr.mxu0 0.0
      %5881 = vmatpush1.msra.mxu0 0.0
      %5882 = vmatprep.subr.mxu0 0.0
      %5883 = vmatpush1.msra.mxu0 0.0
      %5884 = vmatprep.subr.mxu0 0.0
      %5885 = vmatpush1.msra.mxu0 0.0
      %5886 = vmatprep.subr.mxu0 0.0
      %5887 = vmatpush1.msra.mxu0 0.0
      %5888 = vmatprep.subr.mxu0 0.0
      %5889 = vmatpush1.msra.mxu0 0.0
      %5890 = vmatprep.subr.mxu0 0.0
      %5891 = vmatpush1.msra.mxu0 %v5858
      %5892 = vmatprep.subr.mxu0 0.0
      %5893 = vmatpush2.msra.mxu0 0.0
      %5894 = vmatprep.subr.mxu0 0.0
      %5895 = vmatpush2.msra.mxu0 0.0
      %5896 = vmatprep.subr.mxu0 0.0
      %5897 = vmatpush2.msra.mxu0 0.0
      %5898 = vmatprep.subr.mxu0 0.0
      %5899 = vmatpush2.msra.mxu0 0.0
      %5900 = vmatprep.subr.mxu0 0.0
      %5901 = vmatpush2.msra.mxu0 0.0
      %5902 = vmatprep.subr.mxu0 0.0
      %5903 = vmatpush2.msra.mxu0 0.0
      %5904 = vmatprep.subr.mxu0 0.0
      %5905 = vmatpush2.msra.mxu0 0.0
      %5906 = vmatprep.subr.mxu0 0.0
      %5907 = vmatpush2.msra.mxu0 0.0
      %5908 = vmatprep.subr.mxu0 0.0
      %5909 = vmatpush2.msra.mxu0 0.0
      %5910 = vmatprep.subr.mxu0 0.0
      %5911 = vmatpush2.msra.mxu0 0.0
      %5912 = vmatprep.subr.mxu0 0.0
      %5913 = vmatpush2.msra.mxu0 0.0
      %5914 = vmatprep.subr.mxu0 0.0
      %5915 = vmatpush2.msra.mxu0 0.0
      %5916 = vmatprep.subr.mxu0 0.0
      %5917 = vmatpush2.msra.mxu0 0.0
      %5918 = vmatprep.subr.mxu0 0.0
      %5919 = vmatpush2.msra.mxu0 0.0
      %5920 = vmatprep.subr.mxu0 0.0
      %5921 = vmatpush2.msra.mxu0 0.0
      %5922 = vmatprep.subr.mxu0 0.0
      %5923 = vmatpush2.msra.mxu0 0.0
      %5924 = vmatprep.mubr.f32.mxu0 0.0
      %5925 = vmatmul.mubr.f32.gmra.mxu0 %v5852
      %v5926 = vpop.f32.mrf.mxu0
      %v5927 = vadd.f32 0.0, %v5926
      %v5928 = vpop.f32.mrf.mxu0
      %5929 = vmatprep.mubr.f32.mxu0 0.0
      %5930 = vmatmul.mubr.f32.gmra.mxu0 %v5855
      %v5931 = vpop.f32.mrf.mxu0
      %v5932 = vadd.f32 0.0, %v5931
      %v5933 = vpop.f32.mrf.mxu0
      %5934 = vdwg.mxu0
      %v5936 = vsel %vm3385, %v5850, 0
      %5938 = vmatprep.subr.mxu0 0.0
      %5939 = vmatpush1.msra.mxu0 0.0
      %5940 = vmatprep.subr.mxu0 0.0
      %5941 = vmatpush1.msra.mxu0 0.0
      %5942 = vmatprep.subr.mxu0 0.0
      %5943 = vmatpush1.msra.mxu0 0.0
      %5944 = vmatprep.subr.mxu0 0.0
      %5945 = vmatpush1.msra.mxu0 0.0
      %5946 = vmatprep.subr.mxu0 0.0
      %5947 = vmatpush1.msra.mxu0 0.0
      %5948 = vmatprep.subr.mxu0 0.0
      %5949 = vmatpush1.msra.mxu0 0.0
      %5950 = vmatprep.subr.mxu0 0.0
      %5951 = vmatpush1.msra.mxu0 0.0
      %5952 = vmatprep.subr.mxu0 0.0
      %5953 = vmatpush1.msra.mxu0 0.0
      %5954 = vmatprep.subr.mxu0 0.0
      %5955 = vmatpush1.msra.mxu0 0.0
      %5956 = vmatprep.subr.mxu0 0.0
      %5957 = vmatpush1.msra.mxu0 0.0
      %5958 = vmatprep.subr.mxu0 0.0
      %5959 = vmatpush1.msra.mxu0 0.0
      %5960 = vmatprep.subr.mxu0 0.0
      %5961 = vmatpush1.msra.mxu0 0.0
      %5962 = vmatprep.subr.mxu0 0.0
      %5963 = vmatpush1.msra.mxu0 0.0
      %5964 = vmatprep.subr.mxu0 0.0
      %5965 = vmatpush1.msra.mxu0 0.0
      %5966 = vmatprep.subr.mxu0 0.0
      %5967 = vmatpush1.msra.mxu0 0.0
      %5968 = vmatprep.subr.mxu0 0.0
      %5969 = vmatpush1.msra.mxu0 %v5936
      %5970 = vmatprep.subr.mxu0 0.0
      %5971 = vmatpush2.msra.mxu0 0.0
      %5972 = vmatprep.subr.mxu0 0.0
      %5973 = vmatpush2.msra.mxu0 0.0
      %5974 = vmatprep.subr.mxu0 0.0
      %5975 = vmatpush2.msra.mxu0 0.0
      %5976 = vmatprep.subr.mxu0 0.0
      %5977 = vmatpush2.msra.mxu0 0.0
      %5978 = vmatprep.subr.mxu0 0.0
      %5979 = vmatpush2.msra.mxu0 0.0
      %5980 = vmatprep.subr.mxu0 0.0
      %5981 = vmatpush2.msra.mxu0 0.0
      %5982 = vmatprep.subr.mxu0 0.0
      %5983 = vmatpush2.msra.mxu0 0.0
      %5984 = vmatprep.subr.mxu0 0.0
      %5985 = vmatpush2.msra.mxu0 0.0
      %5986 = vmatprep.subr.mxu0 0.0
      %5987 = vmatpush2.msra.mxu0 0.0
      %5988 = vmatprep.subr.mxu0 0.0
      %5989 = vmatpush2.msra.mxu0 0.0
      %5990 = vmatprep.subr.mxu0 0.0
      %5991 = vmatpush2.msra.mxu0 0.0
      %5992 = vmatprep.subr.mxu0 0.0
      %5993 = vmatpush2.msra.mxu0 0.0
      %5994 = vmatprep.subr.mxu0 0.0
      %5995 = vmatpush2.msra.mxu0 0.0
      %5996 = vmatprep.subr.mxu0 0.0
      %5997 = vmatpush2.msra.mxu0 0.0
      %5998 = vmatprep.subr.mxu0 0.0
      %5999 = vmatpush2.msra.mxu0 0.0
      %6000 = vmatprep.subr.mxu0 0.0
      %6001 = vmatpush2.msra.mxu0 0.0
      %6002 = vmatprep.mubr.f32.mxu0 0.0
      %6003 = vmatmul.mubr.f32.gmra.mxu0 %v5852
      %v6004 = vpop.f32.mrf.mxu0
      %v6005 = vadd.f32 0.0, %v6004
      %v6006 = vpop.f32.mrf.mxu0
      %6007 = vmatprep.mubr.f32.mxu0 0.0
      %6008 = vmatmul.mubr.f32.gmra.mxu0 %v5855
      %v6009 = vpop.f32.mrf.mxu0
      %v6010 = vadd.f32 0.0, %v6009
      %v6011 = vpop.f32.mrf.mxu0
      %6012 = vdwg.mxu0
      %v6013 = vsub.f32 %v5690, %v5927
      %v6014 = vsub.f32 %v5691, %v5932
      %v6015 = vmul.f32 %v6013, %v6005
      %v6016 = vmul.f32 %v6014, %v6010
      %vm6017 = vcmp.ge.f32.partialorder %v6015, 0.0
      %vm6018 = vcmp.ge.f32.partialorder %v6016, 0.0
      %v6019 = vmul.f32 %v6015, 0.2
      %v6020 = vmul.f32 %v6016, 0.2
      %v6021 = vsel %vm6017, %v6015, %v6019
      %v6022 = vsel %vm6018, %v6016, %v6020
      %v6023 = vld [vmem:[%s5] sm:$0xf]
      %v6024 = vld [vmem:[%s5 + $0x4] sm:$0x7]
      %v6025 = vld [vmem:[%s5 + $0x8] sm:$0xf]
      %v6026 = vld [vmem:[%s5 + $0xc] sm:$0x7]
      %v6027 = vunpack.c.l.bf16 %v6023
      %v6028 = vunpack.c.l.bf16 %v6024
      %v6029 = vunpack.c.l.bf16 %v6025
      %v6030 = vunpack.c.l.bf16 %v6026
      %v6031 = vld [vmem:[%s12] sm:$0x3]
      %v6032 = vmul.f32 %v6021, %v6027
      %v6033 = vmul.f32 %v6022, %v6028
      %v6035 = vsel %vm5695, %v6031, 0
      %v6038 = vsel %vm5263, %v6033, 0
      %6040 = vmatprep.subr.mxu0 0.0
      %6041 = vmatpush1.msra.mxu0 0.0
      %6042 = vmatprep.subr.mxu0 0.0
      %6043 = vmatpush1.msra.mxu0 0.0
      %6044 = vmatprep.subr.mxu0 0.0
      %6045 = vmatpush1.msra.mxu0 0.0
      %6046 = vmatprep.subr.mxu0 0.0
      %6047 = vmatpush1.msra.mxu0 0.0
      %6048 = vmatprep.subr.mxu0 0.0
      %6049 = vmatpush1.msra.mxu0 0.0
      %6050 = vmatprep.subr.mxu0 0.0
      %6051 = vmatpush1.msra.mxu0 0.0
      %6052 = vmatprep.subr.mxu0 0.0
      %6053 = vmatpush1.msra.mxu0 0.0
      %6054 = vmatprep.subr.mxu0 0.0
      %6055 = vmatpush1.msra.mxu0 0.0
      %6056 = vmatprep.subr.mxu0 0.0
      %6057 = vmatpush1.msra.mxu0 0.0
      %6058 = vmatprep.subr.mxu0 0.0
      %6059 = vmatpush1.msra.mxu0 0.0
      %6060 = vmatprep.subr.mxu0 0.0
      %6061 = vmatpush1.msra.mxu0 0.0
      %6062 = vmatprep.subr.mxu0 0.0
      %6063 = vmatpush1.msra.mxu0 0.0
      %6064 = vmatprep.subr.mxu0 0.0
      %6065 = vmatpush1.msra.mxu0 0.0
      %6066 = vmatprep.subr.mxu0 0.0
      %6067 = vmatpush1.msra.mxu0 0.0
      %6068 = vmatprep.subr.mxu0 0.0
      %6069 = vmatpush1.msra.mxu0 %v6038
      %6070 = vmatprep.subr.mxu0 0.0
      %6071 = vmatpush1.msra.mxu0 %v6032
      %6072 = vmatprep.subr.mxu0 0.0
      %6073 = vmatpush2.msra.mxu0 0.0
      %6074 = vmatprep.subr.mxu0 0.0
      %6075 = vmatpush2.msra.mxu0 0.0
      %6076 = vmatprep.subr.mxu0 0.0
      %6077 = vmatpush2.msra.mxu0 0.0
      %6078 = vmatprep.subr.mxu0 0.0
      %6079 = vmatpush2.msra.mxu0 0.0
      %6080 = vmatprep.subr.mxu0 0.0
      %6081 = vmatpush2.msra.mxu0 0.0
      %6082 = vmatprep.subr.mxu0 0.0
      %6083 = vmatpush2.msra.mxu0 0.0
      %6084 = vmatprep.subr.mxu0 0.0
      %6085 = vmatpush2.msra.mxu0 0.0
      %6086 = vmatprep.subr.mxu0 0.0
      %6087 = vmatpush2.msra.mxu0 0.0
      %6088 = vmatprep.subr.mxu0 0.0
      %6089 = vmatpush2.msra.mxu0 0.0
      %6090 = vmatprep.subr.mxu0 0.0
      %6091 = vmatpush2.msra.mxu0 0.0
      %6092 = vmatprep.subr.mxu0 0.0
      %6093 = vmatpush2.msra.mxu0 0.0
      %6094 = vmatprep.subr.mxu0 0.0
      %6095 = vmatpush2.msra.mxu0 0.0
      %6096 = vmatprep.subr.mxu0 0.0
      %6097 = vmatpush2.msra.mxu0 0.0
      %6098 = vmatprep.subr.mxu0 0.0
      %6099 = vmatpush2.msra.mxu0 0.0
      %6100 = vmatprep.subr.mxu0 0.0
      %6101 = vmatpush2.msra.mxu0 0.0
      %6102 = vmatprep.subr.mxu0 0.0
      %6103 = vmatpush2.msra.mxu0 0.0
      %6104 = vmatprep.mubr.f32.mxu0 0.0
      %6105 = vmatmul.mubr.f32.gmra.mxu0 %v6035
      %v6106 = vpop.f32.mrf.mxu0
      %v6107 = vadd.f32 0.0, %v6106
      %v6108 = vpop.f32.mrf.mxu0
      %6109 = vdwg.mxu0
      %v6110 = vsel %vm3385, %v6107, 0.0
      %6111 = vadd.xlane.f32.xlu0 %v6110
      %v6112 = vpop.xlane.xlu0 %6111
      %v6113 = vmul.f32 %v6021, %v6029
      %v6114 = vmul.f32 %v6022, %v6030
      %v6116 = vsel %vm5263, %v6114, 0
      %6118 = vmatprep.subr.mxu0 0.0
      %6119 = vmatpush1.msra.mxu0 0.0
      %6120 = vmatprep.subr.mxu0 0.0
      %6121 = vmatpush1.msra.mxu0 0.0
      %6122 = vmatprep.subr.mxu0 0.0
      %6123 = vmatpush1.msra.mxu0 0.0
      %6124 = vmatprep.subr.mxu0 0.0
      %6125 = vmatpush1.msra.mxu0 0.0
      %6126 = vmatprep.subr.mxu0 0.0
      %6127 = vmatpush1.msra.mxu0 0.0
      %6128 = vmatprep.subr.mxu0 0.0
      %6129 = vmatpush1.msra.mxu0 0.0
      %6130 = vmatprep.subr.mxu0 0.0
      %6131 = vmatpush1.msra.mxu0 0.0
      %6132 = vmatprep.subr.mxu0 0.0
      %6133 = vmatpush1.msra.mxu0 0.0
      %6134 = vmatprep.subr.mxu0 0.0
      %6135 = vmatpush1.msra.mxu0 0.0
      %6136 = vmatprep.subr.mxu0 0.0
      %6137 = vmatpush1.msra.mxu0 0.0
      %6138 = vmatprep.subr.mxu0 0.0
      %6139 = vmatpush1.msra.mxu0 0.0
      %6140 = vmatprep.subr.mxu0 0.0
      %6141 = vmatpush1.msra.mxu0 0.0
      %6142 = vmatprep.subr.mxu0 0.0
      %6143 = vmatpush1.msra.mxu0 0.0
      %6144 = vmatprep.subr.mxu0 0.0
      %6145 = vmatpush1.msra.mxu0 0.0
      %6146 = vmatprep.subr.mxu0 0.0
      %6147 = vmatpush1.msra.mxu0 %v6116
      %6148 = vmatprep.subr.mxu0 0.0
      %6149 = vmatpush1.msra.mxu0 %v6113
      %6150 = vmatprep.subr.mxu0 0.0
      %6151 = vmatpush2.msra.mxu0 0.0
      %6152 = vmatprep.subr.mxu0 0.0
      %6153 = vmatpush2.msra.mxu0 0.0
      %6154 = vmatprep.subr.mxu0 0.0
      %6155 = vmatpush2.msra.mxu0 0.0
      %6156 = vmatprep.subr.mxu0 0.0
      %6157 = vmatpush2.msra.mxu0 0.0
      %6158 = vmatprep.subr.mxu0 0.0
      %6159 = vmatpush2.msra.mxu0 0.0
      %6160 = vmatprep.subr.mxu0 0.0
      %6161 = vmatpush2.msra.mxu0 0.0
      %6162 = vmatprep.subr.mxu0 0.0
      %6163 = vmatpush2.msra.mxu0 0.0
      %6164 = vmatprep.subr.mxu0 0.0
      %6165 = vmatpush2.msra.mxu0 0.0
      %6166 = vmatprep.subr.mxu0 0.0
      %6167 = vmatpush2.msra.mxu0 0.0
      %6168 = vmatprep.subr.mxu0 0.0
      %6169 = vmatpush2.msra.mxu0 0.0
      %6170 = vmatprep.subr.mxu0 0.0
      %6171 = vmatpush2.msra.mxu0 0.0
      %6172 = vmatprep.subr.mxu0 0.0
      %6173 = vmatpush2.msra.mxu0 0.0
      %6174 = vmatprep.subr.mxu0 0.0
      %6175 = vmatpush2.msra.mxu0 0.0
      %6176 = vmatprep.subr.mxu0 0.0
      %6177 = vmatpush2.msra.mxu0 0.0
      %6178 = vmatprep.subr.mxu0 0.0
      %6179 = vmatpush2.msra.mxu0 0.0
      %6180 = vmatprep.subr.mxu0 0.0
      %6181 = vmatpush2.msra.mxu0 0.0
      %6182 = vmatprep.mubr.f32.mxu0 0.0
      %6183 = vmatmul.mubr.f32.gmra.mxu0 %v6035
      %v6184 = vpop.f32.mrf.mxu0
      %v6185 = vadd.f32 0.0, %v6184
      %v6186 = vpop.f32.mrf.mxu0
      %6187 = vdwg.mxu0
      %v6188 = vsel %vm3385, %v6185, 0.0
      %6189 = vadd.xlane.f32.xlu0 %v6188
      %v6190 = vpop.xlane.xlu0 %6189
      %v6191 = vlaneseq
      %v6192 = vand.u32 %v6191, 127
      %vm6193 = vcmp.eq.s32.totalorder %v6192, 0
      %vm6194 = vcmp.eq.s32.totalorder %v6192, 1
      %v6195 = vsel %vm6194, %v6190, -1e+30
      %v6196 = vsel %vm6193, %v6112, %v6195
      %v6197 = vsel %vm3385, %v6196, -inf
      %6198 = vmax.xlane.f32.xlu0 %v6197
      %v6199 = vpop.xlane.xlu0 %6198
      %v6200 = vsub.f32 %v6196, %v6199
      %v6201 = vmul.f32 %v6200, 1.442695
      %v6202 = vpow.pop %v6201
      %v6203 = vsel %vm3385, %v6202, 0.0
      %6204 = vadd.xlane.f32.xlu0 %v6203
      %v6205 = vpop.xlane.xlu0 %6204
      %v6206 = vrcp.pop %v6205
      %v6207 = vmul.f32 %v6202, %v6206
      %6208 = vst [vmem:[%s438] sm:$0x3] %v6207
      %p6209 = scmp.lt.s32.totalorder %s24, 1
      %s6210 = scalar_select %p6209, %s24, 1
      %s6211 = smul.addr %s6210, 2
      %s6212 = scalar_lea.vmem %s13, %s6211
      // Predicated region
      $region73: #{classifier_forward.1} parent=71 // pred_check
        %p6213 = pneg %p320
      $region74: #{classifier_forward.1} parent=71 // pred_check_branch
        %6215 = sbr.rel (%p6213) target = $region76
      $region75: #{classifier_forward.1} parent=71 // pred_region
        _
      $region76: #{classifier_forward.1} parent=71 // pred_fallthru
        _
    $region72: #{classifier_forward.1} parent=5 // pred_fallthru
      _
    %p6216 = scmp.le.s32.totalorder 2, %s19
    // Predicated region
    $region77: #{classifier_forward.1} parent=5 // pred_check
      %p6217 = pneg %p6216
    $region78: #{classifier_forward.1} parent=5 // pred_check_branch
      %6219 = sbr.rel (%p6217) target = $region80
    $region79: #{classifier_forward.1} parent=5 // pred_region
      %s6220 = ssub.s32 %s19, 2
      // Predicated region
      $region81: #{classifier_forward.1} parent=79 // pred_check
        %p6221 = pneg %p326
      $region82: #{classifier_forward.1} parent=79 // pred_check_branch
        %6223 = sbr.rel (%p6221) target = $region84
      $region83: #{classifier_forward.1} parent=79 // pred_region
        %p6224 = scmp.lt.s32.totalorder %s25, 1
        %s6225 = scalar_select %p6224, %s25, 1
        %s6226 = smul.addr %s6225, 2
        %s6227 = scalar_lea.vmem %s13, %s6226
      $region84: #{classifier_forward.1} parent=79 // pred_fallthru
        _
    $region80: #{classifier_forward.1} parent=5 // pred_fallthru
      _
  $region6: #{classifier_forward.1} parent=0 // loop_footer
    %s23 = sadd.s32 1, %s19
  $region7: #{classifier_forward.1} parent=0 // loop_footer_branch
    %18 = sbr.rel target = $region3
  $region8: #{classifier_forward.1} parent=0 // loop_exit
    _

</llo_original>
